<compile_context>
chip_gen: v6e
topology: v6e:2x2x1
jax: 0.10.0
libtpu: 0.0.40
codegen_flags: <defaults>
</compile_context>

<pallas_src>
import functools
import itertools
import math

import jax
import jax.numpy as jnp
from jax.experimental import pallas as pl
from jax.experimental.pallas import tpu as pltpu

# ----------------- UNet2DModel config (mirrors ClassConditionedUnet) -----------------
BLOCK_OUT = (128, 128, 256, 256, 512, 512)
DOWN_TYPES = ("Down", "Down", "Down", "Down", "AttnDown", "Down")
UP_TYPES = ("Up", "AttnUp", "Up", "Up", "Up", "Up")
LAYERS_PER_BLOCK = 2
TIME_EMBED_DIM = BLOCK_OUT[0] * 4          # 512
ATTN_HEAD_DIM = 8
NORM_GROUPS = 32
NORM_EPS = 1e-5
NUM_CLASSES = 24
CLASS_EMB_SIZE = 512
IN_CHANNELS = 3
OUT_CHANNELS = 3

COMPUTE_DTYPE = jnp.bfloat16


def _detect_vmem_limit():
    """Generation-aware scoped-VMEM cap: ~96 MiB on v5e/v6e (128 MiB physical VMEM),
    48 MiB on v7x (64 MiB physical)."""
    cap = 64 * 1024 * 1024
    try:
        info = pltpu.get_tpu_info()
        cap = int(getattr(info, "vmem_capacity_bytes", cap))
    except Exception:
        pass
    return 96 * 1024 * 1024 if cap >= 128 * 1024 * 1024 else 48 * 1024 * 1024


VMEM_LIMIT = _detect_vmem_limit()


def _round_up(x, m):
    return -(-x // m) * m


def _pick_tile(dim, candidates):
    """Largest tile that divides round_up(dim, 128) -> minimal padding."""
    dp = _round_up(dim, 128)
    for c in candidates:
        if dp % c == 0:
            return c
    return 128


# ============================ Pallas matmul (+bias) kernel ============================
def _mm_kernel(a_ref, b_ref, bias_ref, o_ref, acc_ref):
    @pl.when(pl.program_id(2) == 0)
    def _init():
        # accumulator starts at the broadcast bias: no epilogue add, no extra stream.
        acc_ref[...] = jnp.broadcast_to(bias_ref[...], acc_ref.shape)

    acc_ref[...] += jnp.dot(a_ref[...], b_ref[...], preferred_element_type=jnp.float32)

    @pl.when(pl.program_id(2) == pl.num_programs(2) - 1)
    def _fin():
        o_ref[...] = acc_ref[...].astype(o_ref.dtype)


def _mm_tiles(M, N, K):
    """Tile selection: collapse K to one grid step when the VMEM budget allows
    (these matmuls are grid-step-overhead bound, not MXU bound), prefer multiples
    of 256 for the MXU pass depth, and keep >=2 blocks on a parallel axis (v7x)."""
    TN = 128
    Np = _round_up(N, TN)
    TM = _pick_tile(M, (1024, 512, 256, 128))
    Mp = _round_up(M, TM)
    Kp = _round_up(K, 128)
    budget = int(VMEM_LIMIT * 0.6)

    def fits(tk):
        # double-buffered bf16 a/b blocks + f32 acc + double-buffered bf16 out block
        return ((TM * tk + tk * TN) * 2 * 2 + TM * TN * 4 + TM * TN * 2 * 2) <= budget

    TK = 128
    for cand in (Kp, 2048, 1024, 512, 256, 128):
        if cand <= Kp and Kp % cand == 0 and fits(cand):
            TK = cand
            break
    # v7x has 2 TensorCores: make sure some parallel grid axis has extent >= 2.
    if Mp // TM == 1 and Np // TN == 1 and Mp >= 256:
        TM = Mp // 2
    return TM, TN, TK, Mp, Np, Kp


@functools.partial(jax.jit, static_argnames=("out_dtype",))
def _matmul_bias_pallas(a, b, bias, out_dtype):
    """a: (M, K) bf16, b: (K, N) bf16, bias: (N,) f32 -> (M, N) = a @ b + bias."""
    M, K = a.shape
    _, N = b.shape
    TM, TN, TK, Mp, Np, Kp = _mm_tiles(M, N, K)
    a_p = a if (Mp == M and Kp == K) else jnp.pad(a, ((0, Mp - M), (0, Kp - K)))
    b_p = b if (Kp == K and Np == N) else jnp.pad(b, ((0, Kp - K), (0, Np - N)))
    bias2 = bias.reshape(1, N)
    bias_p = bias2 if Np == N else jnp.pad(bias2, ((0, 0), (0, Np - N)))
    out = pl.pallas_call(
        _mm_kernel,
        out_shape=jax.ShapeDtypeStruct((Mp, Np), out_dtype),
        grid=(Mp // TM, Np // TN, Kp // TK),
        in_specs=[
            pl.BlockSpec((TM, TK), lambda i, j, k: (i, k)),
            pl.BlockSpec((TK, TN), lambda i, j, k: (k, j)),
            pl.BlockSpec((1, TN), lambda i, j, k: (0, j)),
        ],
        out_specs=pl.BlockSpec((TM, TN), lambda i, j, k: (i, j)),
        scratch_shapes=[pltpu.VMEM((TM, TN), jnp.float32)],
        compiler_params=pltpu.CompilerParams(
            dimension_semantics=("parallel", "parallel", "arbitrary"),
            vmem_limit_bytes=VMEM_LIMIT,
        ),
    )(a_p, b_p, bias_p)
    if Mp != M or Np != N:
        out = out[:M, :N]
    return out


def matmul_bias(a, b, bias, out_dtype=COMPUTE_DTYPE):
    """Dispatch: big, MXU-friendly shapes -> Pallas; tiny M/K/N -> XLA dot."""
    M, K = a.shape
    N = b.shape[1]
    if M < 128 or K < 128 or N < 128:
        # Tiny-M (batch-sized linears / low-res convs), tiny-K (conv_in, K=27) and
        # tiny-N (conv_out, N=3): a 128-wide MXU tile would be mostly padding and
        # costs an extra HBM copy of the operand; XLA wins.
        out = jnp.dot(a.astype(COMPUTE_DTYPE), b.astype(COMPUTE_DTYPE),
                      preferred_element_type=jnp.float32) + bias.astype(jnp.float32)
        return out.astype(out_dtype)
    return _matmul_bias_pallas(a.astype(COMPUTE_DTYPE), b.astype(COMPUTE_DTYPE),
                               bias.astype(jnp.float32), out_dtype=out_dtype)


# ======================= Fused 3x3 conv kernel (no HBM im2col) ========================
def _conv3x3_kernel(x_ref, w_ref, bias_ref, *rest, Ho, Wo, has_res):
    if has_res:
        res_ref, o_ref = rest
    else:
        (o_ref,) = rest
    tc = o_ref.shape[-1]
    # accumulator initialized with the broadcast bias (f32)
    acc = jnp.broadcast_to(bias_ref[...], (Ho * Wo, tc))
    # 9 shifted-slice matmuls over the VMEM-resident padded activation: the im2col
    # patch matrix never touches HBM.
    for kh in range(3):
        for kw in range(3):
            patch = x_ref[0, kh:kh + Ho, kw:kw + Wo, :].reshape(Ho * Wo, -1)
            acc = acc + jnp.dot(patch, w_ref[kh * 3 + kw],
                                preferred_element_type=jnp.float32)
    if has_res:
        # fused resnet skip / shortcut add: saves a full M*N HBM read+write.
        acc = acc + res_ref[0].reshape(Ho * Wo, tc).astype(jnp.float32)
    o_ref[0] = acc.reshape(Ho, Wo, tc).astype(o_ref.dtype)


@functools.partial(jax.jit, static_argnames=("has_res",))
def _conv3x3_fused(xp, w9, bias, res, has_res):
    """xp: (N, H+2, W+2, Cin) bf16 (already padded); w9: (9, Cin, Cout) bf16;
    bias: (Cout,) f32; res: optional (N, H, W, Cout)."""
    Nb, Hp, Wp, Cin = xp.shape
    Ho, Wo = Hp - 2, Wp - 2
    Cout = w9.shape[-1]
    TC = 128
    kernel = functools.partial(_conv3x3_kernel, Ho=Ho, Wo=Wo, has_res=has_res)
    inputs = [xp, w9, bias.reshape(1, Cout).astype(jnp.float32)]
    in_specs = [
        pl.BlockSpec((1, Hp, Wp, Cin), lambda n, j: (n, 0, 0, 0)),
        pl.BlockSpec((9, Cin, TC), lambda n, j: (0, 0, j)),
        pl.BlockSpec((1, TC), lambda n, j: (0, j)),
    ]
    if has_res:
        inputs.append(res)
        in_specs.append(pl.BlockSpec((1, Ho, Wo, TC), lambda n, j: (n, 0, 0, j)))
    return pl.pallas_call(
        kernel,
        out_shape=jax.ShapeDtypeStruct((Nb, Ho, Wo, Cout), COMPUTE_DTYPE),
        grid=(Nb, Cout // TC),
        in_specs=in_specs,
        out_specs=pl.BlockSpec((1, Ho, Wo, TC), lambda n, j: (n, 0, 0, j)),
        compiler_params=pltpu.CompilerParams(
            dimension_semantics=("parallel", "parallel"),   # both axes split across TCs (v7x)
            vmem_limit_bytes=VMEM_LIMIT,
        ),
    )(*inputs)


# ==================== Pallas GroupNorm(+SiLU, + fused bias add) kernel ================
def _gn_kernel(x_ref, smat_ref, bmat_ref, gamma_ref, beta_ref, *rest,
               eps, inv_n, act, has_add):
    if has_add:
        add_ref, o_ref = rest
    else:
        (o_ref,) = rest
    # TODO(synk): on v6e/v7x the elementwise path could run in bf16 (keep stats f32);
    # kept in f32 here so the same kernel is exact/safe on v5e (no bf16 VALU/EUP).
    x = x_ref[0].astype(jnp.float32)                      # (HW, C)
    if has_add:
        x = x + add_ref[0].astype(jnp.float32)            # fused per-batch (1, C) add
    s = jnp.sum(x, axis=0, keepdims=True)                 # (1, C)
    sq = jnp.sum(x * x, axis=0, keepdims=True)            # (1, C)
    smat = smat_ref[...]                                   # (C, G) channel -> group sum
    sum_g = jnp.dot(s, smat, preferred_element_type=jnp.float32)     # (1, G)
    sq_g = jnp.dot(sq, smat, preferred_element_type=jnp.float32)     # (1, G)
    mean_g = sum_g * inv_n
    var_g = jnp.maximum(sq_g * inv_n - mean_g * mean_g, 0.0)          # clamp: no NaN rsqrt
    istd_g = jax.lax.rsqrt(var_g + eps)
    bmat = bmat_ref[...]                                   # (G, C) group -> channel bcast
    mean_c = jnp.dot(mean_g, bmat, preferred_element_type=jnp.float32)
    istd_c = jnp.dot(istd_g, bmat, preferred_element_type=jnp.float32)
    y = (x - mean_c) * istd_c
    y = y * gamma_ref[...] + beta_ref[...]
    if act:  # fused SiLU: exp on EUP + approx reciprocal (off the VALU slot)
        y = y * pl.reciprocal(1.0 + jnp.exp(-y), approx=True)
    o_ref[0] = y.astype(o_ref.dtype)


@functools.lru_cache(maxsize=None)
def _group_mats(C, groups):
    """Factored group matrices: (C, G) sum + (G, C) broadcast (32x smaller than (C, C))."""
    cg = C // groups
    eye = jnp.eye(groups, dtype=jnp.float32)
    smat = jnp.repeat(eye, cg, axis=0)                    # (C, G)
    bmat = jnp.repeat(eye, cg, axis=1)                    # (G, C)
    return smat, bmat


@functools.partial(jax.jit, static_argnames=("act",))
def _group_norm_flat(x, smat, bmat, gamma, beta, add, act):
    """x: (N, HW, C) bf16; gamma/beta: (1, C) f32; add: optional (N, C) f32."""
    Nb, HW, C = x.shape
    G = smat.shape[1]
    inv_n = 1.0 / float(HW * (C // G))
    has_add = add is not None
    kernel = functools.partial(_gn_kernel, eps=NORM_EPS, inv_n=inv_n,
                               act=act, has_add=has_add)
    inputs = [x, smat, bmat, gamma, beta]
    in_specs = [
        pl.BlockSpec((1, HW, C), lambda n: (n, 0, 0)),
        pl.BlockSpec((C, G), lambda n: (0, 0)),
        pl.BlockSpec((G, C), lambda n: (0, 0)),
        pl.BlockSpec((1, C), lambda n: (0, 0)),
        pl.BlockSpec((1, C), lambda n: (0, 0)),
    ]
    if has_add:
        inputs.append(add.reshape(Nb, 1, C))
        in_specs.append(pl.BlockSpec((1, 1, C), lambda n: (n, 0, 0)))
    return pl.pallas_call(
        kernel,
        out_shape=jax.ShapeDtypeStruct((Nb, HW, C), x.dtype),
        grid=(Nb,),
        in_specs=in_specs,
        out_specs=pl.BlockSpec((1, HW, C), lambda n: (n, 0, 0)),
        compiler_params=pltpu.CompilerParams(
            dimension_semantics=("parallel",),
            vmem_limit_bytes=VMEM_LIMIT,
        ),
    )(*inputs)


def group_norm(x_nhwc, p, act=False, add=None):
    N, H, W, C = x_nhwc.shape
    smat, bmat = _group_mats(C, NORM_GROUPS)
    y = _group_norm_flat(x_nhwc.reshape(N, H * W, C), smat, bmat,
                         p["g"], p["b"], add, act=act)
    return y.reshape(N, H, W, C)


# =============================== conv / linear helpers ================================
def linear(x, p):
    """Tiny (M = batch) linears: plain XLA dot in f32 (time/class/temb embeddings)."""
    return jnp.dot(x, p["w"], preferred_element_type=jnp.float32) + p["b"]


def conv3x3(x, w, b, stride=1, residual=None):
    """x: (N,H,W,C) bf16 ; w: (3,3,Cin,Cout) bf16 ; b: (Cout,) f32. padding=1.
    `residual` (optional, (N,Ho,Wo,Cout)) is added inside the conv kernel epilogue."""
    N, H, W, C = x.shape
    Cout = w.shape[-1]
    if stride == 1 and C % 128 == 0 and Cout % 128 == 0 and H * W >= 64:
        # Fused path: one pad (+13% at 32x32), then all 9 taps reduced in VMEM.
        xp = jnp.pad(x, ((0, 0), (1, 1), (1, 1), (0, 0)))
        w9 = w.reshape(9, C, Cout)
        return _conv3x3_fused(xp, w9, b, residual, has_res=residual is not None)
    # Fallback (stride-2 downsamples, <=4x4 resolutions, conv_in/conv_out): im2col +
    # matmul dispatch; these shapes are tiny so the patch materialization is negligible.
    xp = jnp.pad(x, ((0, 0), (1, 1), (1, 1), (0, 0)))
    Ho = (H + 2 - 3) // stride + 1
    Wo = (W + 2 - 3) // stride + 1
    cols = []
    for kh in range(3):
        for kw in range(3):
            cols.append(xp[:, kh:kh + (Ho - 1) * stride + 1:stride,
                           kw:kw + (Wo - 1) * stride + 1:stride, :])
    patches = jnp.concatenate(cols, axis=-1).reshape(N * Ho * Wo, 9 * C)
    out = matmul_bias(patches, w.reshape(9 * C, Cout), b).reshape(N, Ho, Wo, Cout)
    if residual is not None:
        out = out + residual
    return out


def conv1x1(x, p):
    N, H, W, C = x.shape
    out = matmul_bias(x.reshape(N * H * W, C), p["w"], p["b"])
    return out.reshape(N, H, W, -1)


def silu(x):
    return x * jax.nn.sigmoid(x)


# ================================== UNet building blocks ==============================
def resnet_block(x, emb, p):
    h = group_norm(x, p["norm1"], act=True)
    h = conv3x3(h, p["conv1"]["w"], p["conv1"]["b"])
    temb = linear(silu(emb), p["temb"])                 # (N, Cout) f32
    # (h + temb) is fused into the norm2 GroupNorm kernel: saves one HBM round trip.
    h = group_norm(h, p["norm2"], act=True, add=temb)
    # dropout p=0.0 -> identity
    res = conv1x1(x, p["shortcut"]) if "shortcut" in p else x
    # residual add fused into conv2's Pallas epilogue (saves another HBM round trip).
    return conv3x3(h, p["conv2"]["w"], p["conv2"]["b"], residual=res)


def attention_block(x, p):
    """Deprecated-style AttentionBlock: GN -> fused qkv -> softmax(qk^T/sqrt(d)) v -> proj + res."""
    N, H, W, C = x.shape
    residual = x
    h = group_norm(x, p["gn"], act=False)
    hflat = h.reshape(N * H * W, C).astype(jnp.float32)
    # M = N*H*W is tiny at every attention resolution here: a single fused qkv XLA dot
    # (one read of the normalized activation instead of three) beats 3 Pallas launches.
    qkv = jnp.dot(hflat, p["qkv"]["w"], preferred_element_type=jnp.float32) + p["qkv"]["b"]
    q, k, v = jnp.split(qkv, 3, axis=-1)
    heads = C // ATTN_HEAD_DIM
    dh = ATTN_HEAD_DIM

    def split_heads(t):
        return t.reshape(N, H * W, heads, dh).transpose(0, 2, 1, 3)

    q, k, v = split_heads(q), split_heads(k), split_heads(v)
    scale = 1.0 / math.sqrt(dh)
    # TODO(synk): attention softmax core (seq <= 16, head_dim=8) kept in JAX glue —
    # dims are far below TPU (8,128) tiling; all heavy matmuls elsewhere are Pallas.
    scores = jnp.einsum("nhqd,nhkd->nhqk", q, k) * scale
    attn = jax.nn.softmax(scores, axis=-1)
    out = jnp.einsum("nhqk,nhkd->nhqd", attn, v)
    out = out.transpose(0, 2, 1, 3).reshape(N * H * W, C)
    out = jnp.dot(out, p["proj"]["w"], preferred_element_type=jnp.float32) + p["proj"]["b"]
    out = out.reshape(N, H, W, C)
    return (out + residual.astype(jnp.float32)).astype(x.dtype)


def down_block(x, emb, bp):
    skips = []
    for i, rp in enumerate(bp["resnets"]):
        x = resnet_block(x, emb, rp)
        if bp["attentions"] is not None:
            x = attention_block(x, bp["attentions"][i])
        skips.append(x)
    if bp["downsample"] is not None:
        x = conv3x3(x, bp["downsample"]["w"], bp["downsample"]["b"], stride=2)
        skips.append(x)
    return x, skips


def upsample_nearest2x(x):
    """Nearest 2x via a single broadcast+reshape (one materialization, not two repeats)."""
    N, H, W, C = x.shape
    x = jnp.broadcast_to(x[:, :, None, :, None, :], (N, H, 2, W, 2, C))
    return x.reshape(N, 2 * H, 2 * W, C)


def up_block(x, emb, skip_stack, bp):
    for i, rp in enumerate(bp["resnets"]):
        skip = skip_stack.pop()
        x = jnp.concatenate([x, skip], axis=-1)
        x = resnet_block(x, emb, rp)
        if bp["attentions"] is not None:
            x = attention_block(x, bp["attentions"][i])
    if bp["upsample"] is not None:
        x = upsample_nearest2x(x)
        x = conv3x3(x, bp["upsample"]["w"], bp["upsample"]["b"])
    return x


def timestep_embedding(timesteps, dim):
    half = dim // 2
    exponent = -math.log(10000.0) * jnp.arange(half, dtype=jnp.float32) / half  # freq_shift=0
    freqs = jnp.exp(exponent)
    args = timesteps.astype(jnp.float32)[:, None] * freqs[None, :]
    emb = jnp.concatenate([jnp.sin(args), jnp.cos(args)], axis=-1)
    # flip_sin_to_cos=True -> [cos, sin]
    emb = jnp.concatenate([emb[:, half:], emb[:, :half]], axis=-1)
    return emb


# ================================= parameter construction =============================
_PKEY = jax.random.PRNGKey(1234)
_PCOUNT = itertools.count()


def _init(shape, fan_in, dtype=jnp.float32):
    k = jax.random.fold_in(_PKEY, next(_PCOUNT))
    w = jax.random.normal(k, shape, jnp.float32) * (1.0 / math.sqrt(max(fan_in, 1)))
    return w.astype(dtype)


def linear_p(cin, cout):
    return {"w": _init((cin, cout), cin), "b": jnp.zeros((cout,), jnp.float32)}


def conv_p(cin, cout):
    return {"w": _init((3, 3, cin, cout), 9 * cin, COMPUTE_DTYPE),
            "b": jnp.zeros((cout,), jnp.float32)}


def conv1_p(cin, cout):
    return {"w": _init((cin, cout), cin, COMPUTE_DTYPE),
            "b": jnp.zeros((cout,), jnp.float32)}


def gn_p(c):
    return {"g": jnp.ones((1, c), jnp.float32), "b": jnp.zeros((1, c), jnp.float32)}


def resnet_p(cin, cout):
    p = {
        "norm1": gn_p(cin),
        "conv1": conv_p(cin, cout),
        "temb": linear_p(TIME_EMBED_DIM, cout),
        "norm2": gn_p(cout),
        "conv2": conv_p(cout, cout),
    }
    if cin != cout:
        p["shortcut"] = conv1_p(cin, cout)
    return p


def attn_p(c):
    return {"gn": gn_p(c),
            "qkv": {"w": _init((c, 3 * c), c), "b": jnp.zeros((3 * c,), jnp.float32)},
            "proj": linear_p(c, c)}


def build_params():
    params = {
        "time_lin1": linear_p(BLOCK_OUT[0], TIME_EMBED_DIM),
        "time_lin2": linear_p(TIME_EMBED_DIM, TIME_EMBED_DIM),
        "class_emb": linear_p(NUM_CLASSES, CLASS_EMB_SIZE),
        "conv_in": conv_p(IN_CHANNELS, BLOCK_OUT[0]),
        "norm_out": gn_p(BLOCK_OUT[0]),
        "conv_out": conv_p(BLOCK_OUT[0], OUT_CHANNELS),
    }
    # down blocks
    down = []
    out_c = BLOCK_OUT[0]
    for i, bt in enumerate(DOWN_TYPES):
        in_c, out_c = out_c, BLOCK_OUT[i]
        resnets = [resnet_p(in_c if j == 0 else out_c, out_c) for j in range(LAYERS_PER_BLOCK)]
        attns = [attn_p(out_c) for _ in range(LAYERS_PER_BLOCK)] if bt == "AttnDown" else None
        ds = conv_p(out_c, out_c) if i < len(DOWN_TYPES) - 1 else None
        down.append({"resnets": resnets, "attentions": attns, "downsample": ds})
    params["down_blocks"] = down
    # mid block
    c_mid = BLOCK_OUT[-1]
    params["mid"] = {"resnets": [resnet_p(c_mid, c_mid), resnet_p(c_mid, c_mid)],
                     "attn": attn_p(c_mid)}
    # up blocks
    rev = list(reversed(BLOCK_OUT))
    up = []
    out_c = rev[0]
    for i, bt in enumerate(UP_TYPES):
        prev_c, out_c = out_c, rev[i]
        in_c = rev[min(i + 1, len(rev) - 1)]
        resnets = []
        for j in range(LAYERS_PER_BLOCK + 1):
            skip_c = in_c if j == LAYERS_PER_BLOCK else out_c
            rin = prev_c if j == 0 else out_c
            resnets.append(resnet_p(rin + skip_c, out_c))
        attns = [attn_p(out_c) for _ in range(LAYERS_PER_BLOCK + 1)] if bt == "AttnUp" else None
        ups = conv_p(out_c, out_c) if i < len(UP_TYPES) - 1 else None
        up.append({"resnets": resnets, "attentions": attns, "upsample": ups})
    params["up_blocks"] = up
    return params


# ===================================== forward pass ===================================
def class_conditioned_unet_forward(params, sample_nchw, timestep, class_labels):
    x = jnp.transpose(sample_nchw, (0, 2, 3, 1)).astype(COMPUTE_DTYPE)  # NCHW -> NHWC bf16
    N = x.shape[0]

    # 1. time embedding (+ class embedding via the replaced nn.Linear) — tiny, f32, XLA.
    timesteps = jnp.broadcast_to(
        jnp.atleast_1d(jnp.asarray(timestep, jnp.float32)), (N,))
    t_emb = timestep_embedding(timesteps, BLOCK_OUT[0])
    emb = linear(t_emb, params["time_lin1"])
    emb = silu(emb)
    emb = linear(emb, params["time_lin2"])
    class_emb = linear(class_labels.astype(jnp.float32), params["class_emb"])
    emb = emb + class_emb

    # 2. pre-process (Cin=3 -> XLA path inside conv3x3)
    x = conv3x3(x, params["conv_in"]["w"], params["conv_in"]["b"])

    # 3. down
    skips = [x]
    for bp in params["down_blocks"]:
        x, s = down_block(x, emb, bp)
        skips.extend(s)

    # 4. mid
    mid = params["mid"]
    x = resnet_block(x, emb, mid["resnets"][0])
    x = attention_block(x, mid["attn"])
    x = resnet_block(x, emb, mid["resnets"][1])

    # 5. up
    for bp in params["up_blocks"]:
        x = up_block(x, emb, skips, bp)

    # 6. post-process
    x = group_norm(x, params["norm_out"], act=True)      # GN + SiLU fused
    x = conv3x3(x, params["conv_out"]["w"], params["conv_out"]["b"])  # N=3 -> XLA path

    return jnp.transpose(x, (0, 3, 1, 2)).astype(jnp.float32)   # NHWC -> NCHW, f32 API


# ========================================== main ======================================
if __name__ == "__main__":
    params = build_params()

    key = jax.random.PRNGKey(0)
    k_x, k_c = jax.random.split(key)
    # Small shapes consistent with the module: fully-convolutional UNet with
    # 5 stride-2 downsamples -> minimum spatial 32 (model default sample_size is 64).
    batch, spatial = 2, 32
    sample = jax.random.normal(k_x, (batch, IN_CHANNELS, spatial, spatial), jnp.float32)
    timestep = jnp.asarray(37.0, jnp.float32)
    labels = jax.nn.one_hot(
        jax.random.randint(k_c, (batch,), 0, NUM_CLASSES), NUM_CLASSES).astype(jnp.float32)

    fwd = jax.jit(class_conditioned_unet_forward)
    out = fwd(params, sample, timestep, labels)
    out = jax.block_until_ready(out)
    assert out.shape == (batch, OUT_CHANNELS, spatial, spatial), out.shape
    assert bool(jnp.all(jnp.isfinite(out)))
    print("KERNEL_OK")
</pallas_src>

<mosaic_0001>
module attributes {stable_mosaic.version = 11 : i64} {
  func.func @_gn_kernel(%arg0: i32, %arg1: memref<1x1024x128xbf16, #tpu.memory_space<vmem>>, %arg2: memref<128x32xf32, #tpu.memory_space<vmem>>, %arg3: memref<32x128xf32, #tpu.memory_space<vmem>>, %arg4: memref<1x128xf32, #tpu.memory_space<vmem>>, %arg5: memref<1x128xf32, #tpu.memory_space<vmem>>, %arg6: memref<1x1024x128xbf16, #tpu.memory_space<vmem>>) attributes {dimension_semantics = [#tpu.dimension_semantics<parallel>], iteration_bounds = array<i64: 2>, scalar_prefetch = 0 : i64, scratch_operands = 0 : i64, tpu.core_type = #tpu.core_type<tc>, window_params = [{transform_indices = @transform_0, window_bounds = array<i64: 1, 1024, 128>}, {pipeline_mode = #tpu.pipeline_mode<synchronous>, transform_indices = @transform_1, window_bounds = array<i64: 128, 32>}, {pipeline_mode = #tpu.pipeline_mode<synchronous>, transform_indices = @transform_2, window_bounds = array<i64: 32, 128>}, {pipeline_mode = #tpu.pipeline_mode<synchronous>, transform_indices = @transform_3, window_bounds = array<i64: 1, 128>}, {pipeline_mode = #tpu.pipeline_mode<synchronous>, transform_indices = @transform_4, window_bounds = array<i64: 1, 128>}, {transform_indices = @transform_5, window_bounds = array<i64: 1, 1024, 128>}]} {
    %c0 = arith.constant 0 : index
    %c0_0 = arith.constant 0 : index
    %c0_1 = arith.constant 0 : index
    %0 = vector.load %arg1[%c0, %c0_0, %c0_1] : memref<1x1024x128xbf16, #tpu.memory_space<vmem>>, vector<1x1024x128xbf16>
    %1 = vector.shape_cast %0 : vector<1x1024x128xbf16> to vector<1024x128xbf16>
    %2 = arith.extf %1 : vector<1024x128xbf16> to vector<1024x128xf32>
    %cst = arith.constant dense<0.000000e+00> : vector<128xf32>
    %3 = vector.multi_reduction <add>, %2, %cst [0] : vector<1024x128xf32> to vector<128xf32>
    %4 = vector.shape_cast %3 : vector<128xf32> to vector<1x128xf32>
    %5 = arith.mulf %2, %2 : vector<1024x128xf32>
    %cst_2 = arith.constant dense<0.000000e+00> : vector<128xf32>
    %6 = vector.multi_reduction <add>, %5, %cst_2 [0] : vector<1024x128xf32> to vector<128xf32>
    %7 = vector.shape_cast %6 : vector<128xf32> to vector<1x128xf32>
    %c0_3 = arith.constant 0 : index
    %c0_4 = arith.constant 0 : index
    %8 = vector.load %arg2[%c0_3, %c0_4] : memref<128x32xf32, #tpu.memory_space<vmem>>, vector<128x32xf32>
    %cst_5 = arith.constant dense<0.000000e+00> : vector<1x32xf32>
    %9 = tpu.matmul %4, %8, %cst_5 {dimension_numbers = #tpu.dot_dimension_numbers<[1], [0], [0], [1], [0, 0, 1, 1], [], []>} : vector<1x128xf32>, vector<128x32xf32>, vector<1x32xf32> -> vector<1x32xf32>
    %cst_6 = arith.constant dense<0.000000e+00> : vector<1x32xf32>
    %10 = tpu.matmul %7, %8, %cst_6 {dimension_numbers = #tpu.dot_dimension_numbers<[1], [0], [0], [1], [0, 0, 1, 1], [], []>} : vector<1x128xf32>, vector<128x32xf32>, vector<1x32xf32> -> vector<1x32xf32>
    %cst_7 = arith.constant 2.44140625E-4 : f32
    %11 = vector.broadcast %cst_7 : f32 to vector<1x32xf32>
    %12 = arith.mulf %9, %11 : vector<1x32xf32>
    %cst_8 = arith.constant 2.44140625E-4 : f32
    %13 = vector.broadcast %cst_8 : f32 to vector<1x32xf32>
    %14 = arith.mulf %10, %13 : vector<1x32xf32>
    %15 = arith.mulf %12, %12 : vector<1x32xf32>
    %16 = arith.subf %14, %15 : vector<1x32xf32>
    %cst_9 = arith.constant 0.000000e+00 : f32
    %17 = vector.broadcast %cst_9 : f32 to vector<1x32xf32>
    %18 = arith.maximumf %16, %17 : vector<1x32xf32>
    %cst_10 = arith.constant 9.99999974E-6 : f32
    %19 = vector.broadcast %cst_10 : f32 to vector<1x32xf32>
    %20 = arith.addf %18, %19 : vector<1x32xf32>
    %21 = math.rsqrt %20 : vector<1x32xf32>
    %c0_11 = arith.constant 0 : index
    %c0_12 = arith.constant 0 : index
    %22 = vector.load %arg3[%c0_11, %c0_12] : memref<32x128xf32, #tpu.memory_space<vmem>>, vector<32x128xf32>
    %cst_13 = arith.constant dense<0.000000e+00> : vector<1x128xf32>
    %23 = tpu.matmul %12, %22, %cst_13 {dimension_numbers = #tpu.dot_dimension_numbers<[1], [0], [0], [1], [0, 0, 1, 1], [], []>} : vector<1x32xf32>, vector<32x128xf32>, vector<1x128xf32> -> vector<1x128xf32>
    %cst_14 = arith.constant dense<0.000000e+00> : vector<1x128xf32>
    %24 = tpu.matmul %21, %22, %cst_14 {dimension_numbers = #tpu.dot_dimension_numbers<[1], [0], [0], [1], [0, 0, 1, 1], [], []>} : vector<1x32xf32>, vector<32x128xf32>, vector<1x128xf32> -> vector<1x128xf32>
    %25 = vector.broadcast %23 : vector<1x128xf32> to vector<1024x128xf32>
    %26 = arith.subf %2, %25 : vector<1024x128xf32>
    %27 = vector.broadcast %24 : vector<1x128xf32> to vector<1024x128xf32>
    %28 = arith.mulf %26, %27 : vector<1024x128xf32>
    %c0_15 = arith.constant 0 : index
    %c0_16 = arith.constant 0 : index
    %29 = vector.load %arg4[%c0_15, %c0_16] : memref<1x128xf32, #tpu.memory_space<vmem>>, vector<1x128xf32>
    %30 = vector.broadcast %29 : vector<1x128xf32> to vector<1024x128xf32>
    %31 = arith.mulf %28, %30 : vector<1024x128xf32>
    %c0_17 = arith.constant 0 : index
    %c0_18 = arith.constant 0 : index
    %32 = vector.load %arg5[%c0_17, %c0_18] : memref<1x128xf32, #tpu.memory_space<vmem>>, vector<1x128xf32>
    %33 = vector.broadcast %32 : vector<1x128xf32> to vector<1024x128xf32>
    %34 = arith.addf %31, %33 : vector<1024x128xf32>
    %cst_19 = arith.constant 0.000000e+00 : f32
    %35 = vector.broadcast %cst_19 : f32 to vector<1024x128xf32>
    %36 = arith.subf %35, %34 : vector<1024x128xf32>
    %37 = math.exp %36 : vector<1024x128xf32>
    %cst_20 = arith.constant 1.000000e+00 : f32
    %38 = vector.broadcast %cst_20 : f32 to vector<1024x128xf32>
    %39 = arith.addf %38, %37 : vector<1024x128xf32>
    %40 = tpu.reciprocal %39 {approx = true} : vector<1024x128xf32> -> vector<1024x128xf32>
    %41 = arith.mulf %34, %40 : vector<1024x128xf32>
    %42 = arith.truncf %41 : vector<1024x128xf32> to vector<1024x128xbf16>
    %c0_21 = arith.constant 0 : index
    %c0_22 = arith.constant 0 : index
    %c0_23 = arith.constant 0 : index
    %43 = vector.load %arg6[%c0_21, %c0_22, %c0_23] : memref<1x1024x128xbf16, #tpu.memory_space<vmem>>, vector<1x1024x128xbf16>
    %44 = vector.shape_cast %43 : vector<1x1024x128xbf16> to vector<1024x128xbf16>
    %45 = vector.shape_cast %42 : vector<1024x128xbf16> to vector<1x1024x128xbf16>
    tpu.vector_store %arg6[%c0_21, %c0_22, %c0_23], %45 {strides = array<i32>} : memref<1x1024x128xbf16, #tpu.memory_space<vmem>>, vector<1x1024x128xbf16>,
    return
  }
  func.func @transform_0(%arg0: i32) -> (i32, i32, i32) {
    %c0_i32 = arith.constant 0 : i32
    %c0_i32_0 = arith.constant 0 : i32
    %c0_i32_1 = arith.constant 0 : i32
    return %arg0, %c0_i32, %c0_i32_0 : i32, i32, i32
  }
  func.func @transform_1(%arg0: i32) -> (i32, i32) {
    %c0_i32 = arith.constant 0 : i32
    %c0_i32_0 = arith.constant 0 : i32
    %c0_i32_1 = arith.constant 0 : i32
    return %c0_i32, %c0_i32_0 : i32, i32
  }
  func.func @transform_2(%arg0: i32) -> (i32, i32) {
    %c0_i32 = arith.constant 0 : i32
    %c0_i32_0 = arith.constant 0 : i32
    %c0_i32_1 = arith.constant 0 : i32
    return %c0_i32, %c0_i32_0 : i32, i32
  }
  func.func @transform_3(%arg0: i32) -> (i32, i32) {
    %c0_i32 = arith.constant 0 : i32
    %c0_i32_0 = arith.constant 0 : i32
    %c0_i32_1 = arith.constant 0 : i32
    return %c0_i32, %c0_i32_0 : i32, i32
  }
  func.func @transform_4(%arg0: i32) -> (i32, i32) {
    %c0_i32 = arith.constant 0 : i32
    %c0_i32_0 = arith.constant 0 : i32
    %c0_i32_1 = arith.constant 0 : i32
    return %c0_i32, %c0_i32_0 : i32, i32
  }
  func.func @transform_5(%arg0: i32) -> (i32, i32, i32) {
    %c0_i32 = arith.constant 0 : i32
    %c0_i32_0 = arith.constant 0 : i32
    %c0_i32_1 = arith.constant 0 : i32
    return %arg0, %c0_i32, %c0_i32_0 : i32, i32, i32
  }
}

</mosaic_0001>

<llo_original>
// kernel: _group_norm_flat.1
$region0: #{_group_norm_flat.1}
  #allocation0 [shape = 'u32[]', space=smem, size = 0x4, offset = 0x4, fixed_abs, tag = 'smem constant byte address 0x4 - core index']
  #allocation1 [shape = 'u32[144,128]{1,0:T(1,128)}', space=vmem, size = 0x12000, scoped, tag = 'internal scratch']
  %s0 = inlined_call_operand.hbm [shape: bf16[2,1024,128], index: 0, kind: input, shape index: {}]
  %s1 = inlined_call_operand.vmem [shape: f32[128,32], index: 1, kind: input, shape index: {}]
  %s2 = inlined_call_operand.vmem [shape: f32[32,128], index: 2, kind: input, shape index: {}]
  %s3 = inlined_call_operand.vmem [shape: f32[1,128], index: 3, kind: input, shape index: {}]
  %s4 = inlined_call_operand.vmem [shape: f32[1,128], index: 4, kind: input, shape index: {}]
  %s5 = inlined_call_operand.hbm [shape: bf16[2,1024,128], index: 5, kind: output, shape index: {}]
  %s6 = sld [smem:[#allocation0]]
  $region57: #{_group_norm_flat.1} parent=0
    _
  %s8 = ssub.s32 1, %s6
  %s9 = scalar_select 0, %s8, %s6
  $region1: #{_group_norm_flat.1} parent=0
    #allocation2 [shape = 'u8[524288]{0}', space=vmem, size = 0x80000, scoped, tag = 'input window, operand 0']
    #allocation3 [shape = 's32[2]{0}', space=sflag, size = 0x8, scoped, tag = 'scoped memory for _group_norm_flat.1']
    #allocation4 [shape = 's32[2]{0}', space=sflag, size = 0x8, scoped, tag = 'scoped memory for _group_norm_flat.1']
    #allocation5 [shape = 'u8[524288]{0}', space=vmem, size = 0x80000, scoped, tag = 'output window, operand 0']
    %10 = vsyncpa [#allocation3], 0
    %s11 = scalar_lea.sflag [#allocation3], 1
    %12 = vsyncpa %s11, 0
    %13 = vsyncpa [#allocation4], 0
    %s14 = scalar_lea.sflag [#allocation4], 1
    %15 = vsyncpa %s14, 0
    loop: start=0, step=1, limit=4
    $region2: #{_group_norm_flat.1} parent=1 // loop_pre_header
      _
    $region3: #{_group_norm_flat.1} parent=1 // loop_header
      %s17 = sphi 0, %s21
      %p18 = scmp.ge.s32.totalorder %s17, 4
      %s27 = sphi 0, %s29
      %s30 = sphi 0, %s27
      %s31 = sphi 0, %s30
      %s47 = sphi 0, %s31
      %s51 = sphi 0, %s51
      %s53 = sphi 0, %s51
      %s54 = sphi 0, %s53
      %s68 = sphi 0, %s54
      %s72 = sphi 0, %s72
      %s74 = sphi 0, %s72
      %s75 = sphi 0, %s74
      %s89 = sphi 0, %s75
      %s93 = sphi 0, %s93
      %s95 = sphi 0, %s93
      %s96 = sphi 0, %s95
      %s110 = sphi 0, %s96
      %s114 = sphi 0, %s114
      %s116 = sphi 0, %s114
      %s117 = sphi 0, %s116
      %s131 = sphi 0, %s117
      %s137 = sphi 0, %s139
      %s140 = sphi 0, %s137
      %s141 = sphi 0, %s140
      %s157 = sphi 0, %s141
    $region4: #{_group_norm_flat.1} parent=1 // loop_header_branch
      %20 = sbr.rel (%p18) target = $region8
    $region5: #{_group_norm_flat.1} parent=1 // loop_body
      %s22 = ssub.s32 %s17, 1
      %s23 = ssub.s32 %s17, 2
      %s24 = sadd.s32 %s17, 1
      %s25 = ssub.s32 %s17, %s24
      %p26 = scmp.eq.s32.totalorder %s25, 0
      %s28 = sadd.s32 %s27, 1
      %s29 = scalar_select %p26, %s27, %s28
      %p32 = pneg %p26
      %p33 = scmp.eq.s32.totalorder %s17, 1
      %p34 = por %p32, %p33
      %p35 = scmp.ne.s32.totalorder %s27, %s30
      %p36 = scmp.eq.s32.totalorder %s17, 0
      %p37 = por %p35, %p36
      %p38 = scmp.ne.s32.totalorder %s27, %s30
      %p39 = scmp.eq.s32.totalorder %s22, 1
      %p40 = por %p38, %p39
      %p41 = scmp.ne.s32.totalorder %s30, %s31
      %p42 = scmp.eq.s32.totalorder %s22, 0
      %p43 = por %p41, %p42
      %p44 = scmp.ne.s32.totalorder %s30, %s31
      %p45 = scmp.eq.s32.totalorder %s23, 1
      %p46 = por %p44, %p45
      %p48 = scmp.ne.s32.totalorder %s31, %s47
      %p49 = scmp.eq.s32.totalorder %s23, 0
      %p50 = por %p48, %p49
      %s52 = sadd.s32 %s51, 1
      %p55 = scmp.eq.s32.totalorder %s17, 1
      %p56 = scmp.ne.s32.totalorder %s51, %s53
      %p57 = scmp.eq.s32.totalorder %s17, 0
      %p58 = por %p56, %p57
      %p59 = scmp.ne.s32.totalorder %s51, %s53
      %p60 = scmp.eq.s32.totalorder %s22, 1
      %p61 = por %p59, %p60
      %p62 = scmp.ne.s32.totalorder %s53, %s54
      %p63 = scmp.eq.s32.totalorder %s22, 0
      %p64 = por %p62, %p63
      %p65 = scmp.ne.s32.totalorder %s53, %s54
      %p66 = scmp.eq.s32.totalorder %s23, 1
      %p67 = por %p65, %p66
      %p69 = scmp.ne.s32.totalorder %s54, %s68
      %p70 = scmp.eq.s32.totalorder %s23, 0
      %p71 = por %p69, %p70
      %s73 = sadd.s32 %s72, 1
      %p76 = scmp.eq.s32.totalorder %s17, 1
      %p77 = scmp.ne.s32.totalorder %s72, %s74
      %p78 = scmp.eq.s32.totalorder %s17, 0
      %p79 = por %p77, %p78
      %p80 = scmp.ne.s32.totalorder %s72, %s74
      %p81 = scmp.eq.s32.totalorder %s22, 1
      %p82 = por %p80, %p81
      %p83 = scmp.ne.s32.totalorder %s74, %s75
      %p84 = scmp.eq.s32.totalorder %s22, 0
      %p85 = por %p83, %p84
      %p86 = scmp.ne.s32.totalorder %s74, %s75
      %p87 = scmp.eq.s32.totalorder %s23, 1
      %p88 = por %p86, %p87
      %p90 = scmp.ne.s32.totalorder %s75, %s89
      %p91 = scmp.eq.s32.totalorder %s23, 0
      %p92 = por %p90, %p91
      %s94 = sadd.s32 %s93, 1
      %p97 = scmp.eq.s32.totalorder %s17, 1
      %p98 = scmp.ne.s32.totalorder %s93, %s95
      %p99 = scmp.eq.s32.totalorder %s17, 0
      %p100 = por %p98, %p99
      %p101 = scmp.ne.s32.totalorder %s93, %s95
      %p102 = scmp.eq.s32.totalorder %s22, 1
      %p103 = por %p101, %p102
      %p104 = scmp.ne.s32.totalorder %s95, %s96
      %p105 = scmp.eq.s32.totalorder %s22, 0
      %p106 = por %p104, %p105
      %p107 = scmp.ne.s32.totalorder %s95, %s96
      %p108 = scmp.eq.s32.totalorder %s23, 1
      %p109 = por %p107, %p108
      %p111 = scmp.ne.s32.totalorder %s96, %s110
      %p112 = scmp.eq.s32.totalorder %s23, 0
      %p113 = por %p111, %p112
      %s115 = sadd.s32 %s114, 1
      %p118 = scmp.eq.s32.totalorder %s17, 1
      %p119 = scmp.ne.s32.totalorder %s114, %s116
      %p120 = scmp.eq.s32.totalorder %s17, 0
      %p121 = por %p119, %p120
      %p122 = scmp.ne.s32.totalorder %s114, %s116
      %p123 = scmp.eq.s32.totalorder %s22, 1
      %p124 = por %p122, %p123
      %p125 = scmp.ne.s32.totalorder %s116, %s117
      %p126 = scmp.eq.s32.totalorder %s22, 0
      %p127 = por %p125, %p126
      %p128 = scmp.ne.s32.totalorder %s116, %s117
      %p129 = scmp.eq.s32.totalorder %s23, 1
      %p130 = por %p128, %p129
      %p132 = scmp.ne.s32.totalorder %s117, %s131
      %p133 = scmp.eq.s32.totalorder %s23, 0
      %p134 = por %p132, %p133
      %s135 = ssub.s32 %s17, %s24
      %p136 = scmp.eq.s32.totalorder %s135, 0
      %s138 = sadd.s32 %s137, 1
      %s139 = scalar_select %p136, %s137, %s138
      %p142 = pneg %p136
      %p143 = scmp.eq.s32.totalorder %s17, 1
      %p144 = por %p142, %p143
      %p145 = scmp.ne.s32.totalorder %s137, %s140
      %p146 = scmp.eq.s32.totalorder %s17, 0
      %p147 = por %p145, %p146
      %p148 = scmp.ne.s32.totalorder %s137, %s140
      %p149 = scmp.eq.s32.totalorder %s22, 1
      %p150 = por %p148, %p149
      %p151 = scmp.ne.s32.totalorder %s140, %s141
      %p152 = scmp.eq.s32.totalorder %s22, 0
      %p153 = por %p151, %p152
      %p154 = scmp.ne.s32.totalorder %s140, %s141
      %p155 = scmp.eq.s32.totalorder %s23, 1
      %p156 = por %p154, %p155
      %p158 = scmp.ne.s32.totalorder %s141, %s157
      %p159 = scmp.eq.s32.totalorder %s23, 0
      %p160 = por %p158, %p159
      %p161 = scmp.le.s32.totalorder 1, %s17
      %p162 = scmp.lt.s32.totalorder %s17, 3
      %p163 = pnand %p161, %p162
      %p164 = pneg %p163
      // Predicated region
      $region9: #{_group_norm_flat.1} parent=5 // pred_check
        _
      $region10: #{_group_norm_flat.1} parent=5 // pred_check_branch
        %166 = sbr.rel (%p163) target = $region12
      $region11: #{_group_norm_flat.1} parent=5 // pred_region
        %s167 = ssub.s32 %s17, 1
        // Predicated region
        $region13: #{_group_norm_flat.1} parent=11 // pred_check
          %p168 = pneg %p64
        $region14: #{_group_norm_flat.1} parent=11 // pred_check_branch
          %170 = sbr.rel (%p168) target = $region16
        $region15: #{_group_norm_flat.1} parent=11 // pred_region
          _
        $region16: #{_group_norm_flat.1} parent=11 // pred_fallthru
          _
        // Predicated region
        $region17: #{_group_norm_flat.1} parent=11 // pred_check
          %p171 = pneg %p85
        $region18: #{_group_norm_flat.1} parent=11 // pred_check_branch
          %173 = sbr.rel (%p171) target = $region20
        $region19: #{_group_norm_flat.1} parent=11 // pred_region
          _
        $region20: #{_group_norm_flat.1} parent=11 // pred_fallthru
          _
        // Predicated region
        $region21: #{_group_norm_flat.1} parent=11 // pred_check
          %p174 = pneg %p106
        $region22: #{_group_norm_flat.1} parent=11 // pred_check_branch
          %176 = sbr.rel (%p174) target = $region24
        $region23: #{_group_norm_flat.1} parent=11 // pred_region
          _
        $region24: #{_group_norm_flat.1} parent=11 // pred_fallthru
          _
        // Predicated region
        $region25: #{_group_norm_flat.1} parent=11 // pred_check
          %p177 = pneg %p127
        $region26: #{_group_norm_flat.1} parent=11 // pred_check_branch
          %179 = sbr.rel (%p177) target = $region28
        $region27: #{_group_norm_flat.1} parent=11 // pred_region
          _
        $region28: #{_group_norm_flat.1} parent=11 // pred_fallthru
          _
      $region12: #{_group_norm_flat.1} parent=5 // pred_fallthru
        _
      %p180 = scmp.lt.s32.totalorder %s17, 2
      // Predicated region
      $region29: #{_group_norm_flat.1} parent=5 // pred_check
        %p181 = pneg %p180
      $region30: #{_group_norm_flat.1} parent=5 // pred_check_branch
        %183 = sbr.rel (%p181) target = $region32
      $region31: #{_group_norm_flat.1} parent=5 // pred_region
        // Predicated region
        $region33: #{_group_norm_flat.1} parent=31 // pred_check
          %p184 = pneg %p37
        $region34: #{_group_norm_flat.1} parent=31 // pred_check_branch
          %186 = sbr.rel (%p184) target = $region36
        $region35: #{_group_norm_flat.1} parent=31 // pred_region
          %s187 = sand.u32 %s27, 1
          %s188 = scalar_lea.sflag [#allocation3], %s187
          %s189 = sand.u32 %s27, 1
          %s190 = smul.addr %s189, 512
          %s191 = scalar_lea.vmem [#allocation2], %s190
          %s193 = ssub.s32 8192, 8192
          %194 = vsyncadd %s188, %s193
          %s195 = smul.addr %s17, 128
          %s196 = smul.addr %s195, 64
          %s197 = scalar_lea.hbm %s0, %s196
          %s198 = sshll.u32 %s191, 4
          %s199 = int_to_ptr.vmem [resolvable:$true] %s198
          %204 = dma.hbm_to_vmem [thread:$0]  %s197, 8192, %s199, %s188, 64, 64, 4
        $region36: #{_group_norm_flat.1} parent=31 // pred_fallthru
          _
      $region32: #{_group_norm_flat.1} parent=5 // pred_fallthru
        _
      %p205 = scmp.le.s32.totalorder 1, %s17
      %p206 = scmp.lt.s32.totalorder %s17, 3
      %p207 = pnand %p205, %p206
      %p208 = pneg %p207
      // Predicated region
      $region37: #{_group_norm_flat.1} parent=5 // pred_check
        _
      $region38: #{_group_norm_flat.1} parent=5 // pred_check_branch
        %210 = sbr.rel (%p207) target = $region40
      $region39: #{_group_norm_flat.1} parent=5 // pred_region
        %s211 = ssub.s32 %s17, 1
        %s212 = sand.u32 %s30, 1
        %s213 = scalar_lea.sflag [#allocation3], %s212
        %s214 = sand.u32 %s30, 1
        %s215 = smul.addr %s214, 512
        %s216 = scalar_lea.vmem [#allocation2], %s215
        // Predicated region
        $region41: #{_group_norm_flat.1} parent=39 // pred_check
          %p217 = pneg %p43
        $region42: #{_group_norm_flat.1} parent=39 // pred_check_branch
          %219 = sbr.rel (%p217) target = $region44
        $region43: #{_group_norm_flat.1} parent=39 // pred_region
          %220 = dma.done %s213, 8192
        $region44: #{_group_norm_flat.1} parent=39 // pred_fallthru
          _
        %s221 = sand.u32 %s30, 1
        %s222 = scalar_lea.sflag [#allocation3], %s221
        %s223 = sand.u32 %s30, 1
        %s224 = smul.addr %s223, 512
        %s225 = scalar_lea.vmem [#allocation2], %s224
        %p226 = pneg %p43
        %p227 = pneg %p40
        %p228 = pneg %p64
        %p229 = pneg %p61
        %p230 = pneg %p85
        %p231 = pneg %p82
        %p232 = pneg %p106
        %p233 = pneg %p103
        %p234 = pneg %p127
        %p235 = pneg %p124
        %p236 = pneg %p153
        %p237 = pneg %p150
        %s238 = sand.u32 %s140, 1
        %s239 = scalar_lea.sflag [#allocation4], %s238
        %s240 = sand.u32 %s140, 1
        %s241 = smul.addr %s240, 512
        %s242 = scalar_lea.vmem [#allocation5], %s241
        %v243 = vld [vmem:[%s216] sm:$0xf]
        %v244 = vld [vmem:[%s216 + $0x4] sm:$0xf]
        %v245 = vld [vmem:[%s216 + $0x8] sm:$0xf]
        %v246 = vld [vmem:[%s216 + $0xc] sm:$0xf]
        %v247 = vld [vmem:[%s216 + $0x10] sm:$0xf]
        %v248 = vld [vmem:[%s216 + $0x14] sm:$0xf]
        %v249 = vld [vmem:[%s216 + $0x18] sm:$0xf]
        %v250 = vld [vmem:[%s216 + $0x1c] sm:$0xf]
        %v251 = vld [vmem:[%s216 + $0x20] sm:$0xf]
        %v252 = vld [vmem:[%s216 + $0x24] sm:$0xf]
        %v253 = vld [vmem:[%s216 + $0x28] sm:$0xf]
        %v254 = vld [vmem:[%s216 + $0x2c] sm:$0xf]
        %v255 = vld [vmem:[%s216 + $0x30] sm:$0xf]
        %v256 = vld [vmem:[%s216 + $0x34] sm:$0xf]
        %v257 = vld [vmem:[%s216 + $0x38] sm:$0xf]
        %v258 = vld [vmem:[%s216 + $0x3c] sm:$0xf]
        %v259 = vld [vmem:[%s216 + $0x40] sm:$0xf]
        %v260 = vld [vmem:[%s216 + $0x44] sm:$0xf]
        %v261 = vld [vmem:[%s216 + $0x48] sm:$0xf]
        %v262 = vld [vmem:[%s216 + $0x4c] sm:$0xf]
        %v263 = vld [vmem:[%s216 + $0x50] sm:$0xf]
        %v264 = vld [vmem:[%s216 + $0x54] sm:$0xf]
        %v265 = vld [vmem:[%s216 + $0x58] sm:$0xf]
        %v266 = vld [vmem:[%s216 + $0x5c] sm:$0xf]
        %v267 = vld [vmem:[%s216 + $0x60] sm:$0xf]
        %v268 = vld [vmem:[%s216 + $0x64] sm:$0xf]
        %v269 = vld [vmem:[%s216 + $0x68] sm:$0xf]
        %v270 = vld [vmem:[%s216 + $0x6c] sm:$0xf]
        %v271 = vld [vmem:[%s216 + $0x70] sm:$0xf]
        %v272 = vld [vmem:[%s216 + $0x74] sm:$0xf]
        %v273 = vld [vmem:[%s216 + $0x78] sm:$0xf]
        %v274 = vld [vmem:[%s216 + $0x7c] sm:$0xf]
        %v275 = vld [vmem:[%s216 + $0x80] sm:$0xf]
        %v276 = vld [vmem:[%s216 + $0x84] sm:$0xf]
        %v277 = vld [vmem:[%s216 + $0x88] sm:$0xf]
        %v278 = vld [vmem:[%s216 + $0x8c] sm:$0xf]
        %v279 = vld [vmem:[%s216 + $0x90] sm:$0xf]
        %v280 = vld [vmem:[%s216 + $0x94] sm:$0xf]
        %v281 = vld [vmem:[%s216 + $0x98] sm:$0xf]
        %v282 = vld [vmem:[%s216 + $0x9c] sm:$0xf]
        %v283 = vld [vmem:[%s216 + $0xa0] sm:$0xf]
        %v284 = vld [vmem:[%s216 + $0xa4] sm:$0xf]
        %v285 = vld [vmem:[%s216 + $0xa8] sm:$0xf]
        %v286 = vld [vmem:[%s216 + $0xac] sm:$0xf]
        %v287 = vld [vmem:[%s216 + $0xb0] sm:$0xf]
        %v288 = vld [vmem:[%s216 + $0xb4] sm:$0xf]
        %v289 = vld [vmem:[%s216 + $0xb8] sm:$0xf]
        %v290 = vld [vmem:[%s216 + $0xbc] sm:$0xf]
        %v291 = vld [vmem:[%s216 + $0xc0] sm:$0xf]
        %v292 = vld [vmem:[%s216 + $0xc4] sm:$0xf]
        %v293 = vld [vmem:[%s216 + $0xc8] sm:$0xf]
        %v294 = vld [vmem:[%s216 + $0xcc] sm:$0xf]
        %v295 = vld [vmem:[%s216 + $0xd0] sm:$0xf]
        %v296 = vld [vmem:[%s216 + $0xd4] sm:$0xf]
        %v297 = vld [vmem:[%s216 + $0xd8] sm:$0xf]
        %v298 = vld [vmem:[%s216 + $0xdc] sm:$0xf]
        %v299 = vld [vmem:[%s216 + $0xe0] sm:$0xf]
        %v300 = vld [vmem:[%s216 + $0xe4] sm:$0xf]
        %v301 = vld [vmem:[%s216 + $0xe8] sm:$0xf]
        %v302 = vld [vmem:[%s216 + $0xec] sm:$0xf]
        %v303 = vld [vmem:[%s216 + $0xf0] sm:$0xf]
        %v304 = vld [vmem:[%s216 + $0xf4] sm:$0xf]
        %v305 = vld [vmem:[%s216 + $0xf8] sm:$0xf]
        %v306 = vld [vmem:[%s216 + $0xfc] sm:$0xf]
        %v307 = vld [vmem:[%s216 + $0x100] sm:$0xf]
        %v308 = vld [vmem:[%s216 + $0x104] sm:$0xf]
        %v309 = vld [vmem:[%s216 + $0x108] sm:$0xf]
        %v310 = vld [vmem:[%s216 + $0x10c] sm:$0xf]
        %v311 = vld [vmem:[%s216 + $0x110] sm:$0xf]
        %v312 = vld [vmem:[%s216 + $0x114] sm:$0xf]
        %v313 = vld [vmem:[%s216 + $0x118] sm:$0xf]
        %v314 = vld [vmem:[%s216 + $0x11c] sm:$0xf]
        %v315 = vld [vmem:[%s216 + $0x120] sm:$0xf]
        %v316 = vld [vmem:[%s216 + $0x124] sm:$0xf]
        %v317 = vld [vmem:[%s216 + $0x128] sm:$0xf]
        %v318 = vld [vmem:[%s216 + $0x12c] sm:$0xf]
        %v319 = vld [vmem:[%s216 + $0x130] sm:$0xf]
        %v320 = vld [vmem:[%s216 + $0x134] sm:$0xf]
        %v321 = vld [vmem:[%s216 + $0x138] sm:$0xf]
        %v322 = vld [vmem:[%s216 + $0x13c] sm:$0xf]
        %v323 = vld [vmem:[%s216 + $0x140] sm:$0xf]
        %v324 = vld [vmem:[%s216 + $0x144] sm:$0xf]
        %v325 = vld [vmem:[%s216 + $0x148] sm:$0xf]
        %v326 = vld [vmem:[%s216 + $0x14c] sm:$0xf]
        %v327 = vld [vmem:[%s216 + $0x150] sm:$0xf]
        %v328 = vld [vmem:[%s216 + $0x154] sm:$0xf]
        %v329 = vld [vmem:[%s216 + $0x158] sm:$0xf]
        %v330 = vld [vmem:[%s216 + $0x15c] sm:$0xf]
        %v331 = vld [vmem:[%s216 + $0x160] sm:$0xf]
        %v332 = vld [vmem:[%s216 + $0x164] sm:$0xf]
        %v333 = vld [vmem:[%s216 + $0x168] sm:$0xf]
        %v334 = vld [vmem:[%s216 + $0x16c] sm:$0xf]
        %v335 = vld [vmem:[%s216 + $0x170] sm:$0xf]
        %v336 = vld [vmem:[%s216 + $0x174] sm:$0xf]
        %v337 = vld [vmem:[%s216 + $0x178] sm:$0xf]
        %v338 = vld [vmem:[%s216 + $0x17c] sm:$0xf]
        %v339 = vld [vmem:[%s216 + $0x180] sm:$0xf]
        %v340 = vld [vmem:[%s216 + $0x184] sm:$0xf]
        %v341 = vld [vmem:[%s216 + $0x188] sm:$0xf]
        %v342 = vld [vmem:[%s216 + $0x18c] sm:$0xf]
        %v343 = vld [vmem:[%s216 + $0x190] sm:$0xf]
        %v344 = vld [vmem:[%s216 + $0x194] sm:$0xf]
        %v345 = vld [vmem:[%s216 + $0x198] sm:$0xf]
        %v346 = vld [vmem:[%s216 + $0x19c] sm:$0xf]
        %v347 = vld [vmem:[%s216 + $0x1a0] sm:$0xf]
        %v348 = vld [vmem:[%s216 + $0x1a4] sm:$0xf]
        %v349 = vld [vmem:[%s216 + $0x1a8] sm:$0xf]
        %v350 = vld [vmem:[%s216 + $0x1ac] sm:$0xf]
        %v351 = vld [vmem:[%s216 + $0x1b0] sm:$0xf]
        %v352 = vld [vmem:[%s216 + $0x1b4] sm:$0xf]
        %v353 = vld [vmem:[%s216 + $0x1b8] sm:$0xf]
        %v354 = vld [vmem:[%s216 + $0x1bc] sm:$0xf]
        %v355 = vld [vmem:[%s216 + $0x1c0] sm:$0xf]
        %v356 = vld [vmem:[%s216 + $0x1c4] sm:$0xf]
        %v357 = vld [vmem:[%s216 + $0x1c8] sm:$0xf]
        %v358 = vld [vmem:[%s216 + $0x1cc] sm:$0xf]
        %v359 = vld [vmem:[%s216 + $0x1d0] sm:$0xf]
        %v360 = vld [vmem:[%s216 + $0x1d4] sm:$0xf]
        %v361 = vld [vmem:[%s216 + $0x1d8] sm:$0xf]
        %v362 = vld [vmem:[%s216 + $0x1dc] sm:$0xf]
        %v363 = vld [vmem:[%s216 + $0x1e0] sm:$0xf]
        %v364 = vld [vmem:[%s216 + $0x1e4] sm:$0xf]
        %v365 = vld [vmem:[%s216 + $0x1e8] sm:$0xf]
        %v366 = vld [vmem:[%s216 + $0x1ec] sm:$0xf]
        %v367 = vld [vmem:[%s216 + $0x1f0] sm:$0xf]
        %v368 = vld [vmem:[%s216 + $0x1f4] sm:$0xf]
        %v369 = vld [vmem:[%s216 + $0x1f8] sm:$0xf]
        %v370 = vld [vmem:[%s216 + $0x1fc] sm:$0xf]
        %v371 = vunpack.c.l.bf16 %v243
        %v372 = vunpack.c.l.bf16 %v244
        %v373 = vunpack.c.l.bf16 %v245
        %v374 = vunpack.c.l.bf16 %v246
        %v375 = vunpack.c.l.bf16 %v247
        %v376 = vunpack.c.l.bf16 %v248
        %v377 = vunpack.c.l.bf16 %v249
        %v378 = vunpack.c.l.bf16 %v250
        %v379 = vunpack.c.l.bf16 %v251
        %v380 = vunpack.c.l.bf16 %v252
        %v381 = vunpack.c.l.bf16 %v253
        %v382 = vunpack.c.l.bf16 %v254
        %v383 = vunpack.c.l.bf16 %v255
        %v384 = vunpack.c.l.bf16 %v256
        %v385 = vunpack.c.l.bf16 %v257
        %v386 = vunpack.c.l.bf16 %v258
        %v387 = vunpack.c.l.bf16 %v259
        %v388 = vunpack.c.l.bf16 %v260
        %v389 = vunpack.c.l.bf16 %v261
        %v390 = vunpack.c.l.bf16 %v262
        %v391 = vunpack.c.l.bf16 %v263
        %v392 = vunpack.c.l.bf16 %v264
        %v393 = vunpack.c.l.bf16 %v265
        %v394 = vunpack.c.l.bf16 %v266
        %v395 = vunpack.c.l.bf16 %v267
        %v396 = vunpack.c.l.bf16 %v268
        %v397 = vunpack.c.l.bf16 %v269
        %v398 = vunpack.c.l.bf16 %v270
        %v399 = vunpack.c.l.bf16 %v271
        %v400 = vunpack.c.l.bf16 %v272
        %v401 = vunpack.c.l.bf16 %v273
        %v402 = vunpack.c.l.bf16 %v274
        %v403 = vunpack.c.l.bf16 %v275
        %v404 = vunpack.c.l.bf16 %v276
        %v405 = vunpack.c.l.bf16 %v277
        %v406 = vunpack.c.l.bf16 %v278
        %v407 = vunpack.c.l.bf16 %v279
        %v408 = vunpack.c.l.bf16 %v280
        %v409 = vunpack.c.l.bf16 %v281
        %v410 = vunpack.c.l.bf16 %v282
        %v411 = vunpack.c.l.bf16 %v283
        %v412 = vunpack.c.l.bf16 %v284
        %v413 = vunpack.c.l.bf16 %v285
        %v414 = vunpack.c.l.bf16 %v286
        %v415 = vunpack.c.l.bf16 %v287
        %v416 = vunpack.c.l.bf16 %v288
        %v417 = vunpack.c.l.bf16 %v289
        %v418 = vunpack.c.l.bf16 %v290
        %v419 = vunpack.c.l.bf16 %v291
        %v420 = vunpack.c.l.bf16 %v292
        %v421 = vunpack.c.l.bf16 %v293
        %v422 = vunpack.c.l.bf16 %v294
        %v423 = vunpack.c.l.bf16 %v295
        %v424 = vunpack.c.l.bf16 %v296
        %v425 = vunpack.c.l.bf16 %v297
        %v426 = vunpack.c.l.bf16 %v298
        %v427 = vunpack.c.l.bf16 %v299
        %v428 = vunpack.c.l.bf16 %v300
        %v429 = vunpack.c.l.bf16 %v301
        %v430 = vunpack.c.l.bf16 %v302
        %v431 = vunpack.c.l.bf16 %v303
        %v432 = vunpack.c.l.bf16 %v304
        %v433 = vunpack.c.l.bf16 %v305
        %v434 = vunpack.c.l.bf16 %v306
        %v435 = vunpack.c.l.bf16 %v307
        %v436 = vunpack.c.l.bf16 %v308
        %v437 = vunpack.c.l.bf16 %v309
        %v438 = vunpack.c.l.bf16 %v310
        %v439 = vunpack.c.l.bf16 %v311
        %v440 = vunpack.c.l.bf16 %v312
        %v441 = vunpack.c.l.bf16 %v313
        %v442 = vunpack.c.l.bf16 %v314
        %v443 = vunpack.c.l.bf16 %v315
        %v444 = vunpack.c.l.bf16 %v316
        %v445 = vunpack.c.l.bf16 %v317
        %v446 = vunpack.c.l.bf16 %v318
        %v447 = vunpack.c.l.bf16 %v319
        %v448 = vunpack.c.l.bf16 %v320
        %v449 = vunpack.c.l.bf16 %v321
        %v450 = vunpack.c.l.bf16 %v322
        %v451 = vunpack.c.l.bf16 %v323
        %v452 = vunpack.c.l.bf16 %v324
        %v453 = vunpack.c.l.bf16 %v325
        %v454 = vunpack.c.l.bf16 %v326
        %v455 = vunpack.c.l.bf16 %v327
        %v456 = vunpack.c.l.bf16 %v328
        %v457 = vunpack.c.l.bf16 %v329
        %v458 = vunpack.c.l.bf16 %v330
        %v459 = vunpack.c.l.bf16 %v331
        %v460 = vunpack.c.l.bf16 %v332
        %v461 = vunpack.c.l.bf16 %v333
        %v462 = vunpack.c.l.bf16 %v334
        %v463 = vunpack.c.l.bf16 %v335
        %v464 = vunpack.c.l.bf16 %v336
        %v465 = vunpack.c.l.bf16 %v337
        %v466 = vunpack.c.l.bf16 %v338
        %v467 = vunpack.c.l.bf16 %v339
        %v468 = vunpack.c.l.bf16 %v340
        %v469 = vunpack.c.l.bf16 %v341
        %v470 = vunpack.c.l.bf16 %v342
        %v471 = vunpack.c.l.bf16 %v343
        %v472 = vunpack.c.l.bf16 %v344
        %v473 = vunpack.c.l.bf16 %v345
        %v474 = vunpack.c.l.bf16 %v346
        %v475 = vunpack.c.l.bf16 %v347
        %v476 = vunpack.c.l.bf16 %v348
        %v477 = vunpack.c.l.bf16 %v349
        %v478 = vunpack.c.l.bf16 %v350
        %v479 = vunpack.c.l.bf16 %v351
        %v480 = vunpack.c.l.bf16 %v352
        %v481 = vunpack.c.l.bf16 %v353
        %v482 = vunpack.c.l.bf16 %v354
        %v483 = vunpack.c.l.bf16 %v355
        %v484 = vunpack.c.l.bf16 %v356
        %v485 = vunpack.c.l.bf16 %v357
        %v486 = vunpack.c.l.bf16 %v358
        %v487 = vunpack.c.l.bf16 %v359
        %v488 = vunpack.c.l.bf16 %v360
        %v489 = vunpack.c.l.bf16 %v361
        %v490 = vunpack.c.l.bf16 %v362
        %v491 = vunpack.c.l.bf16 %v363
        %v492 = vunpack.c.l.bf16 %v364
        %v493 = vunpack.c.l.bf16 %v365
        %v494 = vunpack.c.l.bf16 %v366
        %v495 = vunpack.c.l.bf16 %v367
        %v496 = vunpack.c.l.bf16 %v368
        %v497 = vunpack.c.l.bf16 %v369
        %v498 = vunpack.c.l.bf16 %v370
        %v499 = vadd.f32 %v371, %v372
        %v500 = vadd.f32 %v499, %v373
        %v501 = vadd.f32 %v500, %v374
        %v502 = vadd.f32 %v501, %v375
        %v503 = vadd.f32 %v502, %v376
        %v504 = vadd.f32 %v503, %v377
        %v505 = vadd.f32 %v504, %v378
        %v506 = vadd.f32 %v505, %v379
        %v507 = vadd.f32 %v506, %v380
        %v508 = vadd.f32 %v507, %v381
        %v509 = vadd.f32 %v508, %v382
        %v510 = vadd.f32 %v509, %v383
        %v511 = vadd.f32 %v510, %v384
        %v512 = vadd.f32 %v511, %v385
        %v513 = vadd.f32 %v512, %v386
        %v514 = vadd.f32 %v513, %v387
        %v515 = vadd.f32 %v514, %v388
        %v516 = vadd.f32 %v515, %v389
        %v517 = vadd.f32 %v516, %v390
        %v518 = vadd.f32 %v517, %v391
        %v519 = vadd.f32 %v518, %v392
        %v520 = vadd.f32 %v519, %v393
        %v521 = vadd.f32 %v520, %v394
        %v522 = vadd.f32 %v521, %v395
        %v523 = vadd.f32 %v522, %v396
        %v524 = vadd.f32 %v523, %v397
        %v525 = vadd.f32 %v524, %v398
        %v526 = vadd.f32 %v525, %v399
        %v527 = vadd.f32 %v526, %v400
        %v528 = vadd.f32 %v527, %v401
        %v529 = vadd.f32 %v528, %v402
        %v530 = vadd.f32 %v529, %v403
        %v531 = vadd.f32 %v530, %v404
        %v532 = vadd.f32 %v531, %v405
        %v533 = vadd.f32 %v532, %v406
        %v534 = vadd.f32 %v533, %v407
        %v535 = vadd.f32 %v534, %v408
        %v536 = vadd.f32 %v535, %v409
        %v537 = vadd.f32 %v536, %v410
        %v538 = vadd.f32 %v537, %v411
        %v539 = vadd.f32 %v538, %v412
        %v540 = vadd.f32 %v539, %v413
        %v541 = vadd.f32 %v540, %v414
        %v542 = vadd.f32 %v541, %v415
        %v543 = vadd.f32 %v542, %v416
        %v544 = vadd.f32 %v543, %v417
        %v545 = vadd.f32 %v544, %v418
        %v546 = vadd.f32 %v545, %v419
        %v547 = vadd.f32 %v546, %v420
        %v548 = vadd.f32 %v547, %v421
        %v549 = vadd.f32 %v548, %v422
        %v550 = vadd.f32 %v549, %v423
        %v551 = vadd.f32 %v550, %v424
        %v552 = vadd.f32 %v551, %v425
        %v553 = vadd.f32 %v552, %v426
        %v554 = vadd.f32 %v553, %v427
        %v555 = vadd.f32 %v554, %v428
        %v556 = vadd.f32 %v555, %v429
        %v557 = vadd.f32 %v556, %v430
        %v558 = vadd.f32 %v557, %v431
        %v559 = vadd.f32 %v558, %v432
        %v560 = vadd.f32 %v559, %v433
        %v561 = vadd.f32 %v560, %v434
        %v562 = vadd.f32 %v561, %v435
        %v563 = vadd.f32 %v562, %v436
        %v564 = vadd.f32 %v563, %v437
        %v565 = vadd.f32 %v564, %v438
        %v566 = vadd.f32 %v565, %v439
        %v567 = vadd.f32 %v566, %v440
        %v568 = vadd.f32 %v567, %v441
        %v569 = vadd.f32 %v568, %v442
        %v570 = vadd.f32 %v569, %v443
        %v571 = vadd.f32 %v570, %v444
        %v572 = vadd.f32 %v571, %v445
        %v573 = vadd.f32 %v572, %v446
        %v574 = vadd.f32 %v573, %v447
        %v575 = vadd.f32 %v574, %v448
        %v576 = vadd.f32 %v575, %v449
        %v577 = vadd.f32 %v576, %v450
        %v578 = vadd.f32 %v577, %v451
        %v579 = vadd.f32 %v578, %v452
        %v580 = vadd.f32 %v579, %v453
        %v581 = vadd.f32 %v580, %v454
        %v582 = vadd.f32 %v581, %v455
        %v583 = vadd.f32 %v582, %v456
        %v584 = vadd.f32 %v583, %v457
        %v585 = vadd.f32 %v584, %v458
        %v586 = vadd.f32 %v585, %v459
        %v587 = vadd.f32 %v586, %v460
        %v588 = vadd.f32 %v587, %v461
        %v589 = vadd.f32 %v588, %v462
        %v590 = vadd.f32 %v589, %v463
        %v591 = vadd.f32 %v590, %v464
        %v592 = vadd.f32 %v591, %v465
        %v593 = vadd.f32 %v592, %v466
        %v594 = vadd.f32 %v593, %v467
        %v595 = vadd.f32 %v594, %v468
        %v596 = vadd.f32 %v595, %v469
        %v597 = vadd.f32 %v596, %v470
        %v598 = vadd.f32 %v597, %v471
        %v599 = vadd.f32 %v598, %v472
        %v600 = vadd.f32 %v599, %v473
        %v601 = vadd.f32 %v600, %v474
        %v602 = vadd.f32 %v601, %v475
        %v603 = vadd.f32 %v602, %v476
        %v604 = vadd.f32 %v603, %v477
        %v605 = vadd.f32 %v604, %v478
        %v606 = vadd.f32 %v605, %v479
        %v607 = vadd.f32 %v606, %v480
        %v608 = vadd.f32 %v607, %v481
        %v609 = vadd.f32 %v608, %v482
        %v610 = vadd.f32 %v609, %v483
        %v611 = vadd.f32 %v610, %v484
        %v612 = vadd.f32 %v611, %v485
        %v613 = vadd.f32 %v612, %v486
        %v614 = vadd.f32 %v613, %v487
        %v615 = vadd.f32 %v614, %v488
        %v616 = vadd.f32 %v615, %v489
        %v617 = vadd.f32 %v616, %v490
        %v618 = vadd.f32 %v617, %v491
        %v619 = vadd.f32 %v618, %v492
        %v620 = vadd.f32 %v619, %v493
        %v621 = vadd.f32 %v620, %v494
        %v622 = vadd.f32 %v621, %v495
        %v623 = vadd.f32 %v622, %v496
        %v624 = vadd.f32 %v623, %v497
        %v625 = vadd.f32 %v624, %v498
        %v626 = vrot.slane %v625, 4
        %v627 = vadd.f32 %v625, %v626
        %v628 = vrot.slane %v627, 2
        %v629 = vadd.f32 %v627, %v628
        %v630 = vrot.slane %v629, 1
        %v631 = vadd.f32 %v629, %v630
        %v632 = vmul.f32 %v371, %v371
        %v633 = vmul.f32 %v372, %v372
        %v634 = vmul.f32 %v373, %v373
        %v635 = vmul.f32 %v374, %v374
        %v636 = vmul.f32 %v375, %v375
        %v637 = vmul.f32 %v376, %v376
        %v638 = vmul.f32 %v377, %v377
        %v639 = vmul.f32 %v378, %v378
        %v640 = vmul.f32 %v379, %v379
        %v641 = vmul.f32 %v380, %v380
        %v642 = vmul.f32 %v381, %v381
        %v643 = vmul.f32 %v382, %v382
        %v644 = vmul.f32 %v383, %v383
        %v645 = vmul.f32 %v384, %v384
        %v646 = vmul.f32 %v385, %v385
        %v647 = vmul.f32 %v386, %v386
        %v648 = vmul.f32 %v387, %v387
        %v649 = vmul.f32 %v388, %v388
        %v650 = vmul.f32 %v389, %v389
        %v651 = vmul.f32 %v390, %v390
        %v652 = vmul.f32 %v391, %v391
        %v653 = vmul.f32 %v392, %v392
        %v654 = vmul.f32 %v393, %v393
        %v655 = vmul.f32 %v394, %v394
        %v656 = vmul.f32 %v395, %v395
        %v657 = vmul.f32 %v396, %v396
        %v658 = vmul.f32 %v397, %v397
        %v659 = vmul.f32 %v398, %v398
        %v660 = vmul.f32 %v399, %v399
        %v661 = vmul.f32 %v400, %v400
        %v662 = vmul.f32 %v401, %v401
        %v663 = vmul.f32 %v402, %v402
        %v664 = vmul.f32 %v403, %v403
        %v665 = vmul.f32 %v404, %v404
        %v666 = vmul.f32 %v405, %v405
        %v667 = vmul.f32 %v406, %v406
        %v668 = vmul.f32 %v407, %v407
        %v669 = vmul.f32 %v408, %v408
        %v670 = vmul.f32 %v409, %v409
        %v671 = vmul.f32 %v410, %v410
        %v672 = vmul.f32 %v411, %v411
        %v673 = vmul.f32 %v412, %v412
        %v674 = vmul.f32 %v413, %v413
        %v675 = vmul.f32 %v414, %v414
        %v676 = vmul.f32 %v415, %v415
        %v677 = vmul.f32 %v416, %v416
        %v678 = vmul.f32 %v417, %v417
        %v679 = vmul.f32 %v418, %v418
        %v680 = vmul.f32 %v419, %v419
        %v681 = vmul.f32 %v420, %v420
        %v682 = vmul.f32 %v421, %v421
        %v683 = vmul.f32 %v422, %v422
        %v684 = vmul.f32 %v423, %v423
        %v685 = vmul.f32 %v424, %v424
        %v686 = vmul.f32 %v425, %v425
        %v687 = vmul.f32 %v426, %v426
        %v688 = vmul.f32 %v427, %v427
        %v689 = vmul.f32 %v428, %v428
        %v690 = vmul.f32 %v429, %v429
        %v691 = vmul.f32 %v430, %v430
        %v692 = vmul.f32 %v431, %v431
        %v693 = vmul.f32 %v432, %v432
        %v694 = vmul.f32 %v433, %v433
        %v695 = vmul.f32 %v434, %v434
        %v696 = vmul.f32 %v435, %v435
        %v697 = vmul.f32 %v436, %v436
        %v698 = vmul.f32 %v437, %v437
        %v699 = vmul.f32 %v438, %v438
        %v700 = vmul.f32 %v439, %v439
        %v701 = vmul.f32 %v440, %v440
        %v702 = vmul.f32 %v441, %v441
        %v703 = vmul.f32 %v442, %v442
        %v704 = vmul.f32 %v443, %v443
        %v705 = vmul.f32 %v444, %v444
        %v706 = vmul.f32 %v445, %v445
        %v707 = vmul.f32 %v446, %v446
        %v708 = vmul.f32 %v447, %v447
        %v709 = vmul.f32 %v448, %v448
        %v710 = vmul.f32 %v449, %v449
        %v711 = vmul.f32 %v450, %v450
        %v712 = vmul.f32 %v451, %v451
        %v713 = vmul.f32 %v452, %v452
        %v714 = vmul.f32 %v453, %v453
        %v715 = vmul.f32 %v454, %v454
        %v716 = vmul.f32 %v455, %v455
        %v717 = vmul.f32 %v456, %v456
        %v718 = vmul.f32 %v457, %v457
        %v719 = vmul.f32 %v458, %v458
        %v720 = vmul.f32 %v459, %v459
        %v721 = vmul.f32 %v460, %v460
        %v722 = vmul.f32 %v461, %v461
        %v723 = vmul.f32 %v462, %v462
        %v724 = vmul.f32 %v463, %v463
        %v725 = vmul.f32 %v464, %v464
        %v726 = vmul.f32 %v465, %v465
        %v727 = vmul.f32 %v466, %v466
        %v728 = vmul.f32 %v467, %v467
        %v729 = vmul.f32 %v468, %v468
        %v730 = vmul.f32 %v469, %v469
        %v731 = vmul.f32 %v470, %v470
        %v732 = vmul.f32 %v471, %v471
        %v733 = vmul.f32 %v472, %v472
        %v734 = vmul.f32 %v473, %v473
        %v735 = vmul.f32 %v474, %v474
        %v736 = vmul.f32 %v475, %v475
        %v737 = vmul.f32 %v476, %v476
        %v738 = vmul.f32 %v477, %v477
        %v739 = vmul.f32 %v478, %v478
        %v740 = vmul.f32 %v479, %v479
        %v741 = vmul.f32 %v480, %v480
        %v742 = vmul.f32 %v481, %v481
        %v743 = vmul.f32 %v482, %v482
        %v744 = vmul.f32 %v483, %v483
        %v745 = vmul.f32 %v484, %v484
        %v746 = vmul.f32 %v485, %v485
        %v747 = vmul.f32 %v486, %v486
        %v748 = vmul.f32 %v487, %v487
        %v749 = vmul.f32 %v488, %v488
        %v750 = vmul.f32 %v489, %v489
        %v751 = vmul.f32 %v490, %v490
        %v752 = vmul.f32 %v491, %v491
        %v753 = vmul.f32 %v492, %v492
        %v754 = vmul.f32 %v493, %v493
        %v755 = vmul.f32 %v494, %v494
        %v756 = vmul.f32 %v495, %v495
        %v757 = vmul.f32 %v496, %v496
        %v758 = vmul.f32 %v497, %v497
        %v759 = vmul.f32 %v498, %v498
        %v760 = vadd.f32 %v632, %v633
        %v761 = vadd.f32 %v760, %v634
        %v762 = vadd.f32 %v761, %v635
        %v763 = vadd.f32 %v762, %v636
        %v764 = vadd.f32 %v763, %v637
        %v765 = vadd.f32 %v764, %v638
        %v766 = vadd.f32 %v765, %v639
        %v767 = vadd.f32 %v766, %v640
        %v768 = vadd.f32 %v767, %v641
        %v769 = vadd.f32 %v768, %v642
        %v770 = vadd.f32 %v769, %v643
        %v771 = vadd.f32 %v770, %v644
        %v772 = vadd.f32 %v771, %v645
        %v773 = vadd.f32 %v772, %v646
        %v774 = vadd.f32 %v773, %v647
        %v775 = vadd.f32 %v774, %v648
        %v776 = vadd.f32 %v775, %v649
        %v777 = vadd.f32 %v776, %v650
        %v778 = vadd.f32 %v777, %v651
        %v779 = vadd.f32 %v778, %v652
        %v780 = vadd.f32 %v779, %v653
        %v781 = vadd.f32 %v780, %v654
        %v782 = vadd.f32 %v781, %v655
        %v783 = vadd.f32 %v782, %v656
        %v784 = vadd.f32 %v783, %v657
        %v785 = vadd.f32 %v784, %v658
        %v786 = vadd.f32 %v785, %v659
        %v787 = vadd.f32 %v786, %v660
        %v788 = vadd.f32 %v787, %v661
        %v789 = vadd.f32 %v788, %v662
        %v790 = vadd.f32 %v789, %v663
        %v791 = vadd.f32 %v790, %v664
        %v792 = vadd.f32 %v791, %v665
        %v793 = vadd.f32 %v792, %v666
        %v794 = vadd.f32 %v793, %v667
        %v795 = vadd.f32 %v794, %v668
        %v796 = vadd.f32 %v795, %v669
        %v797 = vadd.f32 %v796, %v670
        %v798 = vadd.f32 %v797, %v671
        %v799 = vadd.f32 %v798, %v672
        %v800 = vadd.f32 %v799, %v673
        %v801 = vadd.f32 %v800, %v674
        %v802 = vadd.f32 %v801, %v675
        %v803 = vadd.f32 %v802, %v676
        %v804 = vadd.f32 %v803, %v677
        %v805 = vadd.f32 %v804, %v678
        %v806 = vadd.f32 %v805, %v679
        %v807 = vadd.f32 %v806, %v680
        %v808 = vadd.f32 %v807, %v681
        %v809 = vadd.f32 %v808, %v682
        %v810 = vadd.f32 %v809, %v683
        %v811 = vadd.f32 %v810, %v684
        %v812 = vadd.f32 %v811, %v685
        %v813 = vadd.f32 %v812, %v686
        %v814 = vadd.f32 %v813, %v687
        %v815 = vadd.f32 %v814, %v688
        %v816 = vadd.f32 %v815, %v689
        %v817 = vadd.f32 %v816, %v690
        %v818 = vadd.f32 %v817, %v691
        %v819 = vadd.f32 %v818, %v692
        %v820 = vadd.f32 %v819, %v693
        %v821 = vadd.f32 %v820, %v694
        %v822 = vadd.f32 %v821, %v695
        %v823 = vadd.f32 %v822, %v696
        %v824 = vadd.f32 %v823, %v697
        %v825 = vadd.f32 %v824, %v698
        %v826 = vadd.f32 %v825, %v699
        %v827 = vadd.f32 %v826, %v700
        %v828 = vadd.f32 %v827, %v701
        %v829 = vadd.f32 %v828, %v702
        %v830 = vadd.f32 %v829, %v703
        %v831 = vadd.f32 %v830, %v704
        %v832 = vadd.f32 %v831, %v705
        %v833 = vadd.f32 %v832, %v706
        %v834 = vadd.f32 %v833, %v707
        %v835 = vadd.f32 %v834, %v708
        %v836 = vadd.f32 %v835, %v709
        %v837 = vadd.f32 %v836, %v710
        %v838 = vadd.f32 %v837, %v711
        %v839 = vadd.f32 %v838, %v712
        %v840 = vadd.f32 %v839, %v713
        %v841 = vadd.f32 %v840, %v714
        %v842 = vadd.f32 %v841, %v715
        %v843 = vadd.f32 %v842, %v716
        %v844 = vadd.f32 %v843, %v717
        %v845 = vadd.f32 %v844, %v718
        %v846 = vadd.f32 %v845, %v719
        %v847 = vadd.f32 %v846, %v720
        %v848 = vadd.f32 %v847, %v721
        %v849 = vadd.f32 %v848, %v722
        %v850 = vadd.f32 %v849, %v723
        %v851 = vadd.f32 %v850, %v724
        %v852 = vadd.f32 %v851, %v725
        %v853 = vadd.f32 %v852, %v726
        %v854 = vadd.f32 %v853, %v727
        %v855 = vadd.f32 %v854, %v728
        %v856 = vadd.f32 %v855, %v729
        %v857 = vadd.f32 %v856, %v730
        %v858 = vadd.f32 %v857, %v731
        %v859 = vadd.f32 %v858, %v732
        %v860 = vadd.f32 %v859, %v733
        %v861 = vadd.f32 %v860, %v734
        %v862 = vadd.f32 %v861, %v735
        %v863 = vadd.f32 %v862, %v736
        %v864 = vadd.f32 %v863, %v737
        %v865 = vadd.f32 %v864, %v738
        %v866 = vadd.f32 %v865, %v739
        %v867 = vadd.f32 %v866, %v740
        %v868 = vadd.f32 %v867, %v741
        %v869 = vadd.f32 %v868, %v742
        %v870 = vadd.f32 %v869, %v743
        %v871 = vadd.f32 %v870, %v744
        %v872 = vadd.f32 %v871, %v745
        %v873 = vadd.f32 %v872, %v746
        %v874 = vadd.f32 %v873, %v747
        %v875 = vadd.f32 %v874, %v748
        %v876 = vadd.f32 %v875, %v749
        %v877 = vadd.f32 %v876, %v750
        %v878 = vadd.f32 %v877, %v751
        %v879 = vadd.f32 %v878, %v752
        %v880 = vadd.f32 %v879, %v753
        %v881 = vadd.f32 %v880, %v754
        %v882 = vadd.f32 %v881, %v755
        %v883 = vadd.f32 %v882, %v756
        %v884 = vadd.f32 %v883, %v757
        %v885 = vadd.f32 %v884, %v758
        %v886 = vadd.f32 %v885, %v759
        %v887 = vrot.slane %v886, 4
        %v888 = vadd.f32 %v886, %v887
        %v889 = vrot.slane %v888, 2
        %v890 = vadd.f32 %v888, %v889
        %v891 = vrot.slane %v890, 1
        %v892 = vadd.f32 %v890, %v891
        %v893 = vld [vmem:[%s1] sm:$0xff]
        %v894 = vld [vmem:[%s1 + $0x8] sm:$0xff]
        %v895 = vld [vmem:[%s1 + $0x10] sm:$0xff]
        %v896 = vld [vmem:[%s1 + $0x18] sm:$0xff]
        %v897 = vld [vmem:[%s1 + $0x20] sm:$0xff]
        %v898 = vld [vmem:[%s1 + $0x28] sm:$0xff]
        %v899 = vld [vmem:[%s1 + $0x30] sm:$0xff]
        %v900 = vld [vmem:[%s1 + $0x38] sm:$0xff]
        %v901 = vld [vmem:[%s1 + $0x40] sm:$0xff]
        %v902 = vld [vmem:[%s1 + $0x48] sm:$0xff]
        %v903 = vld [vmem:[%s1 + $0x50] sm:$0xff]
        %v904 = vld [vmem:[%s1 + $0x58] sm:$0xff]
        %v905 = vld [vmem:[%s1 + $0x60] sm:$0xff]
        %v906 = vld [vmem:[%s1 + $0x68] sm:$0xff]
        %v907 = vld [vmem:[%s1 + $0x70] sm:$0xff]
        %v908 = vld [vmem:[%s1 + $0x78] sm:$0xff]
        %909 = vmatprep.subr.mxu0 0.0
        %910 = vmatpush1.msra.mxu0 %v908
        %911 = vmatprep.subr.mxu0 0.0
        %912 = vmatpush1.msra.mxu0 %v907
        %913 = vmatprep.subr.mxu0 0.0
        %914 = vmatpush1.msra.mxu0 %v906
        %915 = vmatprep.subr.mxu0 0.0
        %916 = vmatpush1.msra.mxu0 %v905
        %917 = vmatprep.subr.mxu0 0.0
        %918 = vmatpush1.msra.mxu0 %v904
        %919 = vmatprep.subr.mxu0 0.0
        %920 = vmatpush1.msra.mxu0 %v903
        %921 = vmatprep.subr.mxu0 0.0
        %922 = vmatpush1.msra.mxu0 %v902
        %923 = vmatprep.subr.mxu0 0.0
        %924 = vmatpush1.msra.mxu0 %v901
        %925 = vmatprep.subr.mxu0 0.0
        %926 = vmatpush1.msra.mxu0 %v900
        %927 = vmatprep.subr.mxu0 0.0
        %928 = vmatpush1.msra.mxu0 %v899
        %929 = vmatprep.subr.mxu0 0.0
        %930 = vmatpush1.msra.mxu0 %v898
        %931 = vmatprep.subr.mxu0 0.0
        %932 = vmatpush1.msra.mxu0 %v897
        %933 = vmatprep.subr.mxu0 0.0
        %934 = vmatpush1.msra.mxu0 %v896
        %935 = vmatprep.subr.mxu0 0.0
        %936 = vmatpush1.msra.mxu0 %v895
        %937 = vmatprep.subr.mxu0 0.0
        %938 = vmatpush1.msra.mxu0 %v894
        %939 = vmatprep.subr.mxu0 0.0
        %940 = vmatpush1.msra.mxu0 %v893
        %941 = vmatprep.subr.mxu0 0.0
        %942 = vmatpush2.msra.mxu0 0.0
        %943 = vmatprep.subr.mxu0 0.0
        %944 = vmatpush2.msra.mxu0 0.0
        %945 = vmatprep.subr.mxu0 0.0
        %946 = vmatpush2.msra.mxu0 0.0
        %947 = vmatprep.subr.mxu0 0.0
        %948 = vmatpush2.msra.mxu0 0.0
        %949 = vmatprep.subr.mxu0 0.0
        %950 = vmatpush2.msra.mxu0 0.0
        %951 = vmatprep.subr.mxu0 0.0
        %952 = vmatpush2.msra.mxu0 0.0
        %953 = vmatprep.subr.mxu0 0.0
        %954 = vmatpush2.msra.mxu0 0.0
        %955 = vmatprep.subr.mxu0 0.0
        %956 = vmatpush2.msra.mxu0 0.0
        %957 = vmatprep.subr.mxu0 0.0
        %958 = vmatpush2.msra.mxu0 0.0
        %959 = vmatprep.subr.mxu0 0.0
        %960 = vmatpush2.msra.mxu0 0.0
        %961 = vmatprep.subr.mxu0 0.0
        %962 = vmatpush2.msra.mxu0 0.0
        %963 = vmatprep.subr.mxu0 0.0
        %964 = vmatpush2.msra.mxu0 0.0
        %965 = vmatprep.subr.mxu0 0.0
        %966 = vmatpush2.msra.mxu0 0.0
        %967 = vmatprep.subr.mxu0 0.0
        %968 = vmatpush2.msra.mxu0 0.0
        %969 = vmatprep.subr.mxu0 0.0
        %970 = vmatpush2.msra.mxu0 0.0
        %971 = vmatprep.subr.mxu0 0.0
        %972 = vmatpush2.msra.mxu0 0.0
        %973 = vmatprep.mubr.f32.mxu0 0.0
        %974 = vmatmul.mubr.f32.gmra.mxu0 %v631
        %v975 = vpop.f32.mrf.mxu0
        %v976 = vadd.f32 0.0, %v975
        %v977 = vpop.f32.mrf.mxu0
        %978 = vdwg.mxu0
        %979 = vmatprep.subr.mxu0 0.0
        %980 = vmatpush1.msra.mxu0 %v908
        %981 = vmatprep.subr.mxu0 0.0
        %982 = vmatpush1.msra.mxu0 %v907
        %983 = vmatprep.subr.mxu0 0.0
        %984 = vmatpush1.msra.mxu0 %v906
        %985 = vmatprep.subr.mxu0 0.0
        %986 = vmatpush1.msra.mxu0 %v905
        %987 = vmatprep.subr.mxu0 0.0
        %988 = vmatpush1.msra.mxu0 %v904
        %989 = vmatprep.subr.mxu0 0.0
        %990 = vmatpush1.msra.mxu0 %v903
        %991 = vmatprep.subr.mxu0 0.0
        %992 = vmatpush1.msra.mxu0 %v902
        %993 = vmatprep.subr.mxu0 0.0
        %994 = vmatpush1.msra.mxu0 %v901
        %995 = vmatprep.subr.mxu0 0.0
        %996 = vmatpush1.msra.mxu0 %v900
        %997 = vmatprep.subr.mxu0 0.0
        %998 = vmatpush1.msra.mxu0 %v899
        %999 = vmatprep.subr.mxu0 0.0
        %1000 = vmatpush1.msra.mxu0 %v898
        %1001 = vmatprep.subr.mxu0 0.0
        %1002 = vmatpush1.msra.mxu0 %v897
        %1003 = vmatprep.subr.mxu0 0.0
        %1004 = vmatpush1.msra.mxu0 %v896
        %1005 = vmatprep.subr.mxu0 0.0
        %1006 = vmatpush1.msra.mxu0 %v895
        %1007 = vmatprep.subr.mxu0 0.0
        %1008 = vmatpush1.msra.mxu0 %v894
        %1009 = vmatprep.subr.mxu0 0.0
        %1010 = vmatpush1.msra.mxu0 %v893
        %1011 = vmatprep.subr.mxu0 0.0
        %1012 = vmatpush2.msra.mxu0 0.0
        %1013 = vmatprep.subr.mxu0 0.0
        %1014 = vmatpush2.msra.mxu0 0.0
        %1015 = vmatprep.subr.mxu0 0.0
        %1016 = vmatpush2.msra.mxu0 0.0
        %1017 = vmatprep.subr.mxu0 0.0
        %1018 = vmatpush2.msra.mxu0 0.0
        %1019 = vmatprep.subr.mxu0 0.0
        %1020 = vmatpush2.msra.mxu0 0.0
        %1021 = vmatprep.subr.mxu0 0.0
        %1022 = vmatpush2.msra.mxu0 0.0
        %1023 = vmatprep.subr.mxu0 0.0
        %1024 = vmatpush2.msra.mxu0 0.0
        %1025 = vmatprep.subr.mxu0 0.0
        %1026 = vmatpush2.msra.mxu0 0.0
        %1027 = vmatprep.subr.mxu0 0.0
        %1028 = vmatpush2.msra.mxu0 0.0
        %1029 = vmatprep.subr.mxu0 0.0
        %1030 = vmatpush2.msra.mxu0 0.0
        %1031 = vmatprep.subr.mxu0 0.0
        %1032 = vmatpush2.msra.mxu0 0.0
        %1033 = vmatprep.subr.mxu0 0.0
        %1034 = vmatpush2.msra.mxu0 0.0
        %1035 = vmatprep.subr.mxu0 0.0
        %1036 = vmatpush2.msra.mxu0 0.0
        %1037 = vmatprep.subr.mxu0 0.0
        %1038 = vmatpush2.msra.mxu0 0.0
        %1039 = vmatprep.subr.mxu0 0.0
        %1040 = vmatpush2.msra.mxu0 0.0
        %1041 = vmatprep.subr.mxu0 0.0
        %1042 = vmatpush2.msra.mxu0 0.0
        %1043 = vmatprep.mubr.f32.mxu0 0.0
        %1044 = vmatmul.mubr.f32.gmra.mxu0 %v892
        %v1045 = vpop.f32.mrf.mxu0
        %v1046 = vadd.f32 0.0, %v1045
        %v1047 = vpop.f32.mrf.mxu0
        %1048 = vdwg.mxu0
        %v1049 = vmul.f32 %v976, 0.00024414063
        %v1050 = vmul.f32 %v1046, 0.00024414063
        %v1051 = vmul.f32 %v1049, %v1049
        %v1052 = vsub.f32 %v1050, %v1051
        %v1053 = vmax.f32 %v1052, 0.0
        %v1054 = vadd.f32 %v1053, 1e-05
        %v1055 = vrsqrt.pop %v1054
        %v1056 = vld [vmem:[%s2] sm:$0xff]
        %v1057 = vld [vmem:[%s2 + $0x8] sm:$0xff]
        %v1058 = vld [vmem:[%s2 + $0x10] sm:$0xff]
        %v1059 = vld [vmem:[%s2 + $0x18] sm:$0xff]
        %vm1060 = vcmask 261120
        %v1062 = vsel %vm1060, %v1049, 0
        %1064 = vmatprep.subr.mxu0 0.0
        %1065 = vmatpush1.msra.mxu0 0.0
        %1066 = vmatprep.subr.mxu0 0.0
        %1067 = vmatpush1.msra.mxu0 0.0
        %1068 = vmatprep.subr.mxu0 0.0
        %1069 = vmatpush1.msra.mxu0 0.0
        %1070 = vmatprep.subr.mxu0 0.0
        %1071 = vmatpush1.msra.mxu0 0.0
        %1072 = vmatprep.subr.mxu0 0.0
        %1073 = vmatpush1.msra.mxu0 0.0
        %1074 = vmatprep.subr.mxu0 0.0
        %1075 = vmatpush1.msra.mxu0 0.0
        %1076 = vmatprep.subr.mxu0 0.0
        %1077 = vmatpush1.msra.mxu0 0.0
        %1078 = vmatprep.subr.mxu0 0.0
        %1079 = vmatpush1.msra.mxu0 0.0
        %1080 = vmatprep.subr.mxu0 0.0
        %1081 = vmatpush1.msra.mxu0 0.0
        %1082 = vmatprep.subr.mxu0 0.0
        %1083 = vmatpush1.msra.mxu0 0.0
        %1084 = vmatprep.subr.mxu0 0.0
        %1085 = vmatpush1.msra.mxu0 0.0
        %1086 = vmatprep.subr.mxu0 0.0
        %1087 = vmatpush1.msra.mxu0 0.0
        %1088 = vmatprep.subr.mxu0 0.0
        %1089 = vmatpush1.msra.mxu0 %v1059
        %1090 = vmatprep.subr.mxu0 0.0
        %1091 = vmatpush1.msra.mxu0 %v1058
        %1092 = vmatprep.subr.mxu0 0.0
        %1093 = vmatpush1.msra.mxu0 %v1057
        %1094 = vmatprep.subr.mxu0 0.0
        %1095 = vmatpush1.msra.mxu0 %v1056
        %1096 = vmatprep.subr.mxu0 0.0
        %1097 = vmatpush2.msra.mxu0 0.0
        %1098 = vmatprep.subr.mxu0 0.0
        %1099 = vmatpush2.msra.mxu0 0.0
        %1100 = vmatprep.subr.mxu0 0.0
        %1101 = vmatpush2.msra.mxu0 0.0
        %1102 = vmatprep.subr.mxu0 0.0
        %1103 = vmatpush2.msra.mxu0 0.0
        %1104 = vmatprep.subr.mxu0 0.0
        %1105 = vmatpush2.msra.mxu0 0.0
        %1106 = vmatprep.subr.mxu0 0.0
        %1107 = vmatpush2.msra.mxu0 0.0
        %1108 = vmatprep.subr.mxu0 0.0
        %1109 = vmatpush2.msra.mxu0 0.0
        %1110 = vmatprep.subr.mxu0 0.0
        %1111 = vmatpush2.msra.mxu0 0.0
        %1112 = vmatprep.subr.mxu0 0.0
        %1113 = vmatpush2.msra.mxu0 0.0
        %1114 = vmatprep.subr.mxu0 0.0
        %1115 = vmatpush2.msra.mxu0 0.0
        %1116 = vmatprep.subr.mxu0 0.0
        %1117 = vmatpush2.msra.mxu0 0.0
        %1118 = vmatprep.subr.mxu0 0.0
        %1119 = vmatpush2.msra.mxu0 0.0
        %1120 = vmatprep.subr.mxu0 0.0
        %1121 = vmatpush2.msra.mxu0 0.0
        %1122 = vmatprep.subr.mxu0 0.0
        %1123 = vmatpush2.msra.mxu0 0.0
        %1124 = vmatprep.subr.mxu0 0.0
        %1125 = vmatpush2.msra.mxu0 0.0
        %1126 = vmatprep.subr.mxu0 0.0
        %1127 = vmatpush2.msra.mxu0 0.0
        %1128 = vmatprep.mubr.f32.mxu0 0.0
        %1129 = vmatmul.mubr.f32.gmra.mxu0 %v1062
        %v1130 = vpop.f32.mrf.mxu0
        %v1131 = vadd.f32 0.0, %v1130
        %v1132 = vpop.f32.mrf.mxu0
        %1133 = vdwg.mxu0
        %v1135 = vsel %vm1060, %v1055, 0
        %1137 = vmatprep.subr.mxu0 0.0
        %1138 = vmatpush1.msra.mxu0 0.0
        %1139 = vmatprep.subr.mxu0 0.0
        %1140 = vmatpush1.msra.mxu0 0.0
        %1141 = vmatprep.subr.mxu0 0.0
        %1142 = vmatpush1.msra.mxu0 0.0
        %1143 = vmatprep.subr.mxu0 0.0
        %1144 = vmatpush1.msra.mxu0 0.0
        %1145 = vmatprep.subr.mxu0 0.0
        %1146 = vmatpush1.msra.mxu0 0.0
        %1147 = vmatprep.subr.mxu0 0.0
        %1148 = vmatpush1.msra.mxu0 0.0
        %1149 = vmatprep.subr.mxu0 0.0
        %1150 = vmatpush1.msra.mxu0 0.0
        %1151 = vmatprep.subr.mxu0 0.0
        %1152 = vmatpush1.msra.mxu0 0.0
        %1153 = vmatprep.subr.mxu0 0.0
        %1154 = vmatpush1.msra.mxu0 0.0
        %1155 = vmatprep.subr.mxu0 0.0
        %1156 = vmatpush1.msra.mxu0 0.0
        %1157 = vmatprep.subr.mxu0 0.0
        %1158 = vmatpush1.msra.mxu0 0.0
        %1159 = vmatprep.subr.mxu0 0.0
        %1160 = vmatpush1.msra.mxu0 0.0
        %1161 = vmatprep.subr.mxu0 0.0
        %1162 = vmatpush1.msra.mxu0 %v1059
        %1163 = vmatprep.subr.mxu0 0.0
        %1164 = vmatpush1.msra.mxu0 %v1058
        %1165 = vmatprep.subr.mxu0 0.0
        %1166 = vmatpush1.msra.mxu0 %v1057
        %1167 = vmatprep.subr.mxu0 0.0
        %1168 = vmatpush1.msra.mxu0 %v1056
        %1169 = vmatprep.subr.mxu0 0.0
        %1170 = vmatpush2.msra.mxu0 0.0
        %1171 = vmatprep.subr.mxu0 0.0
        %1172 = vmatpush2.msra.mxu0 0.0
        %1173 = vmatprep.subr.mxu0 0.0
        %1174 = vmatpush2.msra.mxu0 0.0
        %1175 = vmatprep.subr.mxu0 0.0
        %1176 = vmatpush2.msra.mxu0 0.0
        %1177 = vmatprep.subr.mxu0 0.0
        %1178 = vmatpush2.msra.mxu0 0.0
        %1179 = vmatprep.subr.mxu0 0.0
        %1180 = vmatpush2.msra.mxu0 0.0
        %1181 = vmatprep.subr.mxu0 0.0
        %1182 = vmatpush2.msra.mxu0 0.0
        %1183 = vmatprep.subr.mxu0 0.0
        %1184 = vmatpush2.msra.mxu0 0.0
        %1185 = vmatprep.subr.mxu0 0.0
        %1186 = vmatpush2.msra.mxu0 0.0
        %1187 = vmatprep.subr.mxu0 0.0
        %1188 = vmatpush2.msra.mxu0 0.0
        %1189 = vmatprep.subr.mxu0 0.0
        %1190 = vmatpush2.msra.mxu0 0.0
        %1191 = vmatprep.subr.mxu0 0.0
        %1192 = vmatpush2.msra.mxu0 0.0
        %1193 = vmatprep.subr.mxu0 0.0
        %1194 = vmatpush2.msra.mxu0 0.0
        %1195 = vmatprep.subr.mxu0 0.0
        %1196 = vmatpush2.msra.mxu0 0.0
        %1197 = vmatprep.subr.mxu0 0.0
        %1198 = vmatpush2.msra.mxu0 0.0
        %1199 = vmatprep.subr.mxu0 0.0
        %1200 = vmatpush2.msra.mxu0 0.0
        %1201 = vmatprep.mubr.f32.mxu0 0.0
        %1202 = vmatmul.mubr.f32.gmra.mxu0 %v1135
        %v1203 = vpop.f32.mrf.mxu0
        %v1204 = vadd.f32 0.0, %v1203
        %v1205 = vpop.f32.mrf.mxu0
        %1206 = vdwg.mxu0
        %v1207 = vlaneseq
        %v1208 = vshrl.u32 %v1207, 7
        %v1209 = vsub.s32 0, %v1208
        %v1210 = vrot.slane %v1131, %v1209
        %v1211 = vsub.f32 %v371, %v1210
        %v1212 = vsub.f32 %v372, %v1210
        %v1213 = vsub.f32 %v373, %v1210
        %v1214 = vsub.f32 %v374, %v1210
        %v1215 = vsub.f32 %v375, %v1210
        %v1216 = vsub.f32 %v376, %v1210
        %v1217 = vsub.f32 %v377, %v1210
        %v1218 = vsub.f32 %v378, %v1210
        %v1219 = vsub.f32 %v379, %v1210
        %v1220 = vsub.f32 %v380, %v1210
        %v1221 = vsub.f32 %v381, %v1210
        %v1222 = vsub.f32 %v382, %v1210
        %v1223 = vsub.f32 %v383, %v1210
        %v1224 = vsub.f32 %v384, %v1210
        %v1225 = vsub.f32 %v385, %v1210
        %v1226 = vsub.f32 %v386, %v1210
        %v1227 = vsub.f32 %v387, %v1210
        %v1228 = vsub.f32 %v388, %v1210
        %v1229 = vsub.f32 %v389, %v1210
        %v1230 = vsub.f32 %v390, %v1210
        %v1231 = vsub.f32 %v391, %v1210
        %v1232 = vsub.f32 %v392, %v1210
        %v1233 = vsub.f32 %v393, %v1210
        %v1234 = vsub.f32 %v394, %v1210
        %v1235 = vsub.f32 %v395, %v1210
        %v1236 = vsub.f32 %v396, %v1210
        %v1237 = vsub.f32 %v397, %v1210
        %v1238 = vsub.f32 %v398, %v1210
        %v1239 = vsub.f32 %v399, %v1210
        %v1240 = vsub.f32 %v400, %v1210
        %v1241 = vsub.f32 %v401, %v1210
        %v1242 = vsub.f32 %v402, %v1210
        %v1243 = vsub.f32 %v403, %v1210
        %v1244 = vsub.f32 %v404, %v1210
        %v1245 = vsub.f32 %v405, %v1210
        %v1246 = vsub.f32 %v406, %v1210
        %v1247 = vsub.f32 %v407, %v1210
        %v1248 = vsub.f32 %v408, %v1210
        %v1249 = vsub.f32 %v409, %v1210
        %v1250 = vsub.f32 %v410, %v1210
        %v1251 = vsub.f32 %v411, %v1210
        %v1252 = vsub.f32 %v412, %v1210
        %v1253 = vsub.f32 %v413, %v1210
        %v1254 = vsub.f32 %v414, %v1210
        %v1255 = vsub.f32 %v415, %v1210
        %v1256 = vsub.f32 %v416, %v1210
        %v1257 = vsub.f32 %v417, %v1210
        %v1258 = vsub.f32 %v418, %v1210
        %v1259 = vsub.f32 %v419, %v1210
        %v1260 = vsub.f32 %v420, %v1210
        %v1261 = vsub.f32 %v421, %v1210
        %v1262 = vsub.f32 %v422, %v1210
        %v1263 = vsub.f32 %v423, %v1210
        %v1264 = vsub.f32 %v424, %v1210
        %v1265 = vsub.f32 %v425, %v1210
        %v1266 = vsub.f32 %v426, %v1210
        %v1267 = vsub.f32 %v427, %v1210
        %v1268 = vsub.f32 %v428, %v1210
        %v1269 = vsub.f32 %v429, %v1210
        %v1270 = vsub.f32 %v430, %v1210
        %v1271 = vsub.f32 %v431, %v1210
        %v1272 = vsub.f32 %v432, %v1210
        %v1273 = vsub.f32 %v433, %v1210
        %v1274 = vsub.f32 %v434, %v1210
        %v1275 = vsub.f32 %v435, %v1210
        %v1276 = vsub.f32 %v436, %v1210
        %v1277 = vsub.f32 %v437, %v1210
        %v1278 = vsub.f32 %v438, %v1210
        %v1279 = vsub.f32 %v439, %v1210
        %v1280 = vsub.f32 %v440, %v1210
        %v1281 = vsub.f32 %v441, %v1210
        %v1282 = vsub.f32 %v442, %v1210
        %v1283 = vsub.f32 %v443, %v1210
        %v1284 = vsub.f32 %v444, %v1210
        %v1285 = vsub.f32 %v445, %v1210
        %v1286 = vsub.f32 %v446, %v1210
        %v1287 = vsub.f32 %v447, %v1210
        %v1288 = vsub.f32 %v448, %v1210
        %v1289 = vsub.f32 %v449, %v1210
        %v1290 = vsub.f32 %v450, %v1210
        %v1291 = vsub.f32 %v451, %v1210
        %v1292 = vsub.f32 %v452, %v1210
        %v1293 = vsub.f32 %v453, %v1210
        %v1294 = vsub.f32 %v454, %v1210
        %v1295 = vsub.f32 %v455, %v1210
        %v1296 = vsub.f32 %v456, %v1210
        %v1297 = vsub.f32 %v457, %v1210
        %v1298 = vsub.f32 %v458, %v1210
        %v1299 = vsub.f32 %v459, %v1210
        %v1300 = vsub.f32 %v460, %v1210
        %v1301 = vsub.f32 %v461, %v1210
        %v1302 = vsub.f32 %v462, %v1210
        %v1303 = vsub.f32 %v463, %v1210
        %v1304 = vsub.f32 %v464, %v1210
        %v1305 = vsub.f32 %v465, %v1210
        %v1306 = vsub.f32 %v466, %v1210
        %v1307 = vsub.f32 %v467, %v1210
        %v1308 = vsub.f32 %v468, %v1210
        %v1309 = vsub.f32 %v469, %v1210
        %v1310 = vsub.f32 %v470, %v1210
        %v1311 = vsub.f32 %v471, %v1210
        %v1312 = vsub.f32 %v472, %v1210
        %v1313 = vsub.f32 %v473, %v1210
        %v1314 = vsub.f32 %v474, %v1210
        %v1315 = vsub.f32 %v475, %v1210
        %v1316 = vsub.f32 %v476, %v1210
        %v1317 = vsub.f32 %v477, %v1210
        %v1318 = vsub.f32 %v478, %v1210
        %v1319 = vsub.f32 %v479, %v1210
        %v1320 = vsub.f32 %v480, %v1210
        %v1321 = vsub.f32 %v481, %v1210
        %v1322 = vsub.f32 %v482, %v1210
        %v1323 = vsub.f32 %v483, %v1210
        %v1324 = vsub.f32 %v484, %v1210
        %v1325 = vsub.f32 %v485, %v1210
        %v1326 = vsub.f32 %v486, %v1210
        %v1327 = vsub.f32 %v487, %v1210
        %v1328 = vsub.f32 %v488, %v1210
        %v1329 = vsub.f32 %v489, %v1210
        %v1330 = vsub.f32 %v490, %v1210
        %v1331 = vsub.f32 %v491, %v1210
        %v1332 = vsub.f32 %v492, %v1210
        %v1333 = vsub.f32 %v493, %v1210
        %v1334 = vsub.f32 %v494, %v1210
        %v1335 = vsub.f32 %v495, %v1210
        %v1336 = vsub.f32 %v496, %v1210
        %v1337 = vsub.f32 %v497, %v1210
        %v1338 = vsub.f32 %v498, %v1210
        %v1339 = vlaneseq
        %v1340 = vshrl.u32 %v1339, 7
        %v1341 = vsub.s32 0, %v1340
        %v1342 = vrot.slane %v1204, %v1341
        %v1343 = vmul.f32 %v1211, %v1342
        %v1344 = vmul.f32 %v1212, %v1342
        %v1345 = vmul.f32 %v1213, %v1342
        %v1346 = vmul.f32 %v1214, %v1342
        %v1347 = vmul.f32 %v1215, %v1342
        %v1348 = vmul.f32 %v1216, %v1342
        %v1349 = vmul.f32 %v1217, %v1342
        %v1350 = vmul.f32 %v1218, %v1342
        %v1351 = vmul.f32 %v1219, %v1342
        %v1352 = vmul.f32 %v1220, %v1342
        %v1353 = vmul.f32 %v1221, %v1342
        %v1354 = vmul.f32 %v1222, %v1342
        %v1355 = vmul.f32 %v1223, %v1342
        %v1356 = vmul.f32 %v1224, %v1342
        %v1357 = vmul.f32 %v1225, %v1342
        %v1358 = vmul.f32 %v1226, %v1342
        %v1359 = vmul.f32 %v1227, %v1342
        %v1360 = vmul.f32 %v1228, %v1342
        %v1361 = vmul.f32 %v1229, %v1342
        %v1362 = vmul.f32 %v1230, %v1342
        %v1363 = vmul.f32 %v1231, %v1342
        %v1364 = vmul.f32 %v1232, %v1342
        %v1365 = vmul.f32 %v1233, %v1342
        %v1366 = vmul.f32 %v1234, %v1342
        %v1367 = vmul.f32 %v1235, %v1342
        %v1368 = vmul.f32 %v1236, %v1342
        %v1369 = vmul.f32 %v1237, %v1342
        %v1370 = vmul.f32 %v1238, %v1342
        %v1371 = vmul.f32 %v1239, %v1342
        %v1372 = vmul.f32 %v1240, %v1342
        %v1373 = vmul.f32 %v1241, %v1342
        %v1374 = vmul.f32 %v1242, %v1342
        %v1375 = vmul.f32 %v1243, %v1342
        %v1376 = vmul.f32 %v1244, %v1342
        %v1377 = vmul.f32 %v1245, %v1342
        %v1378 = vmul.f32 %v1246, %v1342
        %v1379 = vmul.f32 %v1247, %v1342
        %v1380 = vmul.f32 %v1248, %v1342
        %v1381 = vmul.f32 %v1249, %v1342
        %v1382 = vmul.f32 %v1250, %v1342
        %v1383 = vmul.f32 %v1251, %v1342
        %v1384 = vmul.f32 %v1252, %v1342
        %v1385 = vmul.f32 %v1253, %v1342
        %v1386 = vmul.f32 %v1254, %v1342
        %v1387 = vmul.f32 %v1255, %v1342
        %v1388 = vmul.f32 %v1256, %v1342
        %v1389 = vmul.f32 %v1257, %v1342
        %v1390 = vmul.f32 %v1258, %v1342
        %v1391 = vmul.f32 %v1259, %v1342
        %v1392 = vmul.f32 %v1260, %v1342
        %v1393 = vmul.f32 %v1261, %v1342
        %v1394 = vmul.f32 %v1262, %v1342
        %v1395 = vmul.f32 %v1263, %v1342
        %v1396 = vmul.f32 %v1264, %v1342
        %v1397 = vmul.f32 %v1265, %v1342
        %v1398 = vmul.f32 %v1266, %v1342
        %v1399 = vmul.f32 %v1267, %v1342
        %v1400 = vmul.f32 %v1268, %v1342
        %v1401 = vmul.f32 %v1269, %v1342
        %v1402 = vmul.f32 %v1270, %v1342
        %v1403 = vmul.f32 %v1271, %v1342
        %v1404 = vmul.f32 %v1272, %v1342
        %v1405 = vmul.f32 %v1273, %v1342
        %v1406 = vmul.f32 %v1274, %v1342
        %v1407 = vmul.f32 %v1275, %v1342
        %v1408 = vmul.f32 %v1276, %v1342
        %v1409 = vmul.f32 %v1277, %v1342
        %v1410 = vmul.f32 %v1278, %v1342
        %v1411 = vmul.f32 %v1279, %v1342
        %v1412 = vmul.f32 %v1280, %v1342
        %v1413 = vmul.f32 %v1281, %v1342
        %v1414 = vmul.f32 %v1282, %v1342
        %v1415 = vmul.f32 %v1283, %v1342
        %v1416 = vmul.f32 %v1284, %v1342
        %v1417 = vmul.f32 %v1285, %v1342
        %v1418 = vmul.f32 %v1286, %v1342
        %v1419 = vmul.f32 %v1287, %v1342
        %v1420 = vmul.f32 %v1288, %v1342
        %v1421 = vmul.f32 %v1289, %v1342
        %v1422 = vmul.f32 %v1290, %v1342
        %v1423 = vmul.f32 %v1291, %v1342
        %v1424 = vmul.f32 %v1292, %v1342
        %v1425 = vmul.f32 %v1293, %v1342
        %v1426 = vmul.f32 %v1294, %v1342
        %v1427 = vmul.f32 %v1295, %v1342
        %v1428 = vmul.f32 %v1296, %v1342
        %v1429 = vmul.f32 %v1297, %v1342
        %v1430 = vmul.f32 %v1298, %v1342
        %v1431 = vmul.f32 %v1299, %v1342
        %v1432 = vmul.f32 %v1300, %v1342
        %v1433 = vmul.f32 %v1301, %v1342
        %v1434 = vmul.f32 %v1302, %v1342
        %v1435 = vmul.f32 %v1303, %v1342
        %v1436 = vmul.f32 %v1304, %v1342
        %v1437 = vmul.f32 %v1305, %v1342
        %v1438 = vmul.f32 %v1306, %v1342
        %v1439 = vmul.f32 %v1307, %v1342
        %v1440 = vmul.f32 %v1308, %v1342
        %v1441 = vmul.f32 %v1309, %v1342
        %v1442 = vmul.f32 %v1310, %v1342
        %v1443 = vmul.f32 %v1311, %v1342
        %v1444 = vmul.f32 %v1312, %v1342
        %v1445 = vmul.f32 %v1313, %v1342
        %v1446 = vmul.f32 %v1314, %v1342
        %v1447 = vmul.f32 %v1315, %v1342
        %v1448 = vmul.f32 %v1316, %v1342
        %v1449 = vmul.f32 %v1317, %v1342
        %v1450 = vmul.f32 %v1318, %v1342
        %v1451 = vmul.f32 %v1319, %v1342
        %v1452 = vmul.f32 %v1320, %v1342
        %v1453 = vmul.f32 %v1321, %v1342
        %v1454 = vmul.f32 %v1322, %v1342
        %v1455 = vmul.f32 %v1323, %v1342
        %v1456 = vmul.f32 %v1324, %v1342
        %v1457 = vmul.f32 %v1325, %v1342
        %v1458 = vmul.f32 %v1326, %v1342
        %v1459 = vmul.f32 %v1327, %v1342
        %v1460 = vmul.f32 %v1328, %v1342
        %v1461 = vmul.f32 %v1329, %v1342
        %v1462 = vmul.f32 %v1330, %v1342
        %v1463 = vmul.f32 %v1331, %v1342
        %v1464 = vmul.f32 %v1332, %v1342
        %v1465 = vmul.f32 %v1333, %v1342
        %v1466 = vmul.f32 %v1334, %v1342
        %v1467 = vmul.f32 %v1335, %v1342
        %v1468 = vmul.f32 %v1336, %v1342
        %v1469 = vmul.f32 %v1337, %v1342
        %v1470 = vmul.f32 %v1338, %v1342
        %v1471 = vld [vmem:[%s3] sm:$0x1]
        %v1473 = vlaneseq
        %v1474 = vshrl.u32 %v1473, 7
        %v1475 = vsub.s32 0, %v1474
        %v1476 = vrot.slane %v1471, %v1475
        %v1478 = vmul.f32 %v1343, %v1476
        %v1479 = vmul.f32 %v1344, %v1476
        %v1480 = vmul.f32 %v1345, %v1476
        %v1481 = vmul.f32 %v1346, %v1476
        %v1482 = vmul.f32 %v1347, %v1476
        %v1483 = vmul.f32 %v1348, %v1476
        %v1484 = vmul.f32 %v1349, %v1476
        %v1485 = vmul.f32 %v1350, %v1476
        %v1486 = vmul.f32 %v1351, %v1476
        %v1487 = vmul.f32 %v1352, %v1476
        %v1488 = vmul.f32 %v1353, %v1476
        %v1489 = vmul.f32 %v1354, %v1476
        %v1490 = vmul.f32 %v1355, %v1476
        %v1491 = vmul.f32 %v1356, %v1476
        %v1492 = vmul.f32 %v1357, %v1476
        %v1493 = vmul.f32 %v1358, %v1476
        %v1494 = vmul.f32 %v1359, %v1476
        %v1495 = vmul.f32 %v1360, %v1476
        %v1496 = vmul.f32 %v1361, %v1476
        %v1497 = vmul.f32 %v1362, %v1476
        %v1498 = vmul.f32 %v1363, %v1476
        %v1499 = vmul.f32 %v1364, %v1476
        %v1500 = vmul.f32 %v1365, %v1476
        %v1501 = vmul.f32 %v1366, %v1476
        %v1502 = vmul.f32 %v1367, %v1476
        %v1503 = vmul.f32 %v1368, %v1476
        %v1504 = vmul.f32 %v1369, %v1476
        %v1505 = vmul.f32 %v1370, %v1476
        %v1506 = vmul.f32 %v1371, %v1476
        %v1507 = vmul.f32 %v1372, %v1476
        %v1508 = vmul.f32 %v1373, %v1476
        %v1509 = vmul.f32 %v1374, %v1476
        %v1510 = vmul.f32 %v1375, %v1476
        %v1511 = vmul.f32 %v1376, %v1476
        %v1512 = vmul.f32 %v1377, %v1476
        %v1513 = vmul.f32 %v1378, %v1476
        %v1514 = vmul.f32 %v1379, %v1476
        %v1515 = vmul.f32 %v1380, %v1476
        %v1516 = vmul.f32 %v1381, %v1476
        %v1517 = vmul.f32 %v1382, %v1476
        %v1518 = vmul.f32 %v1383, %v1476
        %v1519 = vmul.f32 %v1384, %v1476
        %v1520 = vmul.f32 %v1385, %v1476
        %v1521 = vmul.f32 %v1386, %v1476
        %v1522 = vmul.f32 %v1387, %v1476
        %v1523 = vmul.f32 %v1388, %v1476
        %v1524 = vmul.f32 %v1389, %v1476
        %v1525 = vmul.f32 %v1390, %v1476
        %v1526 = vmul.f32 %v1391, %v1476
        %v1527 = vmul.f32 %v1392, %v1476
        %v1528 = vmul.f32 %v1393, %v1476
        %v1529 = vmul.f32 %v1394, %v1476
        %v1530 = vmul.f32 %v1395, %v1476
        %v1531 = vmul.f32 %v1396, %v1476
        %v1532 = vmul.f32 %v1397, %v1476
        %v1533 = vmul.f32 %v1398, %v1476
        %v1534 = vmul.f32 %v1399, %v1476
        %v1535 = vmul.f32 %v1400, %v1476
        %v1536 = vmul.f32 %v1401, %v1476
        %v1537 = vmul.f32 %v1402, %v1476
        %v1538 = vmul.f32 %v1403, %v1476
        %v1539 = vmul.f32 %v1404, %v1476
        %v1540 = vmul.f32 %v1405, %v1476
        %v1541 = vmul.f32 %v1406, %v1476
        %v1542 = vmul.f32 %v1407, %v1476
        %v1543 = vmul.f32 %v1408, %v1476
        %v1544 = vmul.f32 %v1409, %v1476
        %v1545 = vmul.f32 %v1410, %v1476
        %v1546 = vmul.f32 %v1411, %v1476
        %v1547 = vmul.f32 %v1412, %v1476
        %v1548 = vmul.f32 %v1413, %v1476
        %v1549 = vmul.f32 %v1414, %v1476
        %v1550 = vmul.f32 %v1415, %v1476
        %v1551 = vmul.f32 %v1416, %v1476
        %v1552 = vmul.f32 %v1417, %v1476
        %v1553 = vmul.f32 %v1418, %v1476
        %v1554 = vmul.f32 %v1419, %v1476
        %v1555 = vmul.f32 %v1420, %v1476
        %v1556 = vmul.f32 %v1421, %v1476
        %v1557 = vmul.f32 %v1422, %v1476
        %v1558 = vmul.f32 %v1423, %v1476
        %v1559 = vmul.f32 %v1424, %v1476
        %v1560 = vmul.f32 %v1425, %v1476
        %v1561 = vmul.f32 %v1426, %v1476
        %v1562 = vmul.f32 %v1427, %v1476
        %v1563 = vmul.f32 %v1428, %v1476
        %v1564 = vmul.f32 %v1429, %v1476
        %v1565 = vmul.f32 %v1430, %v1476
        %v1566 = vmul.f32 %v1431, %v1476
        %v1567 = vmul.f32 %v1432, %v1476
        %v1568 = vmul.f32 %v1433, %v1476
        %v1569 = vmul.f32 %v1434, %v1476
        %v1570 = vmul.f32 %v1435, %v1476
        %v1571 = vmul.f32 %v1436, %v1476
        %v1572 = vmul.f32 %v1437, %v1476
        %v1573 = vmul.f32 %v1438, %v1476
        %v1574 = vmul.f32 %v1439, %v1476
        %v1575 = vmul.f32 %v1440, %v1476
        %v1576 = vmul.f32 %v1441, %v1476
        %v1577 = vmul.f32 %v1442, %v1476
        %v1578 = vmul.f32 %v1443, %v1476
        %v1579 = vmul.f32 %v1444, %v1476
        %v1580 = vmul.f32 %v1445, %v1476
        %v1581 = vmul.f32 %v1446, %v1476
        %v1582 = vmul.f32 %v1447, %v1476
        %v1583 = vmul.f32 %v1448, %v1476
        %v1584 = vmul.f32 %v1449, %v1476
        %v1585 = vmul.f32 %v1450, %v1476
        %v1586 = vmul.f32 %v1451, %v1476
        %v1587 = vmul.f32 %v1452, %v1476
        %v1588 = vmul.f32 %v1453, %v1476
        %v1589 = vmul.f32 %v1454, %v1476
        %v1590 = vmul.f32 %v1455, %v1476
        %v1591 = vmul.f32 %v1456, %v1476
        %v1592 = vmul.f32 %v1457, %v1476
        %v1593 = vmul.f32 %v1458, %v1476
        %v1594 = vmul.f32 %v1459, %v1476
        %v1595 = vmul.f32 %v1460, %v1476
        %v1596 = vmul.f32 %v1461, %v1476
        %v1597 = vmul.f32 %v1462, %v1476
        %v1598 = vmul.f32 %v1463, %v1476
        %v1599 = vmul.f32 %v1464, %v1476
        %v1600 = vmul.f32 %v1465, %v1476
        %v1601 = vmul.f32 %v1466, %v1476
        %v1602 = vmul.f32 %v1467, %v1476
        %v1603 = vmul.f32 %v1468, %v1476
        %v1604 = vmul.f32 %v1469, %v1476
        %v1605 = vmul.f32 %v1470, %v1476
        %v1606 = vld [vmem:[%s4] sm:$0x1]
        %v1608 = vlaneseq
        %v1609 = vshrl.u32 %v1608, 7
        %v1610 = vsub.s32 0, %v1609
        %v1611 = vrot.slane %v1606, %v1610
        %v1613 = vadd.f32 %v1478, %v1611
        %v1614 = vadd.f32 %v1479, %v1611
        %v1615 = vadd.f32 %v1480, %v1611
        %v1616 = vadd.f32 %v1481, %v1611
        %v1617 = vadd.f32 %v1482, %v1611
        %v1618 = vadd.f32 %v1483, %v1611
        %v1619 = vadd.f32 %v1484, %v1611
        %v1620 = vadd.f32 %v1485, %v1611
        %v1621 = vadd.f32 %v1486, %v1611
        %v1622 = vadd.f32 %v1487, %v1611
        %v1623 = vadd.f32 %v1488, %v1611
        %v1624 = vadd.f32 %v1489, %v1611
        %v1625 = vadd.f32 %v1490, %v1611
        %v1626 = vadd.f32 %v1491, %v1611
        %v1627 = vadd.f32 %v1492, %v1611
        %v1628 = vadd.f32 %v1493, %v1611
        %v1629 = vadd.f32 %v1494, %v1611
        %v1630 = vadd.f32 %v1495, %v1611
        %v1631 = vadd.f32 %v1496, %v1611
        %v1632 = vadd.f32 %v1497, %v1611
        %v1633 = vadd.f32 %v1498, %v1611
        %v1634 = vadd.f32 %v1499, %v1611
        %v1635 = vadd.f32 %v1500, %v1611
        %v1636 = vadd.f32 %v1501, %v1611
        %v1637 = vadd.f32 %v1502, %v1611
        %v1638 = vadd.f32 %v1503, %v1611
        %v1639 = vadd.f32 %v1504, %v1611
        %v1640 = vadd.f32 %v1505, %v1611
        %v1641 = vadd.f32 %v1506, %v1611
        %v1642 = vadd.f32 %v1507, %v1611
        %v1643 = vadd.f32 %v1508, %v1611
        %v1644 = vadd.f32 %v1509, %v1611
        %v1645 = vadd.f32 %v1510, %v1611
        %v1646 = vadd.f32 %v1511, %v1611
        %v1647 = vadd.f32 %v1512, %v1611
        %v1648 = vadd.f32 %v1513, %v1611
        %v1649 = vadd.f32 %v1514, %v1611
        %v1650 = vadd.f32 %v1515, %v1611
        %v1651 = vadd.f32 %v1516, %v1611
        %v1652 = vadd.f32 %v1517, %v1611
        %v1653 = vadd.f32 %v1518, %v1611
        %v1654 = vadd.f32 %v1519, %v1611
        %v1655 = vadd.f32 %v1520, %v1611
        %v1656 = vadd.f32 %v1521, %v1611
        %v1657 = vadd.f32 %v1522, %v1611
        %v1658 = vadd.f32 %v1523, %v1611
        %v1659 = vadd.f32 %v1524, %v1611
        %v1660 = vadd.f32 %v1525, %v1611
        %v1661 = vadd.f32 %v1526, %v1611
        %v1662 = vadd.f32 %v1527, %v1611
        %v1663 = vadd.f32 %v1528, %v1611
        %v1664 = vadd.f32 %v1529, %v1611
        %v1665 = vadd.f32 %v1530, %v1611
        %v1666 = vadd.f32 %v1531, %v1611
        %v1667 = vadd.f32 %v1532, %v1611
        %v1668 = vadd.f32 %v1533, %v1611
        %v1669 = vadd.f32 %v1534, %v1611
        %v1670 = vadd.f32 %v1535, %v1611
        %v1671 = vadd.f32 %v1536, %v1611
        %v1672 = vadd.f32 %v1537, %v1611
        %v1673 = vadd.f32 %v1538, %v1611
        %v1674 = vadd.f32 %v1539, %v1611
        %v1675 = vadd.f32 %v1540, %v1611
        %v1676 = vadd.f32 %v1541, %v1611
        %v1677 = vadd.f32 %v1542, %v1611
        %v1678 = vadd.f32 %v1543, %v1611
        %v1679 = vadd.f32 %v1544, %v1611
        %v1680 = vadd.f32 %v1545, %v1611
        %v1681 = vadd.f32 %v1546, %v1611
        %v1682 = vadd.f32 %v1547, %v1611
        %v1683 = vadd.f32 %v1548, %v1611
        %v1684 = vadd.f32 %v1549, %v1611
        %v1685 = vadd.f32 %v1550, %v1611
        %v1686 = vadd.f32 %v1551, %v1611
        %v1687 = vadd.f32 %v1552, %v1611
        %v1688 = vadd.f32 %v1553, %v1611
        %v1689 = vadd.f32 %v1554, %v1611
        %v1690 = vadd.f32 %v1555, %v1611
        %v1691 = vadd.f32 %v1556, %v1611
        %v1692 = vadd.f32 %v1557, %v1611
        %v1693 = vadd.f32 %v1558, %v1611
        %v1694 = vadd.f32 %v1559, %v1611
        %v1695 = vadd.f32 %v1560, %v1611
        %v1696 = vadd.f32 %v1561, %v1611
        %v1697 = vadd.f32 %v1562, %v1611
        %v1698 = vadd.f32 %v1563, %v1611
        %v1699 = vadd.f32 %v1564, %v1611
        %v1700 = vadd.f32 %v1565, %v1611
        %v1701 = vadd.f32 %v1566, %v1611
        %v1702 = vadd.f32 %v1567, %v1611
        %v1703 = vadd.f32 %v1568, %v1611
        %v1704 = vadd.f32 %v1569, %v1611
        %v1705 = vadd.f32 %v1570, %v1611
        %v1706 = vadd.f32 %v1571, %v1611
        %v1707 = vadd.f32 %v1572, %v1611
        %v1708 = vadd.f32 %v1573, %v1611
        %v1709 = vadd.f32 %v1574, %v1611
        %v1710 = vadd.f32 %v1575, %v1611
        %v1711 = vadd.f32 %v1576, %v1611
        %v1712 = vadd.f32 %v1577, %v1611
        %v1713 = vadd.f32 %v1578, %v1611
        %v1714 = vadd.f32 %v1579, %v1611
        %v1715 = vadd.f32 %v1580, %v1611
        %v1716 = vadd.f32 %v1581, %v1611
        %v1717 = vadd.f32 %v1582, %v1611
        %v1718 = vadd.f32 %v1583, %v1611
        %v1719 = vadd.f32 %v1584, %v1611
        %v1720 = vadd.f32 %v1585, %v1611
        %v1721 = vadd.f32 %v1586, %v1611
        %v1722 = vadd.f32 %v1587, %v1611
        %v1723 = vadd.f32 %v1588, %v1611
        %v1724 = vadd.f32 %v1589, %v1611
        %v1725 = vadd.f32 %v1590, %v1611
        %v1726 = vadd.f32 %v1591, %v1611
        %v1727 = vadd.f32 %v1592, %v1611
        %v1728 = vadd.f32 %v1593, %v1611
        %v1729 = vadd.f32 %v1594, %v1611
        %v1730 = vadd.f32 %v1595, %v1611
        %v1731 = vadd.f32 %v1596, %v1611
        %v1732 = vadd.f32 %v1597, %v1611
        %v1733 = vadd.f32 %v1598, %v1611
        %v1734 = vadd.f32 %v1599, %v1611
        %v1735 = vadd.f32 %v1600, %v1611
        %v1736 = vadd.f32 %v1601, %v1611
        %v1737 = vadd.f32 %v1602, %v1611
        %v1738 = vadd.f32 %v1603, %v1611
        %v1739 = vadd.f32 %v1604, %v1611
        %v1740 = vadd.f32 %v1605, %v1611
        %v1741 = vsub.f32 0.0, %v1613
        %v1742 = vsub.f32 0.0, %v1614
        %v1743 = vsub.f32 0.0, %v1615
        %v1744 = vsub.f32 0.0, %v1616
        %v1745 = vsub.f32 0.0, %v1617
        %v1746 = vsub.f32 0.0, %v1618
        %v1747 = vsub.f32 0.0, %v1619
        %v1748 = vsub.f32 0.0, %v1620
        %v1749 = vsub.f32 0.0, %v1621
        %v1750 = vsub.f32 0.0, %v1622
        %v1751 = vsub.f32 0.0, %v1623
        %v1752 = vsub.f32 0.0, %v1624
        %v1753 = vsub.f32 0.0, %v1625
        %v1754 = vsub.f32 0.0, %v1626
        %v1755 = vsub.f32 0.0, %v1627
        %v1756 = vsub.f32 0.0, %v1628
        %v1757 = vsub.f32 0.0, %v1629
        %v1758 = vsub.f32 0.0, %v1630
        %v1759 = vsub.f32 0.0, %v1631
        %v1760 = vsub.f32 0.0, %v1632
        %v1761 = vsub.f32 0.0, %v1633
        %v1762 = vsub.f32 0.0, %v1634
        %v1763 = vsub.f32 0.0, %v1635
        %v1764 = vsub.f32 0.0, %v1636
        %v1765 = vsub.f32 0.0, %v1637
        %v1766 = vsub.f32 0.0, %v1638
        %v1767 = vsub.f32 0.0, %v1639
        %v1768 = vsub.f32 0.0, %v1640
        %v1769 = vsub.f32 0.0, %v1641
        %v1770 = vsub.f32 0.0, %v1642
        %v1771 = vsub.f32 0.0, %v1643
        %v1772 = vsub.f32 0.0, %v1644
        %v1773 = vsub.f32 0.0, %v1645
        %v1774 = vsub.f32 0.0, %v1646
        %v1775 = vsub.f32 0.0, %v1647
        %v1776 = vsub.f32 0.0, %v1648
        %v1777 = vsub.f32 0.0, %v1649
        %v1778 = vsub.f32 0.0, %v1650
        %v1779 = vsub.f32 0.0, %v1651
        %v1780 = vsub.f32 0.0, %v1652
        %v1781 = vsub.f32 0.0, %v1653
        %v1782 = vsub.f32 0.0, %v1654
        %v1783 = vsub.f32 0.0, %v1655
        %v1784 = vsub.f32 0.0, %v1656
        %v1785 = vsub.f32 0.0, %v1657
        %v1786 = vsub.f32 0.0, %v1658
        %v1787 = vsub.f32 0.0, %v1659
        %v1788 = vsub.f32 0.0, %v1660
        %v1789 = vsub.f32 0.0, %v1661
        %v1790 = vsub.f32 0.0, %v1662
        %v1791 = vsub.f32 0.0, %v1663
        %v1792 = vsub.f32 0.0, %v1664
        %v1793 = vsub.f32 0.0, %v1665
        %v1794 = vsub.f32 0.0, %v1666
        %v1795 = vsub.f32 0.0, %v1667
        %v1796 = vsub.f32 0.0, %v1668
        %v1797 = vsub.f32 0.0, %v1669
        %v1798 = vsub.f32 0.0, %v1670
        %v1799 = vsub.f32 0.0, %v1671
        %v1800 = vsub.f32 0.0, %v1672
        %v1801 = vsub.f32 0.0, %v1673
        %v1802 = vsub.f32 0.0, %v1674
        %v1803 = vsub.f32 0.0, %v1675
        %v1804 = vsub.f32 0.0, %v1676
        %v1805 = vsub.f32 0.0, %v1677
        %v1806 = vsub.f32 0.0, %v1678
        %v1807 = vsub.f32 0.0, %v1679
        %v1808 = vsub.f32 0.0, %v1680
        %v1809 = vsub.f32 0.0, %v1681
        %v1810 = vsub.f32 0.0, %v1682
        %v1811 = vsub.f32 0.0, %v1683
        %v1812 = vsub.f32 0.0, %v1684
        %v1813 = vsub.f32 0.0, %v1685
        %v1814 = vsub.f32 0.0, %v1686
        %v1815 = vsub.f32 0.0, %v1687
        %v1816 = vsub.f32 0.0, %v1688
        %v1817 = vsub.f32 0.0, %v1689
        %v1818 = vsub.f32 0.0, %v1690
        %v1819 = vsub.f32 0.0, %v1691
        %v1820 = vsub.f32 0.0, %v1692
        %v1821 = vsub.f32 0.0, %v1693
        %v1822 = vsub.f32 0.0, %v1694
        %v1823 = vsub.f32 0.0, %v1695
        %v1824 = vsub.f32 0.0, %v1696
        %v1825 = vsub.f32 0.0, %v1697
        %v1826 = vsub.f32 0.0, %v1698
        %v1827 = vsub.f32 0.0, %v1699
        %v1828 = vsub.f32 0.0, %v1700
        %v1829 = vsub.f32 0.0, %v1701
        %v1830 = vsub.f32 0.0, %v1702
        %v1831 = vsub.f32 0.0, %v1703
        %v1832 = vsub.f32 0.0, %v1704
        %v1833 = vsub.f32 0.0, %v1705
        %v1834 = vsub.f32 0.0, %v1706
        %v1835 = vsub.f32 0.0, %v1707
        %v1836 = vsub.f32 0.0, %v1708
        %v1837 = vsub.f32 0.0, %v1709
        %v1838 = vsub.f32 0.0, %v1710
        %v1839 = vsub.f32 0.0, %v1711
        %v1840 = vsub.f32 0.0, %v1712
        %v1841 = vsub.f32 0.0, %v1713
        %v1842 = vsub.f32 0.0, %v1714
        %v1843 = vsub.f32 0.0, %v1715
        %v1844 = vsub.f32 0.0, %v1716
        %v1845 = vsub.f32 0.0, %v1717
        %v1846 = vsub.f32 0.0, %v1718
        %v1847 = vsub.f32 0.0, %v1719
        %v1848 = vsub.f32 0.0, %v1720
        %v1849 = vsub.f32 0.0, %v1721
        %v1850 = vsub.f32 0.0, %v1722
        %v1851 = vsub.f32 0.0, %v1723
        %v1852 = vsub.f32 0.0, %v1724
        %v1853 = vsub.f32 0.0, %v1725
        %v1854 = vsub.f32 0.0, %v1726
        %v1855 = vsub.f32 0.0, %v1727
        %v1856 = vsub.f32 0.0, %v1728
        %v1857 = vsub.f32 0.0, %v1729
        %v1858 = vsub.f32 0.0, %v1730
        %v1859 = vsub.f32 0.0, %v1731
        %v1860 = vsub.f32 0.0, %v1732
        %v1861 = vsub.f32 0.0, %v1733
        %v1862 = vsub.f32 0.0, %v1734
        %v1863 = vsub.f32 0.0, %v1735
        %v1864 = vsub.f32 0.0, %v1736
        %v1865 = vsub.f32 0.0, %v1737
        %v1866 = vsub.f32 0.0, %v1738
        %v1867 = vsub.f32 0.0, %v1739
        %v1868 = vsub.f32 0.0, %v1740
        %v1869 = vmul.f32 %v1741, 1.442695
        %v1870 = vpow.pop %v1869
        %v1871 = vmul.f32 %v1742, 1.442695
        %v1872 = vpow.pop %v1871
        %v1873 = vmul.f32 %v1743, 1.442695
        %v1874 = vpow.pop %v1873
        %v1875 = vmul.f32 %v1744, 1.442695
        %v1876 = vpow.pop %v1875
        %v1877 = vmul.f32 %v1745, 1.442695
        %v1878 = vpow.pop %v1877
        %v1879 = vmul.f32 %v1746, 1.442695
        %v1880 = vpow.pop %v1879
        %v1881 = vmul.f32 %v1747, 1.442695
        %v1882 = vpow.pop %v1881
        %v1883 = vmul.f32 %v1748, 1.442695
        %v1884 = vpow.pop %v1883
        %v1885 = vmul.f32 %v1749, 1.442695
        %v1886 = vpow.pop %v1885
        %v1887 = vmul.f32 %v1750, 1.442695
        %v1888 = vpow.pop %v1887
        %v1889 = vmul.f32 %v1751, 1.442695
        %v1890 = vpow.pop %v1889
        %v1891 = vmul.f32 %v1752, 1.442695
        %v1892 = vpow.pop %v1891
        %v1893 = vmul.f32 %v1753, 1.442695
        %v1894 = vpow.pop %v1893
        %v1895 = vmul.f32 %v1754, 1.442695
        %v1896 = vpow.pop %v1895
        %v1897 = vmul.f32 %v1755, 1.442695
        %v1898 = vpow.pop %v1897
        %v1899 = vmul.f32 %v1756, 1.442695
        %v1900 = vpow.pop %v1899
        %v1901 = vmul.f32 %v1757, 1.442695
        %v1902 = vpow.pop %v1901
        %v1903 = vmul.f32 %v1758, 1.442695
        %v1904 = vpow.pop %v1903
        %v1905 = vmul.f32 %v1759, 1.442695
        %v1906 = vpow.pop %v1905
        %v1907 = vmul.f32 %v1760, 1.442695
        %v1908 = vpow.pop %v1907
        %v1909 = vmul.f32 %v1761, 1.442695
        %v1910 = vpow.pop %v1909
        %v1911 = vmul.f32 %v1762, 1.442695
        %v1912 = vpow.pop %v1911
        %v1913 = vmul.f32 %v1763, 1.442695
        %v1914 = vpow.pop %v1913
        %v1915 = vmul.f32 %v1764, 1.442695
        %v1916 = vpow.pop %v1915
        %v1917 = vmul.f32 %v1765, 1.442695
        %v1918 = vpow.pop %v1917
        %v1919 = vmul.f32 %v1766, 1.442695
        %v1920 = vpow.pop %v1919
        %v1921 = vmul.f32 %v1767, 1.442695
        %v1922 = vpow.pop %v1921
        %v1923 = vmul.f32 %v1768, 1.442695
        %v1924 = vpow.pop %v1923
        %v1925 = vmul.f32 %v1769, 1.442695
        %v1926 = vpow.pop %v1925
        %v1927 = vmul.f32 %v1770, 1.442695
        %v1928 = vpow.pop %v1927
        %v1929 = vmul.f32 %v1771, 1.442695
        %v1930 = vpow.pop %v1929
        %v1931 = vmul.f32 %v1772, 1.442695
        %v1932 = vpow.pop %v1931
        %v1933 = vmul.f32 %v1773, 1.442695
        %v1934 = vpow.pop %v1933
        %v1935 = vmul.f32 %v1774, 1.442695
        %v1936 = vpow.pop %v1935
        %v1937 = vmul.f32 %v1775, 1.442695
        %v1938 = vpow.pop %v1937
        %v1939 = vmul.f32 %v1776, 1.442695
        %v1940 = vpow.pop %v1939
        %v1941 = vmul.f32 %v1777, 1.442695
        %v1942 = vpow.pop %v1941
        %v1943 = vmul.f32 %v1778, 1.442695
        %v1944 = vpow.pop %v1943
        %v1945 = vmul.f32 %v1779, 1.442695
        %v1946 = vpow.pop %v1945
        %v1947 = vmul.f32 %v1780, 1.442695
        %v1948 = vpow.pop %v1947
        %v1949 = vmul.f32 %v1781, 1.442695
        %v1950 = vpow.pop %v1949
        %v1951 = vmul.f32 %v1782, 1.442695
        %v1952 = vpow.pop %v1951
        %v1953 = vmul.f32 %v1783, 1.442695
        %v1954 = vpow.pop %v1953
        %v1955 = vmul.f32 %v1784, 1.442695
        %v1956 = vpow.pop %v1955
        %v1957 = vmul.f32 %v1785, 1.442695
        %v1958 = vpow.pop %v1957
        %v1959 = vmul.f32 %v1786, 1.442695
        %v1960 = vpow.pop %v1959
        %v1961 = vmul.f32 %v1787, 1.442695
        %v1962 = vpow.pop %v1961
        %v1963 = vmul.f32 %v1788, 1.442695
        %v1964 = vpow.pop %v1963
        %v1965 = vmul.f32 %v1789, 1.442695
        %v1966 = vpow.pop %v1965
        %v1967 = vmul.f32 %v1790, 1.442695
        %v1968 = vpow.pop %v1967
        %v1969 = vmul.f32 %v1791, 1.442695
        %v1970 = vpow.pop %v1969
        %v1971 = vmul.f32 %v1792, 1.442695
        %v1972 = vpow.pop %v1971
        %v1973 = vmul.f32 %v1793, 1.442695
        %v1974 = vpow.pop %v1973
        %v1975 = vmul.f32 %v1794, 1.442695
        %v1976 = vpow.pop %v1975
        %v1977 = vmul.f32 %v1795, 1.442695
        %v1978 = vpow.pop %v1977
        %v1979 = vmul.f32 %v1796, 1.442695
        %v1980 = vpow.pop %v1979
        %v1981 = vmul.f32 %v1797, 1.442695
        %v1982 = vpow.pop %v1981
        %v1983 = vmul.f32 %v1798, 1.442695
        %v1984 = vpow.pop %v1983
        %v1985 = vmul.f32 %v1799, 1.442695
        %v1986 = vpow.pop %v1985
        %v1987 = vmul.f32 %v1800, 1.442695
        %v1988 = vpow.pop %v1987
        %v1989 = vmul.f32 %v1801, 1.442695
        %v1990 = vpow.pop %v1989
        %v1991 = vmul.f32 %v1802, 1.442695
        %v1992 = vpow.pop %v1991
        %v1993 = vmul.f32 %v1803, 1.442695
        %v1994 = vpow.pop %v1993
        %v1995 = vmul.f32 %v1804, 1.442695
        %v1996 = vpow.pop %v1995
        %v1997 = vmul.f32 %v1805, 1.442695
        %v1998 = vpow.pop %v1997
        %v1999 = vmul.f32 %v1806, 1.442695
        %v2000 = vpow.pop %v1999
        %v2001 = vmul.f32 %v1807, 1.442695
        %v2002 = vpow.pop %v2001
        %v2003 = vmul.f32 %v1808, 1.442695
        %v2004 = vpow.pop %v2003
        %v2005 = vmul.f32 %v1809, 1.442695
        %v2006 = vpow.pop %v2005
        %v2007 = vmul.f32 %v1810, 1.442695
        %v2008 = vpow.pop %v2007
        %v2009 = vmul.f32 %v1811, 1.442695
        %v2010 = vpow.pop %v2009
        %v2011 = vmul.f32 %v1812, 1.442695
        %v2012 = vpow.pop %v2011
        %v2013 = vmul.f32 %v1813, 1.442695
        %v2014 = vpow.pop %v2013
        %v2015 = vmul.f32 %v1814, 1.442695
        %v2016 = vpow.pop %v2015
        %v2017 = vmul.f32 %v1815, 1.442695
        %v2018 = vpow.pop %v2017
        %v2019 = vmul.f32 %v1816, 1.442695
        %v2020 = vpow.pop %v2019
        %v2021 = vmul.f32 %v1817, 1.442695
        %v2022 = vpow.pop %v2021
        %v2023 = vmul.f32 %v1818, 1.442695
        %v2024 = vpow.pop %v2023
        %v2025 = vmul.f32 %v1819, 1.442695
        %v2026 = vpow.pop %v2025
        %v2027 = vmul.f32 %v1820, 1.442695
        %v2028 = vpow.pop %v2027
        %v2029 = vmul.f32 %v1821, 1.442695
        %v2030 = vpow.pop %v2029
        %v2031 = vmul.f32 %v1822, 1.442695
        %v2032 = vpow.pop %v2031
        %v2033 = vmul.f32 %v1823, 1.442695
        %v2034 = vpow.pop %v2033
        %v2035 = vmul.f32 %v1824, 1.442695
        %v2036 = vpow.pop %v2035
        %v2037 = vmul.f32 %v1825, 1.442695
        %v2038 = vpow.pop %v2037
        %v2039 = vmul.f32 %v1826, 1.442695
        %v2040 = vpow.pop %v2039
        %v2041 = vmul.f32 %v1827, 1.442695
        %v2042 = vpow.pop %v2041
        %v2043 = vmul.f32 %v1828, 1.442695
        %v2044 = vpow.pop %v2043
        %v2045 = vmul.f32 %v1829, 1.442695
        %v2046 = vpow.pop %v2045
        %v2047 = vmul.f32 %v1830, 1.442695
        %v2048 = vpow.pop %v2047
        %v2049 = vmul.f32 %v1831, 1.442695
        %v2050 = vpow.pop %v2049
        %v2051 = vmul.f32 %v1832, 1.442695
        %v2052 = vpow.pop %v2051
        %v2053 = vmul.f32 %v1833, 1.442695
        %v2054 = vpow.pop %v2053
        %v2055 = vmul.f32 %v1834, 1.442695
        %v2056 = vpow.pop %v2055
        %v2057 = vmul.f32 %v1835, 1.442695
        %v2058 = vpow.pop %v2057
        %v2059 = vmul.f32 %v1836, 1.442695
        %v2060 = vpow.pop %v2059
        %v2061 = vmul.f32 %v1837, 1.442695
        %v2062 = vpow.pop %v2061
        %v2063 = vmul.f32 %v1838, 1.442695
        %v2064 = vpow.pop %v2063
        %v2065 = vmul.f32 %v1839, 1.442695
        %v2066 = vpow.pop %v2065
        %v2067 = vmul.f32 %v1840, 1.442695
        %v2068 = vpow.pop %v2067
        %v2069 = vmul.f32 %v1841, 1.442695
        %v2070 = vpow.pop %v2069
        %v2071 = vmul.f32 %v1842, 1.442695
        %v2072 = vpow.pop %v2071
        %v2073 = vmul.f32 %v1843, 1.442695
        %v2074 = vpow.pop %v2073
        %v2075 = vmul.f32 %v1844, 1.442695
        %v2076 = vpow.pop %v2075
        %v2077 = vmul.f32 %v1845, 1.442695
        %v2078 = vpow.pop %v2077
        %v2079 = vmul.f32 %v1846, 1.442695
        %v2080 = vpow.pop %v2079
        %v2081 = vmul.f32 %v1847, 1.442695
        %v2082 = vpow.pop %v2081
        %v2083 = vmul.f32 %v1848, 1.442695
        %v2084 = vpow.pop %v2083
        %v2085 = vmul.f32 %v1849, 1.442695
        %v2086 = vpow.pop %v2085
        %v2087 = vmul.f32 %v1850, 1.442695
        %v2088 = vpow.pop %v2087
        %v2089 = vmul.f32 %v1851, 1.442695
        %v2090 = vpow.pop %v2089
        %v2091 = vmul.f32 %v1852, 1.442695
        %v2092 = vpow.pop %v2091
        %v2093 = vmul.f32 %v1853, 1.442695
        %v2094 = vpow.pop %v2093
        %v2095 = vmul.f32 %v1854, 1.442695
        %v2096 = vpow.pop %v2095
        %v2097 = vmul.f32 %v1855, 1.442695
        %v2098 = vpow.pop %v2097
        %v2099 = vmul.f32 %v1856, 1.442695
        %v2100 = vpow.pop %v2099
        %v2101 = vmul.f32 %v1857, 1.442695
        %v2102 = vpow.pop %v2101
        %v2103 = vmul.f32 %v1858, 1.442695
        %v2104 = vpow.pop %v2103
        %v2105 = vmul.f32 %v1859, 1.442695
        %v2106 = vpow.pop %v2105
        %v2107 = vmul.f32 %v1860, 1.442695
        %v2108 = vpow.pop %v2107
        %v2109 = vmul.f32 %v1861, 1.442695
        %v2110 = vpow.pop %v2109
        %v2111 = vmul.f32 %v1862, 1.442695
        %v2112 = vpow.pop %v2111
        %v2113 = vmul.f32 %v1863, 1.442695
        %v2114 = vpow.pop %v2113
        %v2115 = vmul.f32 %v1864, 1.442695
        %v2116 = vpow.pop %v2115
        %v2117 = vmul.f32 %v1865, 1.442695
        %v2118 = vpow.pop %v2117
        %v2119 = vmul.f32 %v1866, 1.442695
        %v2120 = vpow.pop %v2119
        %v2121 = vmul.f32 %v1867, 1.442695
        %v2122 = vpow.pop %v2121
        %v2123 = vmul.f32 %v1868, 1.442695
        %v2124 = vpow.pop %v2123
        %v2125 = vadd.f32 %v1870, 1.0
        %v2126 = vadd.f32 %v1872, 1.0
        %v2127 = vadd.f32 %v1874, 1.0
        %v2128 = vadd.f32 %v1876, 1.0
        %v2129 = vadd.f32 %v1878, 1.0
        %v2130 = vadd.f32 %v1880, 1.0
        %v2131 = vadd.f32 %v1882, 1.0
        %v2132 = vadd.f32 %v1884, 1.0
        %v2133 = vadd.f32 %v1886, 1.0
        %v2134 = vadd.f32 %v1888, 1.0
        %v2135 = vadd.f32 %v1890, 1.0
        %v2136 = vadd.f32 %v1892, 1.0
        %v2137 = vadd.f32 %v1894, 1.0
        %v2138 = vadd.f32 %v1896, 1.0
        %v2139 = vadd.f32 %v1898, 1.0
        %v2140 = vadd.f32 %v1900, 1.0
        %v2141 = vadd.f32 %v1902, 1.0
        %v2142 = vadd.f32 %v1904, 1.0
        %v2143 = vadd.f32 %v1906, 1.0
        %v2144 = vadd.f32 %v1908, 1.0
        %v2145 = vadd.f32 %v1910, 1.0
        %v2146 = vadd.f32 %v1912, 1.0
        %v2147 = vadd.f32 %v1914, 1.0
        %v2148 = vadd.f32 %v1916, 1.0
        %v2149 = vadd.f32 %v1918, 1.0
        %v2150 = vadd.f32 %v1920, 1.0
        %v2151 = vadd.f32 %v1922, 1.0
        %v2152 = vadd.f32 %v1924, 1.0
        %v2153 = vadd.f32 %v1926, 1.0
        %v2154 = vadd.f32 %v1928, 1.0
        %v2155 = vadd.f32 %v1930, 1.0
        %v2156 = vadd.f32 %v1932, 1.0
        %v2157 = vadd.f32 %v1934, 1.0
        %v2158 = vadd.f32 %v1936, 1.0
        %v2159 = vadd.f32 %v1938, 1.0
        %v2160 = vadd.f32 %v1940, 1.0
        %v2161 = vadd.f32 %v1942, 1.0
        %v2162 = vadd.f32 %v1944, 1.0
        %v2163 = vadd.f32 %v1946, 1.0
        %v2164 = vadd.f32 %v1948, 1.0
        %v2165 = vadd.f32 %v1950, 1.0
        %v2166 = vadd.f32 %v1952, 1.0
        %v2167 = vadd.f32 %v1954, 1.0
        %v2168 = vadd.f32 %v1956, 1.0
        %v2169 = vadd.f32 %v1958, 1.0
        %v2170 = vadd.f32 %v1960, 1.0
        %v2171 = vadd.f32 %v1962, 1.0
        %v2172 = vadd.f32 %v1964, 1.0
        %v2173 = vadd.f32 %v1966, 1.0
        %v2174 = vadd.f32 %v1968, 1.0
        %v2175 = vadd.f32 %v1970, 1.0
        %v2176 = vadd.f32 %v1972, 1.0
        %v2177 = vadd.f32 %v1974, 1.0
        %v2178 = vadd.f32 %v1976, 1.0
        %v2179 = vadd.f32 %v1978, 1.0
        %v2180 = vadd.f32 %v1980, 1.0
        %v2181 = vadd.f32 %v1982, 1.0
        %v2182 = vadd.f32 %v1984, 1.0
        %v2183 = vadd.f32 %v1986, 1.0
        %v2184 = vadd.f32 %v1988, 1.0
        %v2185 = vadd.f32 %v1990, 1.0
        %v2186 = vadd.f32 %v1992, 1.0
        %v2187 = vadd.f32 %v1994, 1.0
        %v2188 = vadd.f32 %v1996, 1.0
        %v2189 = vadd.f32 %v1998, 1.0
        %v2190 = vadd.f32 %v2000, 1.0
        %v2191 = vadd.f32 %v2002, 1.0
        %v2192 = vadd.f32 %v2004, 1.0
        %v2193 = vadd.f32 %v2006, 1.0
        %v2194 = vadd.f32 %v2008, 1.0
        %v2195 = vadd.f32 %v2010, 1.0
        %v2196 = vadd.f32 %v2012, 1.0
        %v2197 = vadd.f32 %v2014, 1.0
        %v2198 = vadd.f32 %v2016, 1.0
        %v2199 = vadd.f32 %v2018, 1.0
        %v2200 = vadd.f32 %v2020, 1.0
        %v2201 = vadd.f32 %v2022, 1.0
        %v2202 = vadd.f32 %v2024, 1.0
        %v2203 = vadd.f32 %v2026, 1.0
        %v2204 = vadd.f32 %v2028, 1.0
        %v2205 = vadd.f32 %v2030, 1.0
        %v2206 = vadd.f32 %v2032, 1.0
        %v2207 = vadd.f32 %v2034, 1.0
        %v2208 = vadd.f32 %v2036, 1.0
        %v2209 = vadd.f32 %v2038, 1.0
        %v2210 = vadd.f32 %v2040, 1.0
        %v2211 = vadd.f32 %v2042, 1.0
        %v2212 = vadd.f32 %v2044, 1.0
        %v2213 = vadd.f32 %v2046, 1.0
        %v2214 = vadd.f32 %v2048, 1.0
        %v2215 = vadd.f32 %v2050, 1.0
        %v2216 = vadd.f32 %v2052, 1.0
        %v2217 = vadd.f32 %v2054, 1.0
        %v2218 = vadd.f32 %v2056, 1.0
        %v2219 = vadd.f32 %v2058, 1.0
        %v2220 = vadd.f32 %v2060, 1.0
        %v2221 = vadd.f32 %v2062, 1.0
        %v2222 = vadd.f32 %v2064, 1.0
        %v2223 = vadd.f32 %v2066, 1.0
        %v2224 = vadd.f32 %v2068, 1.0
        %v2225 = vadd.f32 %v2070, 1.0
        %v2226 = vadd.f32 %v2072, 1.0
        %v2227 = vadd.f32 %v2074, 1.0
        %v2228 = vadd.f32 %v2076, 1.0
        %v2229 = vadd.f32 %v2078, 1.0
        %v2230 = vadd.f32 %v2080, 1.0
        %v2231 = vadd.f32 %v2082, 1.0
        %v2232 = vadd.f32 %v2084, 1.0
        %v2233 = vadd.f32 %v2086, 1.0
        %v2234 = vadd.f32 %v2088, 1.0
        %v2235 = vadd.f32 %v2090, 1.0
        %v2236 = vadd.f32 %v2092, 1.0
        %v2237 = vadd.f32 %v2094, 1.0
        %v2238 = vadd.f32 %v2096, 1.0
        %v2239 = vadd.f32 %v2098, 1.0
        %v2240 = vadd.f32 %v2100, 1.0
        %v2241 = vadd.f32 %v2102, 1.0
        %v2242 = vadd.f32 %v2104, 1.0
        %v2243 = vadd.f32 %v2106, 1.0
        %v2244 = vadd.f32 %v2108, 1.0
        %v2245 = vadd.f32 %v2110, 1.0
        %v2246 = vadd.f32 %v2112, 1.0
        %v2247 = vadd.f32 %v2114, 1.0
        %v2248 = vadd.f32 %v2116, 1.0
        %v2249 = vadd.f32 %v2118, 1.0
        %v2250 = vadd.f32 %v2120, 1.0
        %v2251 = vadd.f32 %v2122, 1.0
        %v2252 = vadd.f32 %v2124, 1.0
        %v2253 = vrcp.pop %v2125
        %v2254 = vrcp.pop %v2126
        %v2255 = vrcp.pop %v2127
        %v2256 = vrcp.pop %v2128
        %v2257 = vrcp.pop %v2129
        %v2258 = vrcp.pop %v2130
        %v2259 = vrcp.pop %v2131
        %v2260 = vrcp.pop %v2132
        %v2261 = vrcp.pop %v2133
        %v2262 = vrcp.pop %v2134
        %v2263 = vrcp.pop %v2135
        %v2264 = vrcp.pop %v2136
        %v2265 = vrcp.pop %v2137
        %v2266 = vrcp.pop %v2138
        %v2267 = vrcp.pop %v2139
        %v2268 = vrcp.pop %v2140
        %v2269 = vrcp.pop %v2141
        %v2270 = vrcp.pop %v2142
        %v2271 = vrcp.pop %v2143
        %v2272 = vrcp.pop %v2144
        %v2273 = vrcp.pop %v2145
        %v2274 = vrcp.pop %v2146
        %v2275 = vrcp.pop %v2147
        %v2276 = vrcp.pop %v2148
        %v2277 = vrcp.pop %v2149
        %v2278 = vrcp.pop %v2150
        %v2279 = vrcp.pop %v2151
        %v2280 = vrcp.pop %v2152
        %v2281 = vrcp.pop %v2153
        %v2282 = vrcp.pop %v2154
        %v2283 = vrcp.pop %v2155
        %v2284 = vrcp.pop %v2156
        %v2285 = vrcp.pop %v2157
        %v2286 = vrcp.pop %v2158
        %v2287 = vrcp.pop %v2159
        %v2288 = vrcp.pop %v2160
        %v2289 = vrcp.pop %v2161
        %v2290 = vrcp.pop %v2162
        %v2291 = vrcp.pop %v2163
        %v2292 = vrcp.pop %v2164
        %v2293 = vrcp.pop %v2165
        %v2294 = vrcp.pop %v2166
        %v2295 = vrcp.pop %v2167
        %v2296 = vrcp.pop %v2168
        %v2297 = vrcp.pop %v2169
        %v2298 = vrcp.pop %v2170
        %v2299 = vrcp.pop %v2171
        %v2300 = vrcp.pop %v2172
        %v2301 = vrcp.pop %v2173
        %v2302 = vrcp.pop %v2174
        %v2303 = vrcp.pop %v2175
        %v2304 = vrcp.pop %v2176
        %v2305 = vrcp.pop %v2177
        %v2306 = vrcp.pop %v2178
        %v2307 = vrcp.pop %v2179
        %v2308 = vrcp.pop %v2180
        %v2309 = vrcp.pop %v2181
        %v2310 = vrcp.pop %v2182
        %v2311 = vrcp.pop %v2183
        %v2312 = vrcp.pop %v2184
        %v2313 = vrcp.pop %v2185
        %v2314 = vrcp.pop %v2186
        %v2315 = vrcp.pop %v2187
        %v2316 = vrcp.pop %v2188
        %v2317 = vrcp.pop %v2189
        %v2318 = vrcp.pop %v2190
        %v2319 = vrcp.pop %v2191
        %v2320 = vrcp.pop %v2192
        %v2321 = vrcp.pop %v2193
        %v2322 = vrcp.pop %v2194
        %v2323 = vrcp.pop %v2195
        %v2324 = vrcp.pop %v2196
        %v2325 = vrcp.pop %v2197
        %v2326 = vrcp.pop %v2198
        %v2327 = vrcp.pop %v2199
        %v2328 = vrcp.pop %v2200
        %v2329 = vrcp.pop %v2201
        %v2330 = vrcp.pop %v2202
        %v2331 = vrcp.pop %v2203
        %v2332 = vrcp.pop %v2204
        %v2333 = vrcp.pop %v2205
        %v2334 = vrcp.pop %v2206
        %v2335 = vrcp.pop %v2207
        %v2336 = vrcp.pop %v2208
        %v2337 = vrcp.pop %v2209
        %v2338 = vrcp.pop %v2210
        %v2339 = vrcp.pop %v2211
        %v2340 = vrcp.pop %v2212
        %v2341 = vrcp.pop %v2213
        %v2342 = vrcp.pop %v2214
        %v2343 = vrcp.pop %v2215
        %v2344 = vrcp.pop %v2216
        %v2345 = vrcp.pop %v2217
        %v2346 = vrcp.pop %v2218
        %v2347 = vrcp.pop %v2219
        %v2348 = vrcp.pop %v2220
        %v2349 = vrcp.pop %v2221
        %v2350 = vrcp.pop %v2222
        %v2351 = vrcp.pop %v2223
        %v2352 = vrcp.pop %v2224
        %v2353 = vrcp.pop %v2225
        %v2354 = vrcp.pop %v2226
        %v2355 = vrcp.pop %v2227
        %v2356 = vrcp.pop %v2228
        %v2357 = vrcp.pop %v2229
        %v2358 = vrcp.pop %v2230
        %v2359 = vrcp.pop %v2231
        %v2360 = vrcp.pop %v2232
        %v2361 = vrcp.pop %v2233
        %v2362 = vrcp.pop %v2234
        %v2363 = vrcp.pop %v2235
        %v2364 = vrcp.pop %v2236
        %v2365 = vrcp.pop %v2237
        %v2366 = vrcp.pop %v2238
        %v2367 = vrcp.pop %v2239
        %v2368 = vrcp.pop %v2240
        %v2369 = vrcp.pop %v2241
        %v2370 = vrcp.pop %v2242
        %v2371 = vrcp.pop %v2243
        %v2372 = vrcp.pop %v2244
        %v2373 = vrcp.pop %v2245
        %v2374 = vrcp.pop %v2246
        %v2375 = vrcp.pop %v2247
        %v2376 = vrcp.pop %v2248
        %v2377 = vrcp.pop %v2249
        %v2378 = vrcp.pop %v2250
        %v2379 = vrcp.pop %v2251
        %v2380 = vrcp.pop %v2252
        %v2381 = vmul.f32 %v1613, %v2253
        %v2382 = vmul.f32 %v1614, %v2254
        %v2383 = vmul.f32 %v1615, %v2255
        %v2384 = vmul.f32 %v1616, %v2256
        %v2385 = vmul.f32 %v1617, %v2257
        %v2386 = vmul.f32 %v1618, %v2258
        %v2387 = vmul.f32 %v1619, %v2259
        %v2388 = vmul.f32 %v1620, %v2260
        %v2389 = vmul.f32 %v1621, %v2261
        %v2390 = vmul.f32 %v1622, %v2262
        %v2391 = vmul.f32 %v1623, %v2263
        %v2392 = vmul.f32 %v1624, %v2264
        %v2393 = vmul.f32 %v1625, %v2265
        %v2394 = vmul.f32 %v1626, %v2266
        %v2395 = vmul.f32 %v1627, %v2267
        %v2396 = vmul.f32 %v1628, %v2268
        %v2397 = vmul.f32 %v1629, %v2269
        %v2398 = vmul.f32 %v1630, %v2270
        %v2399 = vmul.f32 %v1631, %v2271
        %v2400 = vmul.f32 %v1632, %v2272
        %v2401 = vmul.f32 %v1633, %v2273
        %v2402 = vmul.f32 %v1634, %v2274
        %v2403 = vmul.f32 %v1635, %v2275
        %v2404 = vmul.f32 %v1636, %v2276
        %v2405 = vmul.f32 %v1637, %v2277
        %v2406 = vmul.f32 %v1638, %v2278
        %v2407 = vmul.f32 %v1639, %v2279
        %v2408 = vmul.f32 %v1640, %v2280
        %v2409 = vmul.f32 %v1641, %v2281
        %v2410 = vmul.f32 %v1642, %v2282
        %v2411 = vmul.f32 %v1643, %v2283
        %v2412 = vmul.f32 %v1644, %v2284
        %v2413 = vmul.f32 %v1645, %v2285
        %v2414 = vmul.f32 %v1646, %v2286
        %v2415 = vmul.f32 %v1647, %v2287
        %v2416 = vmul.f32 %v1648, %v2288
        %v2417 = vmul.f32 %v1649, %v2289
        %v2418 = vmul.f32 %v1650, %v2290
        %v2419 = vmul.f32 %v1651, %v2291
        %v2420 = vmul.f32 %v1652, %v2292
        %v2421 = vmul.f32 %v1653, %v2293
        %v2422 = vmul.f32 %v1654, %v2294
        %v2423 = vmul.f32 %v1655, %v2295
        %v2424 = vmul.f32 %v1656, %v2296
        %v2425 = vmul.f32 %v1657, %v2297
        %v2426 = vmul.f32 %v1658, %v2298
        %v2427 = vmul.f32 %v1659, %v2299
        %v2428 = vmul.f32 %v1660, %v2300
        %v2429 = vmul.f32 %v1661, %v2301
        %v2430 = vmul.f32 %v1662, %v2302
        %v2431 = vmul.f32 %v1663, %v2303
        %v2432 = vmul.f32 %v1664, %v2304
        %v2433 = vmul.f32 %v1665, %v2305
        %v2434 = vmul.f32 %v1666, %v2306
        %v2435 = vmul.f32 %v1667, %v2307
        %v2436 = vmul.f32 %v1668, %v2308
        %v2437 = vmul.f32 %v1669, %v2309
        %v2438 = vmul.f32 %v1670, %v2310
        %v2439 = vmul.f32 %v1671, %v2311
        %v2440 = vmul.f32 %v1672, %v2312
        %v2441 = vmul.f32 %v1673, %v2313
        %v2442 = vmul.f32 %v1674, %v2314
        %v2443 = vmul.f32 %v1675, %v2315
        %v2444 = vmul.f32 %v1676, %v2316
        %v2445 = vmul.f32 %v1677, %v2317
        %v2446 = vmul.f32 %v1678, %v2318
        %v2447 = vmul.f32 %v1679, %v2319
        %v2448 = vmul.f32 %v1680, %v2320
        %v2449 = vmul.f32 %v1681, %v2321
        %v2450 = vmul.f32 %v1682, %v2322
        %v2451 = vmul.f32 %v1683, %v2323
        %v2452 = vmul.f32 %v1684, %v2324
        %v2453 = vmul.f32 %v1685, %v2325
        %v2454 = vmul.f32 %v1686, %v2326
        %v2455 = vmul.f32 %v1687, %v2327
        %v2456 = vmul.f32 %v1688, %v2328
        %v2457 = vmul.f32 %v1689, %v2329
        %v2458 = vmul.f32 %v1690, %v2330
        %v2459 = vmul.f32 %v1691, %v2331
        %v2460 = vmul.f32 %v1692, %v2332
        %v2461 = vmul.f32 %v1693, %v2333
        %v2462 = vmul.f32 %v1694, %v2334
        %v2463 = vmul.f32 %v1695, %v2335
        %v2464 = vmul.f32 %v1696, %v2336
        %v2465 = vmul.f32 %v1697, %v2337
        %v2466 = vmul.f32 %v1698, %v2338
        %v2467 = vmul.f32 %v1699, %v2339
        %v2468 = vmul.f32 %v1700, %v2340
        %v2469 = vmul.f32 %v1701, %v2341
        %v2470 = vmul.f32 %v1702, %v2342
        %v2471 = vmul.f32 %v1703, %v2343
        %v2472 = vmul.f32 %v1704, %v2344
        %v2473 = vmul.f32 %v1705, %v2345
        %v2474 = vmul.f32 %v1706, %v2346
        %v2475 = vmul.f32 %v1707, %v2347
        %v2476 = vmul.f32 %v1708, %v2348
        %v2477 = vmul.f32 %v1709, %v2349
        %v2478 = vmul.f32 %v1710, %v2350
        %v2479 = vmul.f32 %v1711, %v2351
        %v2480 = vmul.f32 %v1712, %v2352
        %v2481 = vmul.f32 %v1713, %v2353
        %v2482 = vmul.f32 %v1714, %v2354
        %v2483 = vmul.f32 %v1715, %v2355
        %v2484 = vmul.f32 %v1716, %v2356
        %v2485 = vmul.f32 %v1717, %v2357
        %v2486 = vmul.f32 %v1718, %v2358
        %v2487 = vmul.f32 %v1719, %v2359
        %v2488 = vmul.f32 %v1720, %v2360
        %v2489 = vmul.f32 %v1721, %v2361
        %v2490 = vmul.f32 %v1722, %v2362
        %v2491 = vmul.f32 %v1723, %v2363
        %v2492 = vmul.f32 %v1724, %v2364
        %v2493 = vmul.f32 %v1725, %v2365
        %v2494 = vmul.f32 %v1726, %v2366
        %v2495 = vmul.f32 %v1727, %v2367
        %v2496 = vmul.f32 %v1728, %v2368
        %v2497 = vmul.f32 %v1729, %v2369
        %v2498 = vmul.f32 %v1730, %v2370
        %v2499 = vmul.f32 %v1731, %v2371
        %v2500 = vmul.f32 %v1732, %v2372
        %v2501 = vmul.f32 %v1733, %v2373
        %v2502 = vmul.f32 %v1734, %v2374
        %v2503 = vmul.f32 %v1735, %v2375
        %v2504 = vmul.f32 %v1736, %v2376
        %v2505 = vmul.f32 %v1737, %v2377
        %v2506 = vmul.f32 %v1738, %v2378
        %v2507 = vmul.f32 %v1739, %v2379
        %v2508 = vmul.f32 %v1740, %v2380
        %v2509 = vpack.c.bf16 %v2382, %v2381
        %v2510 = vpack.c.bf16 %v2384, %v2383
        %v2511 = vpack.c.bf16 %v2386, %v2385
        %v2512 = vpack.c.bf16 %v2388, %v2387
        %v2513 = vpack.c.bf16 %v2390, %v2389
        %v2514 = vpack.c.bf16 %v2392, %v2391
        %v2515 = vpack.c.bf16 %v2394, %v2393
        %v2516 = vpack.c.bf16 %v2396, %v2395
        %v2517 = vpack.c.bf16 %v2398, %v2397
        %v2518 = vpack.c.bf16 %v2400, %v2399
        %v2519 = vpack.c.bf16 %v2402, %v2401
        %v2520 = vpack.c.bf16 %v2404, %v2403
        %v2521 = vpack.c.bf16 %v2406, %v2405
        %v2522 = vpack.c.bf16 %v2408, %v2407
        %v2523 = vpack.c.bf16 %v2410, %v2409
        %v2524 = vpack.c.bf16 %v2412, %v2411
        %v2525 = vpack.c.bf16 %v2414, %v2413
        %v2526 = vpack.c.bf16 %v2416, %v2415
        %v2527 = vpack.c.bf16 %v2418, %v2417
        %v2528 = vpack.c.bf16 %v2420, %v2419
        %v2529 = vpack.c.bf16 %v2422, %v2421
        %v2530 = vpack.c.bf16 %v2424, %v2423
        %v2531 = vpack.c.bf16 %v2426, %v2425
        %v2532 = vpack.c.bf16 %v2428, %v2427
        %v2533 = vpack.c.bf16 %v2430, %v2429
        %v2534 = vpack.c.bf16 %v2432, %v2431
        %v2535 = vpack.c.bf16 %v2434, %v2433
        %v2536 = vpack.c.bf16 %v2436, %v2435
        %v2537 = vpack.c.bf16 %v2438, %v2437
        %v2538 = vpack.c.bf16 %v2440, %v2439
        %v2539 = vpack.c.bf16 %v2442, %v2441
        %v2540 = vpack.c.bf16 %v2444, %v2443
        %v2541 = vpack.c.bf16 %v2446, %v2445
        %v2542 = vpack.c.bf16 %v2448, %v2447
        %v2543 = vpack.c.bf16 %v2450, %v2449
        %v2544 = vpack.c.bf16 %v2452, %v2451
        %v2545 = vpack.c.bf16 %v2454, %v2453
        %v2546 = vpack.c.bf16 %v2456, %v2455
        %v2547 = vpack.c.bf16 %v2458, %v2457
        %v2548 = vpack.c.bf16 %v2460, %v2459
        %v2549 = vpack.c.bf16 %v2462, %v2461
        %v2550 = vpack.c.bf16 %v2464, %v2463
        %v2551 = vpack.c.bf16 %v2466, %v2465
        %v2552 = vpack.c.bf16 %v2468, %v2467
        %v2553 = vpack.c.bf16 %v2470, %v2469
        %v2554 = vpack.c.bf16 %v2472, %v2471
        %v2555 = vpack.c.bf16 %v2474, %v2473
        %v2556 = vpack.c.bf16 %v2476, %v2475
        %v2557 = vpack.c.bf16 %v2478, %v2477
        %v2558 = vpack.c.bf16 %v2480, %v2479
        %v2559 = vpack.c.bf16 %v2482, %v2481
        %v2560 = vpack.c.bf16 %v2484, %v2483
        %v2561 = vpack.c.bf16 %v2486, %v2485
        %v2562 = vpack.c.bf16 %v2488, %v2487
        %v2563 = vpack.c.bf16 %v2490, %v2489
        %v2564 = vpack.c.bf16 %v2492, %v2491
        %v2565 = vpack.c.bf16 %v2494, %v2493
        %v2566 = vpack.c.bf16 %v2496, %v2495
        %v2567 = vpack.c.bf16 %v2498, %v2497
        %v2568 = vpack.c.bf16 %v2500, %v2499
        %v2569 = vpack.c.bf16 %v2502, %v2501
        %v2570 = vpack.c.bf16 %v2504, %v2503
        %v2571 = vpack.c.bf16 %v2506, %v2505
        %v2572 = vpack.c.bf16 %v2508, %v2507
        %v2637 = vunpack.c.l.b16 %v2509
        %v2638 = vunpack.c.h.b16 %v2509
        %v2639 = vunpack.c.l.b16 %v2510
        %v2640 = vunpack.c.h.b16 %v2510
        %v2641 = vunpack.c.l.b16 %v2511
        %v2642 = vunpack.c.h.b16 %v2511
        %v2643 = vunpack.c.l.b16 %v2512
        %v2644 = vunpack.c.h.b16 %v2512
        %v2645 = vunpack.c.l.b16 %v2513
        %v2646 = vunpack.c.h.b16 %v2513
        %v2647 = vunpack.c.l.b16 %v2514
        %v2648 = vunpack.c.h.b16 %v2514
        %v2649 = vunpack.c.l.b16 %v2515
        %v2650 = vunpack.c.h.b16 %v2515
        %v2651 = vunpack.c.l.b16 %v2516
        %v2652 = vunpack.c.h.b16 %v2516
        %v2653 = vunpack.c.l.b16 %v2517
        %v2654 = vunpack.c.h.b16 %v2517
        %v2655 = vunpack.c.l.b16 %v2518
        %v2656 = vunpack.c.h.b16 %v2518
        %v2657 = vunpack.c.l.b16 %v2519
        %v2658 = vunpack.c.h.b16 %v2519
        %v2659 = vunpack.c.l.b16 %v2520
        %v2660 = vunpack.c.h.b16 %v2520
        %v2661 = vunpack.c.l.b16 %v2521
        %v2662 = vunpack.c.h.b16 %v2521
        %v2663 = vunpack.c.l.b16 %v2522
        %v2664 = vunpack.c.h.b16 %v2522
        %v2665 = vunpack.c.l.b16 %v2523
        %v2666 = vunpack.c.h.b16 %v2523
        %v2667 = vunpack.c.l.b16 %v2524
        %v2668 = vunpack.c.h.b16 %v2524
        %v2669 = vunpack.c.l.b16 %v2525
        %v2670 = vunpack.c.h.b16 %v2525
        %v2671 = vunpack.c.l.b16 %v2526
        %v2672 = vunpack.c.h.b16 %v2526
        %v2673 = vunpack.c.l.b16 %v2527
        %v2674 = vunpack.c.h.b16 %v2527
        %v2675 = vunpack.c.l.b16 %v2528
        %v2676 = vunpack.c.h.b16 %v2528
        %v2677 = vunpack.c.l.b16 %v2529
        %v2678 = vunpack.c.h.b16 %v2529
        %v2679 = vunpack.c.l.b16 %v2530
        %v2680 = vunpack.c.h.b16 %v2530
        %v2681 = vunpack.c.l.b16 %v2531
        %v2682 = vunpack.c.h.b16 %v2531
        %v2683 = vunpack.c.l.b16 %v2532
        %v2684 = vunpack.c.h.b16 %v2532
        %v2685 = vunpack.c.l.b16 %v2533
        %v2686 = vunpack.c.h.b16 %v2533
        %v2687 = vunpack.c.l.b16 %v2534
        %v2688 = vunpack.c.h.b16 %v2534
        %v2689 = vunpack.c.l.b16 %v2535
        %v2690 = vunpack.c.h.b16 %v2535
        %v2691 = vunpack.c.l.b16 %v2536
        %v2692 = vunpack.c.h.b16 %v2536
        %v2693 = vunpack.c.l.b16 %v2537
        %v2694 = vunpack.c.h.b16 %v2537
        %v2695 = vunpack.c.l.b16 %v2538
        %v2696 = vunpack.c.h.b16 %v2538
        %v2697 = vunpack.c.l.b16 %v2539
        %v2698 = vunpack.c.h.b16 %v2539
        %v2699 = vunpack.c.l.b16 %v2540
        %v2700 = vunpack.c.h.b16 %v2540
        %v2701 = vunpack.c.l.b16 %v2541
        %v2702 = vunpack.c.h.b16 %v2541
        %v2703 = vunpack.c.l.b16 %v2542
        %v2704 = vunpack.c.h.b16 %v2542
        %v2705 = vunpack.c.l.b16 %v2543
        %v2706 = vunpack.c.h.b16 %v2543
        %v2707 = vunpack.c.l.b16 %v2544
        %v2708 = vunpack.c.h.b16 %v2544
        %v2709 = vunpack.c.l.b16 %v2545
        %v2710 = vunpack.c.h.b16 %v2545
        %v2711 = vunpack.c.l.b16 %v2546
        %v2712 = vunpack.c.h.b16 %v2546
        %v2713 = vunpack.c.l.b16 %v2547
        %v2714 = vunpack.c.h.b16 %v2547
        %v2715 = vunpack.c.l.b16 %v2548
        %v2716 = vunpack.c.h.b16 %v2548
        %v2717 = vunpack.c.l.b16 %v2549
        %v2718 = vunpack.c.h.b16 %v2549
        %v2719 = vunpack.c.l.b16 %v2550
        %v2720 = vunpack.c.h.b16 %v2550
        %v2721 = vunpack.c.l.b16 %v2551
        %v2722 = vunpack.c.h.b16 %v2551
        %v2723 = vunpack.c.l.b16 %v2552
        %v2724 = vunpack.c.h.b16 %v2552
        %v2725 = vunpack.c.l.b16 %v2553
        %v2726 = vunpack.c.h.b16 %v2553
        %v2727 = vunpack.c.l.b16 %v2554
        %v2728 = vunpack.c.h.b16 %v2554
        %v2729 = vunpack.c.l.b16 %v2555
        %v2730 = vunpack.c.h.b16 %v2555
        %v2731 = vunpack.c.l.b16 %v2556
        %v2732 = vunpack.c.h.b16 %v2556
        %v2733 = vunpack.c.l.b16 %v2557
        %v2734 = vunpack.c.h.b16 %v2557
        %v2735 = vunpack.c.l.b16 %v2558
        %v2736 = vunpack.c.h.b16 %v2558
        %v2737 = vunpack.c.l.b16 %v2559
        %v2738 = vunpack.c.h.b16 %v2559
        %v2739 = vunpack.c.l.b16 %v2560
        %v2740 = vunpack.c.h.b16 %v2560
        %v2741 = vunpack.c.l.b16 %v2561
        %v2742 = vunpack.c.h.b16 %v2561
        %v2743 = vunpack.c.l.b16 %v2562
        %v2744 = vunpack.c.h.b16 %v2562
        %v2745 = vunpack.c.l.b16 %v2563
        %v2746 = vunpack.c.h.b16 %v2563
        %v2747 = vunpack.c.l.b16 %v2564
        %v2748 = vunpack.c.h.b16 %v2564
        %v2749 = vunpack.c.l.b16 %v2565
        %v2750 = vunpack.c.h.b16 %v2565
        %v2751 = vunpack.c.l.b16 %v2566
        %v2752 = vunpack.c.h.b16 %v2566
        %v2753 = vunpack.c.l.b16 %v2567
        %v2754 = vunpack.c.h.b16 %v2567
        %v2755 = vunpack.c.l.b16 %v2568
        %v2756 = vunpack.c.h.b16 %v2568
        %v2757 = vunpack.c.l.b16 %v2569
        %v2758 = vunpack.c.h.b16 %v2569
        %v2759 = vunpack.c.l.b16 %v2570
        %v2760 = vunpack.c.h.b16 %v2570
        %v2761 = vunpack.c.l.b16 %v2571
        %v2762 = vunpack.c.h.b16 %v2571
        %v2763 = vunpack.c.l.b16 %v2572
        %v2764 = vunpack.c.h.b16 %v2572
        %v2765 = vpack.c.b16 %v2637, %v2637
        %v2766 = vpack.c.b16 %v2638, %v2638
        %v2767 = vpack.c.b16 %v2639, %v2639
        %v2768 = vpack.c.b16 %v2640, %v2640
        %v2769 = vpack.c.b16 %v2641, %v2641
        %v2770 = vpack.c.b16 %v2642, %v2642
        %v2771 = vpack.c.b16 %v2643, %v2643
        %v2772 = vpack.c.b16 %v2644, %v2644
        %v2773 = vpack.c.b16 %v2645, %v2645
        %v2774 = vpack.c.b16 %v2646, %v2646
        %v2775 = vpack.c.b16 %v2647, %v2647
        %v2776 = vpack.c.b16 %v2648, %v2648
        %v2777 = vpack.c.b16 %v2649, %v2649
        %v2778 = vpack.c.b16 %v2650, %v2650
        %v2779 = vpack.c.b16 %v2651, %v2651
        %v2780 = vpack.c.b16 %v2652, %v2652
        %v2781 = vpack.c.b16 %v2653, %v2653
        %v2782 = vpack.c.b16 %v2654, %v2654
        %v2783 = vpack.c.b16 %v2655, %v2655
        %v2784 = vpack.c.b16 %v2656, %v2656
        %v2785 = vpack.c.b16 %v2657, %v2657
        %v2786 = vpack.c.b16 %v2658, %v2658
        %v2787 = vpack.c.b16 %v2659, %v2659
        %v2788 = vpack.c.b16 %v2660, %v2660
        %v2789 = vpack.c.b16 %v2661, %v2661
        %v2790 = vpack.c.b16 %v2662, %v2662
        %v2791 = vpack.c.b16 %v2663, %v2663
        %v2792 = vpack.c.b16 %v2664, %v2664
        %v2793 = vpack.c.b16 %v2665, %v2665
        %v2794 = vpack.c.b16 %v2666, %v2666
        %v2795 = vpack.c.b16 %v2667, %v2667
        %v2796 = vpack.c.b16 %v2668, %v2668
        %v2797 = vpack.c.b16 %v2669, %v2669
        %v2798 = vpack.c.b16 %v2670, %v2670
        %v2799 = vpack.c.b16 %v2671, %v2671
        %v2800 = vpack.c.b16 %v2672, %v2672
        %v2801 = vpack.c.b16 %v2673, %v2673
        %v2802 = vpack.c.b16 %v2674, %v2674
        %v2803 = vpack.c.b16 %v2675, %v2675
        %v2804 = vpack.c.b16 %v2676, %v2676
        %v2805 = vpack.c.b16 %v2677, %v2677
        %v2806 = vpack.c.b16 %v2678, %v2678
        %v2807 = vpack.c.b16 %v2679, %v2679
        %v2808 = vpack.c.b16 %v2680, %v2680
        %v2809 = vpack.c.b16 %v2681, %v2681
        %v2810 = vpack.c.b16 %v2682, %v2682
        %v2811 = vpack.c.b16 %v2683, %v2683
        %v2812 = vpack.c.b16 %v2684, %v2684
        %v2813 = vpack.c.b16 %v2685, %v2685
        %v2814 = vpack.c.b16 %v2686, %v2686
        %v2815 = vpack.c.b16 %v2687, %v2687
        %v2816 = vpack.c.b16 %v2688, %v2688
        %v2817 = vpack.c.b16 %v2689, %v2689
        %v2818 = vpack.c.b16 %v2690, %v2690
        %v2819 = vpack.c.b16 %v2691, %v2691
        %v2820 = vpack.c.b16 %v2692, %v2692
        %v2821 = vpack.c.b16 %v2693, %v2693
        %v2822 = vpack.c.b16 %v2694, %v2694
        %v2823 = vpack.c.b16 %v2695, %v2695
        %v2824 = vpack.c.b16 %v2696, %v2696
        %v2825 = vpack.c.b16 %v2697, %v2697
        %v2826 = vpack.c.b16 %v2698, %v2698
        %v2827 = vpack.c.b16 %v2699, %v2699
        %v2828 = vpack.c.b16 %v2700, %v2700
        %v2829 = vpack.c.b16 %v2701, %v2701
        %v2830 = vpack.c.b16 %v2702, %v2702
        %v2831 = vpack.c.b16 %v2703, %v2703
        %v2832 = vpack.c.b16 %v2704, %v2704
        %v2833 = vpack.c.b16 %v2705, %v2705
        %v2834 = vpack.c.b16 %v2706, %v2706
        %v2835 = vpack.c.b16 %v2707, %v2707
        %v2836 = vpack.c.b16 %v2708, %v2708
        %v2837 = vpack.c.b16 %v2709, %v2709
        %v2838 = vpack.c.b16 %v2710, %v2710
        %v2839 = vpack.c.b16 %v2711, %v2711
        %v2840 = vpack.c.b16 %v2712, %v2712
        %v2841 = vpack.c.b16 %v2713, %v2713
        %v2842 = vpack.c.b16 %v2714, %v2714
        %v2843 = vpack.c.b16 %v2715, %v2715
        %v2844 = vpack.c.b16 %v2716, %v2716
        %v2845 = vpack.c.b16 %v2717, %v2717
        %v2846 = vpack.c.b16 %v2718, %v2718
        %v2847 = vpack.c.b16 %v2719, %v2719
        %v2848 = vpack.c.b16 %v2720, %v2720
        %v2849 = vpack.c.b16 %v2721, %v2721
        %v2850 = vpack.c.b16 %v2722, %v2722
        %v2851 = vpack.c.b16 %v2723, %v2723
        %v2852 = vpack.c.b16 %v2724, %v2724
        %v2853 = vpack.c.b16 %v2725, %v2725
        %v2854 = vpack.c.b16 %v2726, %v2726
        %v2855 = vpack.c.b16 %v2727, %v2727
        %v2856 = vpack.c.b16 %v2728, %v2728
        %v2857 = vpack.c.b16 %v2729, %v2729
        %v2858 = vpack.c.b16 %v2730, %v2730
        %v2859 = vpack.c.b16 %v2731, %v2731
        %v2860 = vpack.c.b16 %v2732, %v2732
        %v2861 = vpack.c.b16 %v2733, %v2733
        %v2862 = vpack.c.b16 %v2734, %v2734
        %v2863 = vpack.c.b16 %v2735, %v2735
        %v2864 = vpack.c.b16 %v2736, %v2736
        %v2865 = vpack.c.b16 %v2737, %v2737
        %v2866 = vpack.c.b16 %v2738, %v2738
        %v2867 = vpack.c.b16 %v2739, %v2739
        %v2868 = vpack.c.b16 %v2740, %v2740
        %v2869 = vpack.c.b16 %v2741, %v2741
        %v2870 = vpack.c.b16 %v2742, %v2742
        %v2871 = vpack.c.b16 %v2743, %v2743
        %v2872 = vpack.c.b16 %v2744, %v2744
        %v2873 = vpack.c.b16 %v2745, %v2745
        %v2874 = vpack.c.b16 %v2746, %v2746
        %v2875 = vpack.c.b16 %v2747, %v2747
        %v2876 = vpack.c.b16 %v2748, %v2748
        %v2877 = vpack.c.b16 %v2749, %v2749
        %v2878 = vpack.c.b16 %v2750, %v2750
        %v2879 = vpack.c.b16 %v2751, %v2751
        %v2880 = vpack.c.b16 %v2752, %v2752
        %v2881 = vpack.c.b16 %v2753, %v2753
        %v2882 = vpack.c.b16 %v2754, %v2754
        %v2883 = vpack.c.b16 %v2755, %v2755
        %v2884 = vpack.c.b16 %v2756, %v2756
        %v2885 = vpack.c.b16 %v2757, %v2757
        %v2886 = vpack.c.b16 %v2758, %v2758
        %v2887 = vpack.c.b16 %v2759, %v2759
        %v2888 = vpack.c.b16 %v2760, %v2760
        %v2889 = vpack.c.b16 %v2761, %v2761
        %v2890 = vpack.c.b16 %v2762, %v2762
        %v2891 = vpack.c.b16 %v2763, %v2763
        %v2892 = vpack.c.b16 %v2764, %v2764
        %3021 = vst [vmem:[%s242] sm:$0xf] %v2765
        %3022 = vst [vmem:[%s242 + $0x4] sm:$0xf] %v2766
        %3023 = vst [vmem:[%s242 + $0x8] sm:$0xf] %v2767
        %3024 = vst [vmem:[%s242 + $0xc] sm:$0xf] %v2768
        %3025 = vst [vmem:[%s242 + $0x10] sm:$0xf] %v2769
        %3026 = vst [vmem:[%s242 + $0x14] sm:$0xf] %v2770
        %3027 = vst [vmem:[%s242 + $0x18] sm:$0xf] %v2771
        %3028 = vst [vmem:[%s242 + $0x1c] sm:$0xf] %v2772
        %3029 = vst [vmem:[%s242 + $0x20] sm:$0xf] %v2773
        %3030 = vst [vmem:[%s242 + $0x24] sm:$0xf] %v2774
        %3031 = vst [vmem:[%s242 + $0x28] sm:$0xf] %v2775
        %3032 = vst [vmem:[%s242 + $0x2c] sm:$0xf] %v2776
        %3033 = vst [vmem:[%s242 + $0x30] sm:$0xf] %v2777
        %3034 = vst [vmem:[%s242 + $0x34] sm:$0xf] %v2778
        %3035 = vst [vmem:[%s242 + $0x38] sm:$0xf] %v2779
        %3036 = vst [vmem:[%s242 + $0x3c] sm:$0xf] %v2780
        %3037 = vst [vmem:[%s242 + $0x40] sm:$0xf] %v2781
        %3038 = vst [vmem:[%s242 + $0x44] sm:$0xf] %v2782
        %3039 = vst [vmem:[%s242 + $0x48] sm:$0xf] %v2783
        %3040 = vst [vmem:[%s242 + $0x4c] sm:$0xf] %v2784
        %3041 = vst [vmem:[%s242 + $0x50] sm:$0xf] %v2785
        %3042 = vst [vmem:[%s242 + $0x54] sm:$0xf] %v2786
        %3043 = vst [vmem:[%s242 + $0x58] sm:$0xf] %v2787
        %3044 = vst [vmem:[%s242 + $0x5c] sm:$0xf] %v2788
        %3045 = vst [vmem:[%s242 + $0x60] sm:$0xf] %v2789
        %3046 = vst [vmem:[%s242 + $0x64] sm:$0xf] %v2790
        %3047 = vst [vmem:[%s242 + $0x68] sm:$0xf] %v2791
        %3048 = vst [vmem:[%s242 + $0x6c] sm:$0xf] %v2792
        %3049 = vst [vmem:[%s242 + $0x70] sm:$0xf] %v2793
        %3050 = vst [vmem:[%s242 + $0x74] sm:$0xf] %v2794
        %3051 = vst [vmem:[%s242 + $0x78] sm:$0xf] %v2795
        %3052 = vst [vmem:[%s242 + $0x7c] sm:$0xf] %v2796
        %3053 = vst [vmem:[%s242 + $0x80] sm:$0xf] %v2797
        %3054 = vst [vmem:[%s242 + $0x84] sm:$0xf] %v2798
        %3055 = vst [vmem:[%s242 + $0x88] sm:$0xf] %v2799
        %3056 = vst [vmem:[%s242 + $0x8c] sm:$0xf] %v2800
        %3057 = vst [vmem:[%s242 + $0x90] sm:$0xf] %v2801
        %3058 = vst [vmem:[%s242 + $0x94] sm:$0xf] %v2802
        %3059 = vst [vmem:[%s242 + $0x98] sm:$0xf] %v2803
        %3060 = vst [vmem:[%s242 + $0x9c] sm:$0xf] %v2804
        %3061 = vst [vmem:[%s242 + $0xa0] sm:$0xf] %v2805
        %3062 = vst [vmem:[%s242 + $0xa4] sm:$0xf] %v2806
        %3063 = vst [vmem:[%s242 + $0xa8] sm:$0xf] %v2807
        %3064 = vst [vmem:[%s242 + $0xac] sm:$0xf] %v2808
        %3065 = vst [vmem:[%s242 + $0xb0] sm:$0xf] %v2809
        %3066 = vst [vmem:[%s242 + $0xb4] sm:$0xf] %v2810
        %3067 = vst [vmem:[%s242 + $0xb8] sm:$0xf] %v2811
        %3068 = vst [vmem:[%s242 + $0xbc] sm:$0xf] %v2812
        %3069 = vst [vmem:[%s242 + $0xc0] sm:$0xf] %v2813
        %3070 = vst [vmem:[%s242 + $0xc4] sm:$0xf] %v2814
        %3071 = vst [vmem:[%s242 + $0xc8] sm:$0xf] %v2815
        %3072 = vst [vmem:[%s242 + $0xcc] sm:$0xf] %v2816
        %3073 = vst [vmem:[%s242 + $0xd0] sm:$0xf] %v2817
        %3074 = vst [vmem:[%s242 + $0xd4] sm:$0xf] %v2818
        %3075 = vst [vmem:[%s242 + $0xd8] sm:$0xf] %v2819
        %3076 = vst [vmem:[%s242 + $0xdc] sm:$0xf] %v2820
        %3077 = vst [vmem:[%s242 + $0xe0] sm:$0xf] %v2821
        %3078 = vst [vmem:[%s242 + $0xe4] sm:$0xf] %v2822
        %3079 = vst [vmem:[%s242 + $0xe8] sm:$0xf] %v2823
        %3080 = vst [vmem:[%s242 + $0xec] sm:$0xf] %v2824
        %3081 = vst [vmem:[%s242 + $0xf0] sm:$0xf] %v2825
        %3082 = vst [vmem:[%s242 + $0xf4] sm:$0xf] %v2826
        %3083 = vst [vmem:[%s242 + $0xf8] sm:$0xf] %v2827
        %3084 = vst [vmem:[%s242 + $0xfc] sm:$0xf] %v2828
        %3085 = vst [vmem:[%s242 + $0x100] sm:$0xf] %v2829
        %3086 = vst [vmem:[%s242 + $0x104] sm:$0xf] %v2830
        %3087 = vst [vmem:[%s242 + $0x108] sm:$0xf] %v2831
        %3088 = vst [vmem:[%s242 + $0x10c] sm:$0xf] %v2832
        %3089 = vst [vmem:[%s242 + $0x110] sm:$0xf] %v2833
        %3090 = vst [vmem:[%s242 + $0x114] sm:$0xf] %v2834
        %3091 = vst [vmem:[%s242 + $0x118] sm:$0xf] %v2835
        %3092 = vst [vmem:[%s242 + $0x11c] sm:$0xf] %v2836
        %3093 = vst [vmem:[%s242 + $0x120] sm:$0xf] %v2837
        %3094 = vst [vmem:[%s242 + $0x124] sm:$0xf] %v2838
        %3095 = vst [vmem:[%s242 + $0x128] sm:$0xf] %v2839
        %3096 = vst [vmem:[%s242 + $0x12c] sm:$0xf] %v2840
        %3097 = vst [vmem:[%s242 + $0x130] sm:$0xf] %v2841
        %3098 = vst [vmem:[%s242 + $0x134] sm:$0xf] %v2842
        %3099 = vst [vmem:[%s242 + $0x138] sm:$0xf] %v2843
        %3100 = vst [vmem:[%s242 + $0x13c] sm:$0xf] %v2844
        %3101 = vst [vmem:[%s242 + $0x140] sm:$0xf] %v2845
        %3102 = vst [vmem:[%s242 + $0x144] sm:$0xf] %v2846
        %3103 = vst [vmem:[%s242 + $0x148] sm:$0xf] %v2847
        %3104 = vst [vmem:[%s242 + $0x14c] sm:$0xf] %v2848
        %3105 = vst [vmem:[%s242 + $0x150] sm:$0xf] %v2849
        %3106 = vst [vmem:[%s242 + $0x154] sm:$0xf] %v2850
        %3107 = vst [vmem:[%s242 + $0x158] sm:$0xf] %v2851
        %3108 = vst [vmem:[%s242 + $0x15c] sm:$0xf] %v2852
        %3109 = vst [vmem:[%s242 + $0x160] sm:$0xf] %v2853
        %3110 = vst [vmem:[%s242 + $0x164] sm:$0xf] %v2854
        %3111 = vst [vmem:[%s242 + $0x168] sm:$0xf] %v2855
        %3112 = vst [vmem:[%s242 + $0x16c] sm:$0xf] %v2856
        %3113 = vst [vmem:[%s242 + $0x170] sm:$0xf] %v2857
        %3114 = vst [vmem:[%s242 + $0x174] sm:$0xf] %v2858
        %3115 = vst [vmem:[%s242 + $0x178] sm:$0xf] %v2859
        %3116 = vst [vmem:[%s242 + $0x17c] sm:$0xf] %v2860
        %3117 = vst [vmem:[%s242 + $0x180] sm:$0xf] %v2861
        %3118 = vst [vmem:[%s242 + $0x184] sm:$0xf] %v2862
        %3119 = vst [vmem:[%s242 + $0x188] sm:$0xf] %v2863
        %3120 = vst [vmem:[%s242 + $0x18c] sm:$0xf] %v2864
        %3121 = vst [vmem:[%s242 + $0x190] sm:$0xf] %v2865
        %3122 = vst [vmem:[%s242 + $0x194] sm:$0xf] %v2866
        %3123 = vst [vmem:[%s242 + $0x198] sm:$0xf] %v2867
        %3124 = vst [vmem:[%s242 + $0x19c] sm:$0xf] %v2868
        %3125 = vst [vmem:[%s242 + $0x1a0] sm:$0xf] %v2869
        %3126 = vst [vmem:[%s242 + $0x1a4] sm:$0xf] %v2870
        %3127 = vst [vmem:[%s242 + $0x1a8] sm:$0xf] %v2871
        %3128 = vst [vmem:[%s242 + $0x1ac] sm:$0xf] %v2872
        %3129 = vst [vmem:[%s242 + $0x1b0] sm:$0xf] %v2873
        %3130 = vst [vmem:[%s242 + $0x1b4] sm:$0xf] %v2874
        %3131 = vst [vmem:[%s242 + $0x1b8] sm:$0xf] %v2875
        %3132 = vst [vmem:[%s242 + $0x1bc] sm:$0xf] %v2876
        %3133 = vst [vmem:[%s242 + $0x1c0] sm:$0xf] %v2877
        %3134 = vst [vmem:[%s242 + $0x1c4] sm:$0xf] %v2878
        %3135 = vst [vmem:[%s242 + $0x1c8] sm:$0xf] %v2879
        %3136 = vst [vmem:[%s242 + $0x1cc] sm:$0xf] %v2880
        %3137 = vst [vmem:[%s242 + $0x1d0] sm:$0xf] %v2881
        %3138 = vst [vmem:[%s242 + $0x1d4] sm:$0xf] %v2882
        %3139 = vst [vmem:[%s242 + $0x1d8] sm:$0xf] %v2883
        %3140 = vst [vmem:[%s242 + $0x1dc] sm:$0xf] %v2884
        %3141 = vst [vmem:[%s242 + $0x1e0] sm:$0xf] %v2885
        %3142 = vst [vmem:[%s242 + $0x1e4] sm:$0xf] %v2886
        %3143 = vst [vmem:[%s242 + $0x1e8] sm:$0xf] %v2887
        %3144 = vst [vmem:[%s242 + $0x1ec] sm:$0xf] %v2888
        %3145 = vst [vmem:[%s242 + $0x1f0] sm:$0xf] %v2889
        %3146 = vst [vmem:[%s242 + $0x1f4] sm:$0xf] %v2890
        %3147 = vst [vmem:[%s242 + $0x1f8] sm:$0xf] %v2891
        %3148 = vst [vmem:[%s242 + $0x1fc] sm:$0xf] %v2892
        %s3149 = sand.u32 %s140, 1
        %s3150 = scalar_lea.sflag [#allocation4], %s3149
        %s3151 = sand.u32 %s140, 1
        %s3152 = smul.addr %s3151, 512
        %s3153 = scalar_lea.vmem [#allocation5], %s3152
        // Predicated region
        $region45: #{_group_norm_flat.1} parent=39 // pred_check
          %p3154 = pneg %p150
        $region46: #{_group_norm_flat.1} parent=39 // pred_check_branch
          %3156 = sbr.rel (%p3154) target = $region48
        $region47: #{_group_norm_flat.1} parent=39 // pred_region
          %s3158 = ssub.s32 8192, 8192
          %3159 = vsyncadd %s3150, %s3158
          %s3160 = smul.addr %s22, 128
          %s3161 = smul.addr %s3160, 64
          %s3162 = scalar_lea.hbm %s5, %s3161
          %s3163 = sshll.u32 %s3153, 4
          %s3164 = int_to_ptr.vmem [resolvable:$true] %s3163
          %3169 = dma.vmem_to_hbm [thread:$0]  %s3164, 8192, %s3162, %s3150, 64, 64, 4
        $region48: #{_group_norm_flat.1} parent=39 // pred_fallthru
          _
      $region40: #{_group_norm_flat.1} parent=5 // pred_fallthru
        _
      %p3170 = scmp.le.s32.totalorder 2, %s17
      // Predicated region
      $region49: #{_group_norm_flat.1} parent=5 // pred_check
        %p3171 = pneg %p3170
      $region50: #{_group_norm_flat.1} parent=5 // pred_check_branch
        %3173 = sbr.rel (%p3171) target = $region52
      $region51: #{_group_norm_flat.1} parent=5 // pred_region
        %s3174 = ssub.s32 %s17, 2
        // Predicated region
        $region53: #{_group_norm_flat.1} parent=51 // pred_check
          %p3175 = pneg %p156
        $region54: #{_group_norm_flat.1} parent=51 // pred_check_branch
          %3177 = sbr.rel (%p3175) target = $region56
        $region55: #{_group_norm_flat.1} parent=51 // pred_region
          %s3178 = sand.u32 %s141, 1
          %s3179 = scalar_lea.sflag [#allocation4], %s3178
          %s3180 = sand.u32 %s141, 1
          %s3181 = smul.addr %s3180, 512
          %s3182 = scalar_lea.vmem [#allocation5], %s3181
          %3183 = dma.done %s3179, 8192
        $region56: #{_group_norm_flat.1} parent=51 // pred_fallthru
          _
      $region52: #{_group_norm_flat.1} parent=5 // pred_fallthru
        _
    $region6: #{_group_norm_flat.1} parent=1 // loop_footer
      %s21 = sadd.s32 1, %s17
    $region7: #{_group_norm_flat.1} parent=1 // loop_footer_branch
      %16 = sbr.rel target = $region3
    $region8: #{_group_norm_flat.1} parent=1 // loop_exit
      _
    %3184 = vsyncpa [#allocation3], 1
    %s3185 = scalar_lea.sflag [#allocation3], 1
    %3186 = vsyncpa %s3185, 1
    %3187 = vsyncpa [#allocation4], 1
    %s3188 = scalar_lea.sflag [#allocation4], 1
    %3189 = vsyncpa %s3188, 1

</llo_original>
